<compile_context>
chip_gen: v6e
topology: v6e:2x2x1
jax: 0.10.0
libtpu: 0.0.40
codegen_flags: <defaults>
</compile_context>

<pallas_src>
import functools

import jax
import jax.numpy as jnp
from jax.experimental import pallas as pl
from jax.experimental.pallas import tpu as pltpu


def _round_up(x, m):
    return ((x + m - 1) // m) * m


# ----------------------------------------------------------------------------
# Single fused kernel
# ----------------------------------------------------------------------------
def make_e2e_kernel(num_layers):
    def kernel(feat_ref, tok_ref, len_ref,
               w1_ref, b1_ref, w2_ref, b2_ref,
               eg0_ref, b0_ref, whh0_ref, *rest):
        # rest = [wih_1, whh_1, b_1, ..., wih_{L-1}, whh_{L-1}, b_{L-1}, wd, bd, out]
        nup = num_layers - 1
        up_refs = [(rest[3 * l], rest[3 * l + 1], rest[3 * l + 2]) for l in range(nup)]
        wd_ref, bd_ref, out_ref = rest[3 * nup:]

        f32 = jnp.float32
        TB, T = tok_ref.shape
        H = whh0_ref.shape[0]
        vocab = eg0_ref.shape[0]

        # ---- hoisted weight / bias loads (loaded once, live for the whole kernel) ----
        eg0 = eg0_ref[...]                                    # (VOCAB, 4H) = emb_table @ W_ih0
        whh0 = whh0_ref[...]                                  # (H, 4H)
        b0 = b0_ref[...]                                      # (1, 4H)   (broadcast at add time)
        ups = [(w_ih[...], w_hh[...], b[...])                 # (H,4H), (H,4H), (1,4H)
               for (w_ih, w_hh, b) in up_refs]
        wd = wd_ref[...]                                      # (H, 128) lane-padded
        bd = bd_ref[...]                                      # (1, 128)
        lens = len_ref[...]                                   # (TB, 1) int32

        # ---- FeatureEmbedding: dense1 -> relu -> dense2 ; h0 == c0 for every LSTM layer ----
        feat = feat_ref[...].astype(f32)
        fh = jnp.maximum(
            jnp.dot(feat, w1_ref[...], preferred_element_type=f32) + b1_ref[...], 0.0)
        h0 = jnp.dot(fh, w2_ref[...], preferred_element_type=f32) + b2_ref[...]   # (TB, H)

        # ---- Embedding lookup fused with the layer-0 input projection, all T steps,
        #      precomputed BEFORE the recurrence (no sequential dependence) ----
        # one_hot(tok_t) @ (emb_table @ W_ih0) == embedding(tok_t) @ W_ih0.
        # T tiny independent matmuls; fully unrolled so they schedule off the recurrent
        # critical path.  NOTE(scaling): for TB >= 128 stage these into a
        # pltpu.VMEM((T, TB, 4*H), f32) scratch and load per step to keep vreg pressure flat.
        tok = tok_ref[...]                                    # (TB, T) int32
        col_iota = jax.lax.broadcasted_iota(jnp.int32, (TB, vocab), 1)
        x0 = [jnp.dot((tok[:, t:t + 1] == col_iota).astype(f32), eg0,
                      preferred_element_type=f32) + b0
              for t in range(T)]                              # T x (TB, 4H)

        def lstm_cell(gates, c_prev):
            # Full-width EUP ops on the lane-dense (TB, 4H=128) gates, then slice i/f/g/o:
            # 2 full-vreg transcendental pushes per cell instead of 4 quarter-vreg pushes.
            s = jax.nn.sigmoid(gates)
            th = jnp.tanh(gates)
            i = s[:, 0 * H:1 * H]
            f = s[:, 1 * H:2 * H]
            g = th[:, 2 * H:3 * H]
            o = s[:, 3 * H:4 * H]
            c_new = f * c_prev + i * g
            return o * jnp.tanh(c_new), c_new

        hs = [h0] * num_layers
        cs = [h0] * num_layers
        sel = jnp.zeros((TB, H), f32)

        # ---- fully unrolled recurrence (T static & small) ----
        for t in range(T):
            # layer 0: input projection already precomputed; only the recurrent matmul here.
            gates0 = x0[t] + jnp.dot(hs[0], whh0, preferred_element_type=f32)
            hs[0], cs[0] = lstm_cell(gates0, cs[0])
            below = hs[0]
            # layers >= 1: two small MXU pushes, no per-step lane concat on the critical path.
            for l in range(1, num_layers):
                w_ih, w_hh, b = ups[l - 1]
                gates = (jnp.dot(below, w_ih, preferred_element_type=f32)
                         + jnp.dot(hs[l], w_hh, preferred_element_type=f32) + b)
                hs[l], cs[l] = lstm_cell(gates, cs[l])
                below = hs[l]
            # capture top-layer h at the last valid step (t == len-1).
            sel = jnp.where(lens == (t + 1), hs[-1], sel)

        # final Linear into a lane-dense padded slab (unmasked stores; wrapper slices).
        y = jnp.dot(sel, wd, preferred_element_type=f32) + bd          # (TB, 128)
        out_ref[...] = y.astype(out_ref.dtype)

    return kernel


# ----------------------------------------------------------------------------
# One-time host-side weight transforms (composition / padding)
# ----------------------------------------------------------------------------
def prepare_kernel_params(params, num_layers, out_pad=128):
    wih0, whh0, b0 = params["lstm"][0]
    kp = {
        "fe_w1": params["fe_w1"], "fe_b1": params["fe_b1"],
        "fe_w2": params["fe_w2"], "fe_b2": params["fe_b2"],
        # embedding lookup fused with the layer-0 input projection:
        "eg0": (params["emb_table"] @ wih0).astype(jnp.float32),        # (VOCAB, 4H)
        "b0": b0,                                                       # (1, 4H)
        "whh0": whh0,                                                   # (H, 4H)
        # upper layers: W_ih / W_hh kept separate (no in-kernel concat on the critical path).
        "wih": tuple(params["lstm"][l][0] for l in range(1, num_layers)),
        "whh": tuple(params["lstm"][l][1] for l in range(1, num_layers)),
        "bl": tuple(params["lstm"][l][2] for l in range(1, num_layers)),
    }
    out_dim = params["dense_w"].shape[1]
    kp["wd"] = jnp.pad(params["dense_w"], ((0, 0), (0, out_pad - out_dim)))   # (H, 128)
    kp["bd"] = jnp.pad(params["dense_b"], ((0, 0), (0, out_pad - out_dim)))   # (1, 128)
    return kp


# ----------------------------------------------------------------------------
# Wrapper: one pallas_call, batch padded to 8 sublanes, batch grid axis,
# lane-dense output sliced here.
# ----------------------------------------------------------------------------
@functools.partial(jax.jit,
                   static_argnames=("num_layers", "out_dim", "out_pad", "batch_tile"))
def e2e_regression(feature, sequence, sequence_len, kparams, *,
                   num_layers, out_dim, out_pad=128, batch_tile=None):
    B, T = sequence.shape
    Bp8 = _round_up(B, 8)
    if batch_tile is None:
        # v7x has 2 TensorCores: once the padded batch reaches 16 rows, split into >= 2
        # grid steps so dimension_semantics=("parallel",) can actually shard across cores.
        # Keep each TB's per-step VMEM footprint well under the ~32 MiB scoped default
        # (v7x physical VMEM is 64 MiB, half of v5e/v6e).
        TB = Bp8 if Bp8 < 16 else _round_up(pl.cdiv(Bp8, 2), 8)
    else:
        assert batch_tile % 8 == 0, "batch_tile must be a multiple of 8 (sublane constraint)"
        TB = batch_tile
    Bp = _round_up(Bp8, TB)          # pad so the grid divides evenly (no clamped last block)

    # host-side batch padding to full sublanes; padded rows have len=0 and are sliced off.
    feat = jnp.pad(feature.astype(jnp.float32), ((0, Bp - B), (0, 0)))
    tokens = jnp.pad(sequence.astype(jnp.int32), ((0, Bp - B), (0, 0)))
    lens = jnp.pad(sequence_len.astype(jnp.int32), (0, Bp - B)).reshape(Bp, 1)

    def bspec(shape):
        nd = len(shape)
        return pl.BlockSpec((TB,) + tuple(shape[1:]),
                            lambda i, _nd=nd: (i,) + (0,) * (_nd - 1))

    def wspec(arr):
        nd = arr.ndim
        return pl.BlockSpec(arr.shape, lambda i, _nd=nd: (0,) * _nd)

    weight_args = [kparams["fe_w1"], kparams["fe_b1"], kparams["fe_w2"], kparams["fe_b2"],
                   kparams["eg0"], kparams["b0"], kparams["whh0"]]
    for w_ih, w_hh, b in zip(kparams["wih"], kparams["whh"], kparams["bl"]):
        weight_args += [w_ih, w_hh, b]
    weight_args += [kparams["wd"], kparams["bd"]]

    args = [feat, tokens, lens] + weight_args
    in_specs = ([bspec(feat.shape), bspec(tokens.shape), bspec(lens.shape)]
                + [wspec(a) for a in weight_args])

    out = pl.pallas_call(
        make_e2e_kernel(num_layers),
        out_shape=jax.ShapeDtypeStruct((Bp, out_pad), jnp.float32),
        grid=(Bp // TB,),
        in_specs=in_specs,
        out_specs=pl.BlockSpec((TB, out_pad), lambda i: (i, 0)),
        compiler_params=pltpu.CompilerParams(dimension_semantics=("parallel",)),
    )(*args)
    return out[:B, :out_dim]


# ----------------------------------------------------------------------------
# Pure-JAX reference (uses the natural, untransformed parameters)
# ----------------------------------------------------------------------------
def reference(feature, sequence, sequence_len, params, num_layers, H):
    fe = jnp.maximum(feature @ params["fe_w1"] + params["fe_b1"], 0.0)
    fe = fe @ params["fe_w2"] + params["fe_b2"]
    emb = params["emb_table"][sequence]                          # (B, T, D)
    B, T, _ = emb.shape
    h = [fe] * num_layers
    c = [fe] * num_layers
    sel = jnp.zeros((B, H), jnp.float32)
    for t in range(T):
        inp = emb[:, t, :]
        for l in range(num_layers):
            wih, whh, b = params["lstm"][l]
            gates = inp @ wih + h[l] @ whh + b
            i = jax.nn.sigmoid(gates[:, :H])
            f = jax.nn.sigmoid(gates[:, H:2 * H])
            g = jnp.tanh(gates[:, 2 * H:3 * H])
            o = jax.nn.sigmoid(gates[:, 3 * H:])
            c[l] = f * c[l] + i * g
            h[l] = o * jnp.tanh(c[l])
            inp = h[l]
        mask = (sequence_len[:, None] == t + 1)
        sel = jnp.where(mask, h[-1], sel)
    return sel @ params["dense_w"] + params["dense_b"]


# ----------------------------------------------------------------------------
# Main
# ----------------------------------------------------------------------------
if __name__ == "__main__":
    FE_INPUT_DIM = 24
    FE_HIDDEN_DIM = 32
    FE_OUTPUT_DIM = 32          # == LSTM hidden size H
    SE_INPUT_DIM = 16           # embedding dim D
    NUM_LSTM_LAYERS = 2
    OUTPUT_DIM = 2
    VOCAB = 8                   # TODO(synk): len(SEQ_TO_TOKEN) undefined in source; synthetic vocab.
    B, T = 4, 8
    H = FE_OUTPUT_DIM

    key = jax.random.PRNGKey(0)
    keys = jax.random.split(key, 16)

    def nrm(k, shape, scale=0.1):
        return (scale * jax.random.normal(k, shape)).astype(jnp.float32)

    params = {
        "fe_w1": nrm(keys[0], (FE_INPUT_DIM, FE_HIDDEN_DIM)),
        "fe_b1": nrm(keys[1], (1, FE_HIDDEN_DIM)),
        "fe_w2": nrm(keys[2], (FE_HIDDEN_DIM, FE_OUTPUT_DIM)),
        "fe_b2": nrm(keys[3], (1, FE_OUTPUT_DIM)),
        "emb_table": nrm(keys[4], (VOCAB, SE_INPUT_DIM), scale=0.5),
        "dense_w": nrm(keys[5], (H, OUTPUT_DIM)),
        "dense_b": nrm(keys[6], (1, OUTPUT_DIM)),
    }
    # LSTM weights per layer: (W_ih^T, W_hh^T, combined bias b_ih + b_hh), gate order i,f,g,o.
    lstm_weights = []
    for l in range(NUM_LSTM_LAYERS):
        in_dim = SE_INPUT_DIM if l == 0 else H
        kw = jax.random.split(keys[7 + l], 3)
        lstm_weights.append((
            nrm(kw[0], (in_dim, 4 * H)),
            nrm(kw[1], (H, 4 * H)),
            nrm(kw[2], (1, 4 * H)),
        ))
    params["lstm"] = tuple(lstm_weights)

    # Inputs.
    feature = nrm(keys[12], (B, FE_INPUT_DIM), scale=1.0)                        # (B, fe_input_dim)
    sequence = jax.random.randint(keys[13], (B, T), 0, VOCAB, dtype=jnp.int32)   # (B, T) tokens
    sequence_len = jax.random.randint(keys[14], (B,), 1, T + 1, dtype=jnp.int32) # 1..T

    kparams = prepare_kernel_params(params, NUM_LSTM_LAYERS)

    out = e2e_regression(feature, sequence, sequence_len, kparams,
                         num_layers=NUM_LSTM_LAYERS, out_dim=OUTPUT_DIM)
    out = jax.block_until_ready(out)

    ref = reference(feature, sequence, sequence_len, params, NUM_LSTM_LAYERS, H)
    assert out.shape == (B, OUTPUT_DIM), out.shape
    assert jnp.allclose(out, ref, rtol=5e-3, atol=5e-3), (out, ref)

    print("KERNEL_OK")
</pallas_src>

<mosaic_0001>
module attributes {stable_mosaic.version = 11 : i64} {
  func.func @kernel(%arg0: i32, %arg1: memref<8x24xf32, #tpu.memory_space<vmem>>, %arg2: memref<8x8xi32, #tpu.memory_space<vmem>>, %arg3: memref<8x1xi32, #tpu.memory_space<vmem>>, %arg4: memref<24x32xf32, #tpu.memory_space<vmem>>, %arg5: memref<1x32xf32, #tpu.memory_space<vmem>>, %arg6: memref<32x32xf32, #tpu.memory_space<vmem>>, %arg7: memref<1x32xf32, #tpu.memory_space<vmem>>, %arg8: memref<8x128xf32, #tpu.memory_space<vmem>>, %arg9: memref<1x128xf32, #tpu.memory_space<vmem>>, %arg10: memref<32x128xf32, #tpu.memory_space<vmem>>, %arg11: memref<32x128xf32, #tpu.memory_space<vmem>>, %arg12: memref<32x128xf32, #tpu.memory_space<vmem>>, %arg13: memref<1x128xf32, #tpu.memory_space<vmem>>, %arg14: memref<32x128xf32, #tpu.memory_space<vmem>>, %arg15: memref<1x128xf32, #tpu.memory_space<vmem>>, %arg16: memref<8x128xf32, #tpu.memory_space<vmem>>) attributes {dimension_semantics = [#tpu.dimension_semantics<parallel>], iteration_bounds = array<i64: 1>, scalar_prefetch = 0 : i64, scratch_operands = 0 : i64, tpu.core_type = #tpu.core_type<tc>, window_params = [{transform_indices = @transform_0, window_bounds = array<i64: 8, 24>}, {transform_indices = @transform_1, window_bounds = array<i64: 8, 8>}, {transform_indices = @transform_2, window_bounds = array<i64: 8, 1>}, {pipeline_mode = #tpu.pipeline_mode<synchronous>, transform_indices = @transform_3, window_bounds = array<i64: 24, 32>}, {pipeline_mode = #tpu.pipeline_mode<synchronous>, transform_indices = @transform_4, window_bounds = array<i64: 1, 32>}, {pipeline_mode = #tpu.pipeline_mode<synchronous>, transform_indices = @transform_5, window_bounds = array<i64: 32, 32>}, {pipeline_mode = #tpu.pipeline_mode<synchronous>, transform_indices = @transform_6, window_bounds = array<i64: 1, 32>}, {pipeline_mode = #tpu.pipeline_mode<synchronous>, transform_indices = @transform_7, window_bounds = array<i64: 8, 128>}, {pipeline_mode = #tpu.pipeline_mode<synchronous>, transform_indices = @transform_8, window_bounds = array<i64: 1, 128>}, {pipeline_mode = #tpu.pipeline_mode<synchronous>, transform_indices = @transform_9, window_bounds = array<i64: 32, 128>}, {pipeline_mode = #tpu.pipeline_mode<synchronous>, transform_indices = @transform_10, window_bounds = array<i64: 32, 128>}, {pipeline_mode = #tpu.pipeline_mode<synchronous>, transform_indices = @transform_11, window_bounds = array<i64: 32, 128>}, {pipeline_mode = #tpu.pipeline_mode<synchronous>, transform_indices = @transform_12, window_bounds = array<i64: 1, 128>}, {pipeline_mode = #tpu.pipeline_mode<synchronous>, transform_indices = @transform_13, window_bounds = array<i64: 32, 128>}, {pipeline_mode = #tpu.pipeline_mode<synchronous>, transform_indices = @transform_14, window_bounds = array<i64: 1, 128>}, {transform_indices = @transform_15, window_bounds = array<i64: 8, 128>}]} {
    %c0 = arith.constant 0 : index
    %c0_0 = arith.constant 0 : index
    %0 = vector.load %arg8[%c0, %c0_0] : memref<8x128xf32, #tpu.memory_space<vmem>>, vector<8x128xf32>
    %c0_1 = arith.constant 0 : index
    %c0_2 = arith.constant 0 : index
    %1 = vector.load %arg10[%c0_1, %c0_2] : memref<32x128xf32, #tpu.memory_space<vmem>>, vector<32x128xf32>
    %c0_3 = arith.constant 0 : index
    %c0_4 = arith.constant 0 : index
    %2 = vector.load %arg9[%c0_3, %c0_4] : memref<1x128xf32, #tpu.memory_space<vmem>>, vector<1x128xf32>
    %c0_5 = arith.constant 0 : index
    %c0_6 = arith.constant 0 : index
    %3 = vector.load %arg11[%c0_5, %c0_6] : memref<32x128xf32, #tpu.memory_space<vmem>>, vector<32x128xf32>
    %c0_7 = arith.constant 0 : index
    %c0_8 = arith.constant 0 : index
    %4 = vector.load %arg12[%c0_7, %c0_8] : memref<32x128xf32, #tpu.memory_space<vmem>>, vector<32x128xf32>
    %c0_9 = arith.constant 0 : index
    %c0_10 = arith.constant 0 : index
    %5 = vector.load %arg13[%c0_9, %c0_10] : memref<1x128xf32, #tpu.memory_space<vmem>>, vector<1x128xf32>
    %c0_11 = arith.constant 0 : index
    %c0_12 = arith.constant 0 : index
    %6 = vector.load %arg14[%c0_11, %c0_12] : memref<32x128xf32, #tpu.memory_space<vmem>>, vector<32x128xf32>
    %c0_13 = arith.constant 0 : index
    %c0_14 = arith.constant 0 : index
    %7 = vector.load %arg15[%c0_13, %c0_14] : memref<1x128xf32, #tpu.memory_space<vmem>>, vector<1x128xf32>
    %c0_15 = arith.constant 0 : index
    %c0_16 = arith.constant 0 : index
    %8 = vector.load %arg3[%c0_15, %c0_16] : memref<8x1xi32, #tpu.memory_space<vmem>>, vector<8x1xi32>
    %c0_17 = arith.constant 0 : index
    %c0_18 = arith.constant 0 : index
    %9 = vector.load %arg1[%c0_17, %c0_18] : memref<8x24xf32, #tpu.memory_space<vmem>>, vector<8x24xf32>
    %c0_19 = arith.constant 0 : index
    %c0_20 = arith.constant 0 : index
    %10 = vector.load %arg4[%c0_19, %c0_20] : memref<24x32xf32, #tpu.memory_space<vmem>>, vector<24x32xf32>
    %cst = arith.constant dense<0.000000e+00> : vector<8x32xf32>
    %11 = tpu.matmul %9, %10, %cst {dimension_numbers = #tpu.dot_dimension_numbers<[1], [0], [0], [1], [0, 0, 1, 1], [], []>} : vector<8x24xf32>, vector<24x32xf32>, vector<8x32xf32> -> vector<8x32xf32>
    %c0_21 = arith.constant 0 : index
    %c0_22 = arith.constant 0 : index
    %12 = vector.load %arg5[%c0_21, %c0_22] : memref<1x32xf32, #tpu.memory_space<vmem>>, vector<1x32xf32>
    %13 = vector.broadcast %12 : vector<1x32xf32> to vector<8x32xf32>
    %14 = arith.addf %11, %13 : vector<8x32xf32>
    %cst_23 = arith.constant 0.000000e+00 : f32
    %15 = vector.broadcast %cst_23 : f32 to vector<8x32xf32>
    %16 = arith.maximumf %14, %15 : vector<8x32xf32>
    %c0_24 = arith.constant 0 : index
    %c0_25 = arith.constant 0 : index
    %17 = vector.load %arg6[%c0_24, %c0_25] : memref<32x32xf32, #tpu.memory_space<vmem>>, vector<32x32xf32>
    %cst_26 = arith.constant dense<0.000000e+00> : vector<8x32xf32>
    %18 = tpu.matmul %16, %17, %cst_26 {dimension_numbers = #tpu.dot_dimension_numbers<[1], [0], [0], [1], [0, 0, 1, 1], [], []>} : vector<8x32xf32>, vector<32x32xf32>, vector<8x32xf32> -> vector<8x32xf32>
    %c0_27 = arith.constant 0 : index
    %c0_28 = arith.constant 0 : index
    %19 = vector.load %arg7[%c0_27, %c0_28] : memref<1x32xf32, #tpu.memory_space<vmem>>, vector<1x32xf32>
    %20 = vector.broadcast %19 : vector<1x32xf32> to vector<8x32xf32>
    %21 = arith.addf %18, %20 : vector<8x32xf32>
    %c0_29 = arith.constant 0 : index
    %c0_30 = arith.constant 0 : index
    %22 = vector.load %arg2[%c0_29, %c0_30] : memref<8x8xi32, #tpu.memory_space<vmem>>, vector<8x8xi32>
    %23 = tpu.iota {dimensions = array<i32: 1>} : vector<8x8xi32>
    %24 = vector.extract_strided_slice %22 {offsets = [0, 0], sizes = [8, 1], strides = [1, 1]} : vector<8x8xi32> to vector<8x1xi32>
    %25 = vector.broadcast %24 : vector<8x1xi32> to vector<8x8xi32>
    %26 = arith.cmpi eq, %25, %23 : vector<8x8xi32>
    %27 = arith.extui %26 : vector<8x8xi1> to vector<8x8xi32>
    %28 = arith.sitofp %27 : vector<8x8xi32> to vector<8x8xf32>
    %cst_31 = arith.constant dense<0.000000e+00> : vector<8x128xf32>
    %29 = tpu.matmul %28, %0, %cst_31 {dimension_numbers = #tpu.dot_dimension_numbers<[1], [0], [0], [1], [0, 0, 1, 1], [], []>} : vector<8x8xf32>, vector<8x128xf32>, vector<8x128xf32> -> vector<8x128xf32>
    %30 = vector.broadcast %2 : vector<1x128xf32> to vector<8x128xf32>
    %31 = arith.addf %29, %30 : vector<8x128xf32>
    %32 = vector.extract_strided_slice %22 {offsets = [0, 1], sizes = [8, 1], strides = [1, 1]} : vector<8x8xi32> to vector<8x1xi32>
    %33 = vector.broadcast %32 : vector<8x1xi32> to vector<8x8xi32>
    %34 = arith.cmpi eq, %33, %23 : vector<8x8xi32>
    %35 = arith.extui %34 : vector<8x8xi1> to vector<8x8xi32>
    %36 = arith.sitofp %35 : vector<8x8xi32> to vector<8x8xf32>
    %cst_32 = arith.constant dense<0.000000e+00> : vector<8x128xf32>
    %37 = tpu.matmul %36, %0, %cst_32 {dimension_numbers = #tpu.dot_dimension_numbers<[1], [0], [0], [1], [0, 0, 1, 1], [], []>} : vector<8x8xf32>, vector<8x128xf32>, vector<8x128xf32> -> vector<8x128xf32>
    %38 = vector.broadcast %2 : vector<1x128xf32> to vector<8x128xf32>
    %39 = arith.addf %37, %38 : vector<8x128xf32>
    %40 = vector.extract_strided_slice %22 {offsets = [0, 2], sizes = [8, 1], strides = [1, 1]} : vector<8x8xi32> to vector<8x1xi32>
    %41 = vector.broadcast %40 : vector<8x1xi32> to vector<8x8xi32>
    %42 = arith.cmpi eq, %41, %23 : vector<8x8xi32>
    %43 = arith.extui %42 : vector<8x8xi1> to vector<8x8xi32>
    %44 = arith.sitofp %43 : vector<8x8xi32> to vector<8x8xf32>
    %cst_33 = arith.constant dense<0.000000e+00> : vector<8x128xf32>
    %45 = tpu.matmul %44, %0, %cst_33 {dimension_numbers = #tpu.dot_dimension_numbers<[1], [0], [0], [1], [0, 0, 1, 1], [], []>} : vector<8x8xf32>, vector<8x128xf32>, vector<8x128xf32> -> vector<8x128xf32>
    %46 = vector.broadcast %2 : vector<1x128xf32> to vector<8x128xf32>
    %47 = arith.addf %45, %46 : vector<8x128xf32>
    %48 = vector.extract_strided_slice %22 {offsets = [0, 3], sizes = [8, 1], strides = [1, 1]} : vector<8x8xi32> to vector<8x1xi32>
    %49 = vector.broadcast %48 : vector<8x1xi32> to vector<8x8xi32>
    %50 = arith.cmpi eq, %49, %23 : vector<8x8xi32>
    %51 = arith.extui %50 : vector<8x8xi1> to vector<8x8xi32>
    %52 = arith.sitofp %51 : vector<8x8xi32> to vector<8x8xf32>
    %cst_34 = arith.constant dense<0.000000e+00> : vector<8x128xf32>
    %53 = tpu.matmul %52, %0, %cst_34 {dimension_numbers = #tpu.dot_dimension_numbers<[1], [0], [0], [1], [0, 0, 1, 1], [], []>} : vector<8x8xf32>, vector<8x128xf32>, vector<8x128xf32> -> vector<8x128xf32>
    %54 = vector.broadcast %2 : vector<1x128xf32> to vector<8x128xf32>
    %55 = arith.addf %53, %54 : vector<8x128xf32>
    %56 = vector.extract_strided_slice %22 {offsets = [0, 4], sizes = [8, 1], strides = [1, 1]} : vector<8x8xi32> to vector<8x1xi32>
    %57 = vector.broadcast %56 : vector<8x1xi32> to vector<8x8xi32>
    %58 = arith.cmpi eq, %57, %23 : vector<8x8xi32>
    %59 = arith.extui %58 : vector<8x8xi1> to vector<8x8xi32>
    %60 = arith.sitofp %59 : vector<8x8xi32> to vector<8x8xf32>
    %cst_35 = arith.constant dense<0.000000e+00> : vector<8x128xf32>
    %61 = tpu.matmul %60, %0, %cst_35 {dimension_numbers = #tpu.dot_dimension_numbers<[1], [0], [0], [1], [0, 0, 1, 1], [], []>} : vector<8x8xf32>, vector<8x128xf32>, vector<8x128xf32> -> vector<8x128xf32>
    %62 = vector.broadcast %2 : vector<1x128xf32> to vector<8x128xf32>
    %63 = arith.addf %61, %62 : vector<8x128xf32>
    %64 = vector.extract_strided_slice %22 {offsets = [0, 5], sizes = [8, 1], strides = [1, 1]} : vector<8x8xi32> to vector<8x1xi32>
    %65 = vector.broadcast %64 : vector<8x1xi32> to vector<8x8xi32>
    %66 = arith.cmpi eq, %65, %23 : vector<8x8xi32>
    %67 = arith.extui %66 : vector<8x8xi1> to vector<8x8xi32>
    %68 = arith.sitofp %67 : vector<8x8xi32> to vector<8x8xf32>
    %cst_36 = arith.constant dense<0.000000e+00> : vector<8x128xf32>
    %69 = tpu.matmul %68, %0, %cst_36 {dimension_numbers = #tpu.dot_dimension_numbers<[1], [0], [0], [1], [0, 0, 1, 1], [], []>} : vector<8x8xf32>, vector<8x128xf32>, vector<8x128xf32> -> vector<8x128xf32>
    %70 = vector.broadcast %2 : vector<1x128xf32> to vector<8x128xf32>
    %71 = arith.addf %69, %70 : vector<8x128xf32>
    %72 = vector.extract_strided_slice %22 {offsets = [0, 6], sizes = [8, 1], strides = [1, 1]} : vector<8x8xi32> to vector<8x1xi32>
    %73 = vector.broadcast %72 : vector<8x1xi32> to vector<8x8xi32>
    %74 = arith.cmpi eq, %73, %23 : vector<8x8xi32>
    %75 = arith.extui %74 : vector<8x8xi1> to vector<8x8xi32>
    %76 = arith.sitofp %75 : vector<8x8xi32> to vector<8x8xf32>
    %cst_37 = arith.constant dense<0.000000e+00> : vector<8x128xf32>
    %77 = tpu.matmul %76, %0, %cst_37 {dimension_numbers = #tpu.dot_dimension_numbers<[1], [0], [0], [1], [0, 0, 1, 1], [], []>} : vector<8x8xf32>, vector<8x128xf32>, vector<8x128xf32> -> vector<8x128xf32>
    %78 = vector.broadcast %2 : vector<1x128xf32> to vector<8x128xf32>
    %79 = arith.addf %77, %78 : vector<8x128xf32>
    %80 = vector.extract_strided_slice %22 {offsets = [0, 7], sizes = [8, 1], strides = [1, 1]} : vector<8x8xi32> to vector<8x1xi32>
    %81 = vector.broadcast %80 : vector<8x1xi32> to vector<8x8xi32>
    %82 = arith.cmpi eq, %81, %23 : vector<8x8xi32>
    %83 = arith.extui %82 : vector<8x8xi1> to vector<8x8xi32>
    %84 = arith.sitofp %83 : vector<8x8xi32> to vector<8x8xf32>
    %cst_38 = arith.constant dense<0.000000e+00> : vector<8x128xf32>
    %85 = tpu.matmul %84, %0, %cst_38 {dimension_numbers = #tpu.dot_dimension_numbers<[1], [0], [0], [1], [0, 0, 1, 1], [], []>} : vector<8x8xf32>, vector<8x128xf32>, vector<8x128xf32> -> vector<8x128xf32>
    %86 = vector.broadcast %2 : vector<1x128xf32> to vector<8x128xf32>
    %87 = arith.addf %85, %86 : vector<8x128xf32>
    %cst_39 = arith.constant 0.000000e+00 : f32
    %88 = vector.broadcast %cst_39 : f32 to vector<8x32xf32>
    %cst_40 = arith.constant dense<0.000000e+00> : vector<8x128xf32>
    %89 = tpu.matmul %21, %1, %cst_40 {dimension_numbers = #tpu.dot_dimension_numbers<[1], [0], [0], [1], [0, 0, 1, 1], [], []>} : vector<8x32xf32>, vector<32x128xf32>, vector<8x128xf32> -> vector<8x128xf32>
    %90 = arith.addf %31, %89 : vector<8x128xf32>
    %91 = arith.negf %90 : vector<8x128xf32>
    %92 = math.exp %91 : vector<8x128xf32>
    %cst_41 = arith.constant 1.000000e+00 : f32
    %93 = vector.broadcast %cst_41 : f32 to vector<8x128xf32>
    %94 = arith.addf %93, %92 : vector<8x128xf32>
    %95 = arith.divf %93, %94 : vector<8x128xf32>
    %96 = math.tanh %90 : vector<8x128xf32>
    %97 = vector.extract_strided_slice %95 {offsets = [0, 0], sizes = [8, 32], strides = [1, 1]} : vector<8x128xf32> to vector<8x32xf32>
    %98 = vector.extract_strided_slice %95 {offsets = [0, 32], sizes = [8, 32], strides = [1, 1]} : vector<8x128xf32> to vector<8x32xf32>
    %99 = vector.extract_strided_slice %96 {offsets = [0, 64], sizes = [8, 32], strides = [1, 1]} : vector<8x128xf32> to vector<8x32xf32>
    %100 = vector.extract_strided_slice %95 {offsets = [0, 96], sizes = [8, 32], strides = [1, 1]} : vector<8x128xf32> to vector<8x32xf32>
    %101 = arith.mulf %98, %21 : vector<8x32xf32>
    %102 = arith.mulf %97, %99 : vector<8x32xf32>
    %103 = arith.addf %101, %102 : vector<8x32xf32>
    %104 = math.tanh %103 : vector<8x32xf32>
    %105 = arith.mulf %100, %104 : vector<8x32xf32>
    %cst_42 = arith.constant dense<0.000000e+00> : vector<8x128xf32>
    %106 = tpu.matmul %105, %3, %cst_42 {dimension_numbers = #tpu.dot_dimension_numbers<[1], [0], [0], [1], [0, 0, 1, 1], [], []>} : vector<8x32xf32>, vector<32x128xf32>, vector<8x128xf32> -> vector<8x128xf32>
    %cst_43 = arith.constant dense<0.000000e+00> : vector<8x128xf32>
    %107 = tpu.matmul %21, %4, %cst_43 {dimension_numbers = #tpu.dot_dimension_numbers<[1], [0], [0], [1], [0, 0, 1, 1], [], []>} : vector<8x32xf32>, vector<32x128xf32>, vector<8x128xf32> -> vector<8x128xf32>
    %108 = arith.addf %106, %107 : vector<8x128xf32>
    %109 = vector.broadcast %5 : vector<1x128xf32> to vector<8x128xf32>
    %110 = arith.addf %108, %109 : vector<8x128xf32>
    %111 = arith.negf %110 : vector<8x128xf32>
    %112 = math.exp %111 : vector<8x128xf32>
    %cst_44 = arith.constant 1.000000e+00 : f32
    %113 = vector.broadcast %cst_44 : f32 to vector<8x128xf32>
    %114 = arith.addf %113, %112 : vector<8x128xf32>
    %115 = arith.divf %113, %114 : vector<8x128xf32>
    %116 = math.tanh %110 : vector<8x128xf32>
    %117 = vector.extract_strided_slice %115 {offsets = [0, 0], sizes = [8, 32], strides = [1, 1]} : vector<8x128xf32> to vector<8x32xf32>
    %118 = vector.extract_strided_slice %115 {offsets = [0, 32], sizes = [8, 32], strides = [1, 1]} : vector<8x128xf32> to vector<8x32xf32>
    %119 = vector.extract_strided_slice %116 {offsets = [0, 64], sizes = [8, 32], strides = [1, 1]} : vector<8x128xf32> to vector<8x32xf32>
    %120 = vector.extract_strided_slice %115 {offsets = [0, 96], sizes = [8, 32], strides = [1, 1]} : vector<8x128xf32> to vector<8x32xf32>
    %121 = arith.mulf %118, %21 : vector<8x32xf32>
    %122 = arith.mulf %117, %119 : vector<8x32xf32>
    %123 = arith.addf %121, %122 : vector<8x32xf32>
    %124 = math.tanh %123 : vector<8x32xf32>
    %125 = arith.mulf %120, %124 : vector<8x32xf32>
    %c1_i32 = arith.constant 1 : i32
    %126 = vector.broadcast %c1_i32 : i32 to vector<8x1xi32>
    %127 = arith.cmpi eq, %8, %126 : vector<8x1xi32>
    %128 = vector.shape_cast %127 : vector<8x1xi1> to vector<8x1xi1>
    %129 = vector.broadcast %128 : vector<8x1xi1> to vector<8x32xi1>
    %130 = arith.select %129, %125, %88 : vector<8x32xi1>, vector<8x32xf32>
    %cst_45 = arith.constant dense<0.000000e+00> : vector<8x128xf32>
    %131 = tpu.matmul %105, %1, %cst_45 {dimension_numbers = #tpu.dot_dimension_numbers<[1], [0], [0], [1], [0, 0, 1, 1], [], []>} : vector<8x32xf32>, vector<32x128xf32>, vector<8x128xf32> -> vector<8x128xf32>
    %132 = arith.addf %39, %131 : vector<8x128xf32>
    %133 = arith.negf %132 : vector<8x128xf32>
    %134 = math.exp %133 : vector<8x128xf32>
    %cst_46 = arith.constant 1.000000e+00 : f32
    %135 = vector.broadcast %cst_46 : f32 to vector<8x128xf32>
    %136 = arith.addf %135, %134 : vector<8x128xf32>
    %137 = arith.divf %135, %136 : vector<8x128xf32>
    %138 = math.tanh %132 : vector<8x128xf32>
    %139 = vector.extract_strided_slice %137 {offsets = [0, 0], sizes = [8, 32], strides = [1, 1]} : vector<8x128xf32> to vector<8x32xf32>
    %140 = vector.extract_strided_slice %137 {offsets = [0, 32], sizes = [8, 32], strides = [1, 1]} : vector<8x128xf32> to vector<8x32xf32>
    %141 = vector.extract_strided_slice %138 {offsets = [0, 64], sizes = [8, 32], strides = [1, 1]} : vector<8x128xf32> to vector<8x32xf32>
    %142 = vector.extract_strided_slice %137 {offsets = [0, 96], sizes = [8, 32], strides = [1, 1]} : vector<8x128xf32> to vector<8x32xf32>
    %143 = arith.mulf %140, %103 : vector<8x32xf32>
    %144 = arith.mulf %139, %141 : vector<8x32xf32>
    %145 = arith.addf %143, %144 : vector<8x32xf32>
    %146 = math.tanh %145 : vector<8x32xf32>
    %147 = arith.mulf %142, %146 : vector<8x32xf32>
    %cst_47 = arith.constant dense<0.000000e+00> : vector<8x128xf32>
    %148 = tpu.matmul %147, %3, %cst_47 {dimension_numbers = #tpu.dot_dimension_numbers<[1], [0], [0], [1], [0, 0, 1, 1], [], []>} : vector<8x32xf32>, vector<32x128xf32>, vector<8x128xf32> -> vector<8x128xf32>
    %cst_48 = arith.constant dense<0.000000e+00> : vector<8x128xf32>
    %149 = tpu.matmul %125, %4, %cst_48 {dimension_numbers = #tpu.dot_dimension_numbers<[1], [0], [0], [1], [0, 0, 1, 1], [], []>} : vector<8x32xf32>, vector<32x128xf32>, vector<8x128xf32> -> vector<8x128xf32>
    %150 = arith.addf %148, %149 : vector<8x128xf32>
    %151 = vector.broadcast %5 : vector<1x128xf32> to vector<8x128xf32>
    %152 = arith.addf %150, %151 : vector<8x128xf32>
    %153 = arith.negf %152 : vector<8x128xf32>
    %154 = math.exp %153 : vector<8x128xf32>
    %cst_49 = arith.constant 1.000000e+00 : f32
    %155 = vector.broadcast %cst_49 : f32 to vector<8x128xf32>
    %156 = arith.addf %155, %154 : vector<8x128xf32>
    %157 = arith.divf %155, %156 : vector<8x128xf32>
    %158 = math.tanh %152 : vector<8x128xf32>
    %159 = vector.extract_strided_slice %157 {offsets = [0, 0], sizes = [8, 32], strides = [1, 1]} : vector<8x128xf32> to vector<8x32xf32>
    %160 = vector.extract_strided_slice %157 {offsets = [0, 32], sizes = [8, 32], strides = [1, 1]} : vector<8x128xf32> to vector<8x32xf32>
    %161 = vector.extract_strided_slice %158 {offsets = [0, 64], sizes = [8, 32], strides = [1, 1]} : vector<8x128xf32> to vector<8x32xf32>
    %162 = vector.extract_strided_slice %157 {offsets = [0, 96], sizes = [8, 32], strides = [1, 1]} : vector<8x128xf32> to vector<8x32xf32>
    %163 = arith.mulf %160, %123 : vector<8x32xf32>
    %164 = arith.mulf %159, %161 : vector<8x32xf32>
    %165 = arith.addf %163, %164 : vector<8x32xf32>
    %166 = math.tanh %165 : vector<8x32xf32>
    %167 = arith.mulf %162, %166 : vector<8x32xf32>
    %c2_i32 = arith.constant 2 : i32
    %168 = vector.broadcast %c2_i32 : i32 to vector<8x1xi32>
    %169 = arith.cmpi eq, %8, %168 : vector<8x1xi32>
    %170 = vector.shape_cast %169 : vector<8x1xi1> to vector<8x1xi1>
    %171 = vector.broadcast %170 : vector<8x1xi1> to vector<8x32xi1>
    %172 = arith.select %171, %167, %130 : vector<8x32xi1>, vector<8x32xf32>
    %cst_50 = arith.constant dense<0.000000e+00> : vector<8x128xf32>
    %173 = tpu.matmul %147, %1, %cst_50 {dimension_numbers = #tpu.dot_dimension_numbers<[1], [0], [0], [1], [0, 0, 1, 1], [], []>} : vector<8x32xf32>, vector<32x128xf32>, vector<8x128xf32> -> vector<8x128xf32>
    %174 = arith.addf %47, %173 : vector<8x128xf32>
    %175 = arith.negf %174 : vector<8x128xf32>
    %176 = math.exp %175 : vector<8x128xf32>
    %cst_51 = arith.constant 1.000000e+00 : f32
    %177 = vector.broadcast %cst_51 : f32 to vector<8x128xf32>
    %178 = arith.addf %177, %176 : vector<8x128xf32>
    %179 = arith.divf %177, %178 : vector<8x128xf32>
    %180 = math.tanh %174 : vector<8x128xf32>
    %181 = vector.extract_strided_slice %179 {offsets = [0, 0], sizes = [8, 32], strides = [1, 1]} : vector<8x128xf32> to vector<8x32xf32>
    %182 = vector.extract_strided_slice %179 {offsets = [0, 32], sizes = [8, 32], strides = [1, 1]} : vector<8x128xf32> to vector<8x32xf32>
    %183 = vector.extract_strided_slice %180 {offsets = [0, 64], sizes = [8, 32], strides = [1, 1]} : vector<8x128xf32> to vector<8x32xf32>
    %184 = vector.extract_strided_slice %179 {offsets = [0, 96], sizes = [8, 32], strides = [1, 1]} : vector<8x128xf32> to vector<8x32xf32>
    %185 = arith.mulf %182, %145 : vector<8x32xf32>
    %186 = arith.mulf %181, %183 : vector<8x32xf32>
    %187 = arith.addf %185, %186 : vector<8x32xf32>
    %188 = math.tanh %187 : vector<8x32xf32>
    %189 = arith.mulf %184, %188 : vector<8x32xf32>
    %cst_52 = arith.constant dense<0.000000e+00> : vector<8x128xf32>
    %190 = tpu.matmul %189, %3, %cst_52 {dimension_numbers = #tpu.dot_dimension_numbers<[1], [0], [0], [1], [0, 0, 1, 1], [], []>} : vector<8x32xf32>, vector<32x128xf32>, vector<8x128xf32> -> vector<8x128xf32>
    %cst_53 = arith.constant dense<0.000000e+00> : vector<8x128xf32>
    %191 = tpu.matmul %167, %4, %cst_53 {dimension_numbers = #tpu.dot_dimension_numbers<[1], [0], [0], [1], [0, 0, 1, 1], [], []>} : vector<8x32xf32>, vector<32x128xf32>, vector<8x128xf32> -> vector<8x128xf32>
    %192 = arith.addf %190, %191 : vector<8x128xf32>
    %193 = vector.broadcast %5 : vector<1x128xf32> to vector<8x128xf32>
    %194 = arith.addf %192, %193 : vector<8x128xf32>
    %195 = arith.negf %194 : vector<8x128xf32>
    %196 = math.exp %195 : vector<8x128xf32>
    %cst_54 = arith.constant 1.000000e+00 : f32
    %197 = vector.broadcast %cst_54 : f32 to vector<8x128xf32>
    %198 = arith.addf %197, %196 : vector<8x128xf32>
    %199 = arith.divf %197, %198 : vector<8x128xf32>
    %200 = math.tanh %194 : vector<8x128xf32>
    %201 = vector.extract_strided_slice %199 {offsets = [0, 0], sizes = [8, 32], strides = [1, 1]} : vector<8x128xf32> to vector<8x32xf32>
    %202 = vector.extract_strided_slice %199 {offsets = [0, 32], sizes = [8, 32], strides = [1, 1]} : vector<8x128xf32> to vector<8x32xf32>
    %203 = vector.extract_strided_slice %200 {offsets = [0, 64], sizes = [8, 32], strides = [1, 1]} : vector<8x128xf32> to vector<8x32xf32>
    %204 = vector.extract_strided_slice %199 {offsets = [0, 96], sizes = [8, 32], strides = [1, 1]} : vector<8x128xf32> to vector<8x32xf32>
    %205 = arith.mulf %202, %165 : vector<8x32xf32>
    %206 = arith.mulf %201, %203 : vector<8x32xf32>
    %207 = arith.addf %205, %206 : vector<8x32xf32>
    %208 = math.tanh %207 : vector<8x32xf32>
    %209 = arith.mulf %204, %208 : vector<8x32xf32>
    %c3_i32 = arith.constant 3 : i32
    %210 = vector.broadcast %c3_i32 : i32 to vector<8x1xi32>
    %211 = arith.cmpi eq, %8, %210 : vector<8x1xi32>
    %212 = vector.shape_cast %211 : vector<8x1xi1> to vector<8x1xi1>
    %213 = vector.broadcast %212 : vector<8x1xi1> to vector<8x32xi1>
    %214 = arith.select %213, %209, %172 : vector<8x32xi1>, vector<8x32xf32>
    %cst_55 = arith.constant dense<0.000000e+00> : vector<8x128xf32>
    %215 = tpu.matmul %189, %1, %cst_55 {dimension_numbers = #tpu.dot_dimension_numbers<[1], [0], [0], [1], [0, 0, 1, 1], [], []>} : vector<8x32xf32>, vector<32x128xf32>, vector<8x128xf32> -> vector<8x128xf32>
    %216 = arith.addf %55, %215 : vector<8x128xf32>
    %217 = arith.negf %216 : vector<8x128xf32>
    %218 = math.exp %217 : vector<8x128xf32>
    %cst_56 = arith.constant 1.000000e+00 : f32
    %219 = vector.broadcast %cst_56 : f32 to vector<8x128xf32>
    %220 = arith.addf %219, %218 : vector<8x128xf32>
    %221 = arith.divf %219, %220 : vector<8x128xf32>
    %222 = math.tanh %216 : vector<8x128xf32>
    %223 = vector.extract_strided_slice %221 {offsets = [0, 0], sizes = [8, 32], strides = [1, 1]} : vector<8x128xf32> to vector<8x32xf32>
    %224 = vector.extract_strided_slice %221 {offsets = [0, 32], sizes = [8, 32], strides = [1, 1]} : vector<8x128xf32> to vector<8x32xf32>
    %225 = vector.extract_strided_slice %222 {offsets = [0, 64], sizes = [8, 32], strides = [1, 1]} : vector<8x128xf32> to vector<8x32xf32>
    %226 = vector.extract_strided_slice %221 {offsets = [0, 96], sizes = [8, 32], strides = [1, 1]} : vector<8x128xf32> to vector<8x32xf32>
    %227 = arith.mulf %224, %187 : vector<8x32xf32>
    %228 = arith.mulf %223, %225 : vector<8x32xf32>
    %229 = arith.addf %227, %228 : vector<8x32xf32>
    %230 = math.tanh %229 : vector<8x32xf32>
    %231 = arith.mulf %226, %230 : vector<8x32xf32>
    %cst_57 = arith.constant dense<0.000000e+00> : vector<8x128xf32>
    %232 = tpu.matmul %231, %3, %cst_57 {dimension_numbers = #tpu.dot_dimension_numbers<[1], [0], [0], [1], [0, 0, 1, 1], [], []>} : vector<8x32xf32>, vector<32x128xf32>, vector<8x128xf32> -> vector<8x128xf32>
    %cst_58 = arith.constant dense<0.000000e+00> : vector<8x128xf32>
    %233 = tpu.matmul %209, %4, %cst_58 {dimension_numbers = #tpu.dot_dimension_numbers<[1], [0], [0], [1], [0, 0, 1, 1], [], []>} : vector<8x32xf32>, vector<32x128xf32>, vector<8x128xf32> -> vector<8x128xf32>
    %234 = arith.addf %232, %233 : vector<8x128xf32>
    %235 = vector.broadcast %5 : vector<1x128xf32> to vector<8x128xf32>
    %236 = arith.addf %234, %235 : vector<8x128xf32>
    %237 = arith.negf %236 : vector<8x128xf32>
    %238 = math.exp %237 : vector<8x128xf32>
    %cst_59 = arith.constant 1.000000e+00 : f32
    %239 = vector.broadcast %cst_59 : f32 to vector<8x128xf32>
    %240 = arith.addf %239, %238 : vector<8x128xf32>
    %241 = arith.divf %239, %240 : vector<8x128xf32>
    %242 = math.tanh %236 : vector<8x128xf32>
    %243 = vector.extract_strided_slice %241 {offsets = [0, 0], sizes = [8, 32], strides = [1, 1]} : vector<8x128xf32> to vector<8x32xf32>
    %244 = vector.extract_strided_slice %241 {offsets = [0, 32], sizes = [8, 32], strides = [1, 1]} : vector<8x128xf32> to vector<8x32xf32>
    %245 = vector.extract_strided_slice %242 {offsets = [0, 64], sizes = [8, 32], strides = [1, 1]} : vector<8x128xf32> to vector<8x32xf32>
    %246 = vector.extract_strided_slice %241 {offsets = [0, 96], sizes = [8, 32], strides = [1, 1]} : vector<8x128xf32> to vector<8x32xf32>
    %247 = arith.mulf %244, %207 : vector<8x32xf32>
    %248 = arith.mulf %243, %245 : vector<8x32xf32>
    %249 = arith.addf %247, %248 : vector<8x32xf32>
    %250 = math.tanh %249 : vector<8x32xf32>
    %251 = arith.mulf %246, %250 : vector<8x32xf32>
    %c4_i32 = arith.constant 4 : i32
    %252 = vector.broadcast %c4_i32 : i32 to vector<8x1xi32>
    %253 = arith.cmpi eq, %8, %252 : vector<8x1xi32>
    %254 = vector.shape_cast %253 : vector<8x1xi1> to vector<8x1xi1>
    %255 = vector.broadcast %254 : vector<8x1xi1> to vector<8x32xi1>
    %256 = arith.select %255, %251, %214 : vector<8x32xi1>, vector<8x32xf32>
    %cst_60 = arith.constant dense<0.000000e+00> : vector<8x128xf32>
    %257 = tpu.matmul %231, %1, %cst_60 {dimension_numbers = #tpu.dot_dimension_numbers<[1], [0], [0], [1], [0, 0, 1, 1], [], []>} : vector<8x32xf32>, vector<32x128xf32>, vector<8x128xf32> -> vector<8x128xf32>
    %258 = arith.addf %63, %257 : vector<8x128xf32>
    %259 = arith.negf %258 : vector<8x128xf32>
    %260 = math.exp %259 : vector<8x128xf32>
    %cst_61 = arith.constant 1.000000e+00 : f32
    %261 = vector.broadcast %cst_61 : f32 to vector<8x128xf32>
    %262 = arith.addf %261, %260 : vector<8x128xf32>
    %263 = arith.divf %261, %262 : vector<8x128xf32>
    %264 = math.tanh %258 : vector<8x128xf32>
    %265 = vector.extract_strided_slice %263 {offsets = [0, 0], sizes = [8, 32], strides = [1, 1]} : vector<8x128xf32> to vector<8x32xf32>
    %266 = vector.extract_strided_slice %263 {offsets = [0, 32], sizes = [8, 32], strides = [1, 1]} : vector<8x128xf32> to vector<8x32xf32>
    %267 = vector.extract_strided_slice %264 {offsets = [0, 64], sizes = [8, 32], strides = [1, 1]} : vector<8x128xf32> to vector<8x32xf32>
    %268 = vector.extract_strided_slice %263 {offsets = [0, 96], sizes = [8, 32], strides = [1, 1]} : vector<8x128xf32> to vector<8x32xf32>
    %269 = arith.mulf %266, %229 : vector<8x32xf32>
    %270 = arith.mulf %265, %267 : vector<8x32xf32>
    %271 = arith.addf %269, %270 : vector<8x32xf32>
    %272 = math.tanh %271 : vector<8x32xf32>
    %273 = arith.mulf %268, %272 : vector<8x32xf32>
    %cst_62 = arith.constant dense<0.000000e+00> : vector<8x128xf32>
    %274 = tpu.matmul %273, %3, %cst_62 {dimension_numbers = #tpu.dot_dimension_numbers<[1], [0], [0], [1], [0, 0, 1, 1], [], []>} : vector<8x32xf32>, vector<32x128xf32>, vector<8x128xf32> -> vector<8x128xf32>
    %cst_63 = arith.constant dense<0.000000e+00> : vector<8x128xf32>
    %275 = tpu.matmul %251, %4, %cst_63 {dimension_numbers = #tpu.dot_dimension_numbers<[1], [0], [0], [1], [0, 0, 1, 1], [], []>} : vector<8x32xf32>, vector<32x128xf32>, vector<8x128xf32> -> vector<8x128xf32>
    %276 = arith.addf %274, %275 : vector<8x128xf32>
    %277 = vector.broadcast %5 : vector<1x128xf32> to vector<8x128xf32>
    %278 = arith.addf %276, %277 : vector<8x128xf32>
    %279 = arith.negf %278 : vector<8x128xf32>
    %280 = math.exp %279 : vector<8x128xf32>
    %cst_64 = arith.constant 1.000000e+00 : f32
    %281 = vector.broadcast %cst_64 : f32 to vector<8x128xf32>
    %282 = arith.addf %281, %280 : vector<8x128xf32>
    %283 = arith.divf %281, %282 : vector<8x128xf32>
    %284 = math.tanh %278 : vector<8x128xf32>
    %285 = vector.extract_strided_slice %283 {offsets = [0, 0], sizes = [8, 32], strides = [1, 1]} : vector<8x128xf32> to vector<8x32xf32>
    %286 = vector.extract_strided_slice %283 {offsets = [0, 32], sizes = [8, 32], strides = [1, 1]} : vector<8x128xf32> to vector<8x32xf32>
    %287 = vector.extract_strided_slice %284 {offsets = [0, 64], sizes = [8, 32], strides = [1, 1]} : vector<8x128xf32> to vector<8x32xf32>
    %288 = vector.extract_strided_slice %283 {offsets = [0, 96], sizes = [8, 32], strides = [1, 1]} : vector<8x128xf32> to vector<8x32xf32>
    %289 = arith.mulf %286, %249 : vector<8x32xf32>
    %290 = arith.mulf %285, %287 : vector<8x32xf32>
    %291 = arith.addf %289, %290 : vector<8x32xf32>
    %292 = math.tanh %291 : vector<8x32xf32>
    %293 = arith.mulf %288, %292 : vector<8x32xf32>
    %c5_i32 = arith.constant 5 : i32
    %294 = vector.broadcast %c5_i32 : i32 to vector<8x1xi32>
    %295 = arith.cmpi eq, %8, %294 : vector<8x1xi32>
    %296 = vector.shape_cast %295 : vector<8x1xi1> to vector<8x1xi1>
    %297 = vector.broadcast %296 : vector<8x1xi1> to vector<8x32xi1>
    %298 = arith.select %297, %293, %256 : vector<8x32xi1>, vector<8x32xf32>
    %cst_65 = arith.constant dense<0.000000e+00> : vector<8x128xf32>
    %299 = tpu.matmul %273, %1, %cst_65 {dimension_numbers = #tpu.dot_dimension_numbers<[1], [0], [0], [1], [0, 0, 1, 1], [], []>} : vector<8x32xf32>, vector<32x128xf32>, vector<8x128xf32> -> vector<8x128xf32>
    %300 = arith.addf %71, %299 : vector<8x128xf32>
    %301 = arith.negf %300 : vector<8x128xf32>
    %302 = math.exp %301 : vector<8x128xf32>
    %cst_66 = arith.constant 1.000000e+00 : f32
    %303 = vector.broadcast %cst_66 : f32 to vector<8x128xf32>
    %304 = arith.addf %303, %302 : vector<8x128xf32>
    %305 = arith.divf %303, %304 : vector<8x128xf32>
    %306 = math.tanh %300 : vector<8x128xf32>
    %307 = vector.extract_strided_slice %305 {offsets = [0, 0], sizes = [8, 32], strides = [1, 1]} : vector<8x128xf32> to vector<8x32xf32>
    %308 = vector.extract_strided_slice %305 {offsets = [0, 32], sizes = [8, 32], strides = [1, 1]} : vector<8x128xf32> to vector<8x32xf32>
    %309 = vector.extract_strided_slice %306 {offsets = [0, 64], sizes = [8, 32], strides = [1, 1]} : vector<8x128xf32> to vector<8x32xf32>
    %310 = vector.extract_strided_slice %305 {offsets = [0, 96], sizes = [8, 32], strides = [1, 1]} : vector<8x128xf32> to vector<8x32xf32>
    %311 = arith.mulf %308, %271 : vector<8x32xf32>
    %312 = arith.mulf %307, %309 : vector<8x32xf32>
    %313 = arith.addf %311, %312 : vector<8x32xf32>
    %314 = math.tanh %313 : vector<8x32xf32>
    %315 = arith.mulf %310, %314 : vector<8x32xf32>
    %cst_67 = arith.constant dense<0.000000e+00> : vector<8x128xf32>
    %316 = tpu.matmul %315, %3, %cst_67 {dimension_numbers = #tpu.dot_dimension_numbers<[1], [0], [0], [1], [0, 0, 1, 1], [], []>} : vector<8x32xf32>, vector<32x128xf32>, vector<8x128xf32> -> vector<8x128xf32>
    %cst_68 = arith.constant dense<0.000000e+00> : vector<8x128xf32>
    %317 = tpu.matmul %293, %4, %cst_68 {dimension_numbers = #tpu.dot_dimension_numbers<[1], [0], [0], [1], [0, 0, 1, 1], [], []>} : vector<8x32xf32>, vector<32x128xf32>, vector<8x128xf32> -> vector<8x128xf32>
    %318 = arith.addf %316, %317 : vector<8x128xf32>
    %319 = vector.broadcast %5 : vector<1x128xf32> to vector<8x128xf32>
    %320 = arith.addf %318, %319 : vector<8x128xf32>
    %321 = arith.negf %320 : vector<8x128xf32>
    %322 = math.exp %321 : vector<8x128xf32>
    %cst_69 = arith.constant 1.000000e+00 : f32
    %323 = vector.broadcast %cst_69 : f32 to vector<8x128xf32>
    %324 = arith.addf %323, %322 : vector<8x128xf32>
    %325 = arith.divf %323, %324 : vector<8x128xf32>
    %326 = math.tanh %320 : vector<8x128xf32>
    %327 = vector.extract_strided_slice %325 {offsets = [0, 0], sizes = [8, 32], strides = [1, 1]} : vector<8x128xf32> to vector<8x32xf32>
    %328 = vector.extract_strided_slice %325 {offsets = [0, 32], sizes = [8, 32], strides = [1, 1]} : vector<8x128xf32> to vector<8x32xf32>
    %329 = vector.extract_strided_slice %326 {offsets = [0, 64], sizes = [8, 32], strides = [1, 1]} : vector<8x128xf32> to vector<8x32xf32>
    %330 = vector.extract_strided_slice %325 {offsets = [0, 96], sizes = [8, 32], strides = [1, 1]} : vector<8x128xf32> to vector<8x32xf32>
    %331 = arith.mulf %328, %291 : vector<8x32xf32>
    %332 = arith.mulf %327, %329 : vector<8x32xf32>
    %333 = arith.addf %331, %332 : vector<8x32xf32>
    %334 = math.tanh %333 : vector<8x32xf32>
    %335 = arith.mulf %330, %334 : vector<8x32xf32>
    %c6_i32 = arith.constant 6 : i32
    %336 = vector.broadcast %c6_i32 : i32 to vector<8x1xi32>
    %337 = arith.cmpi eq, %8, %336 : vector<8x1xi32>
    %338 = vector.shape_cast %337 : vector<8x1xi1> to vector<8x1xi1>
    %339 = vector.broadcast %338 : vector<8x1xi1> to vector<8x32xi1>
    %340 = arith.select %339, %335, %298 : vector<8x32xi1>, vector<8x32xf32>
    %cst_70 = arith.constant dense<0.000000e+00> : vector<8x128xf32>
    %341 = tpu.matmul %315, %1, %cst_70 {dimension_numbers = #tpu.dot_dimension_numbers<[1], [0], [0], [1], [0, 0, 1, 1], [], []>} : vector<8x32xf32>, vector<32x128xf32>, vector<8x128xf32> -> vector<8x128xf32>
    %342 = arith.addf %79, %341 : vector<8x128xf32>
    %343 = arith.negf %342 : vector<8x128xf32>
    %344 = math.exp %343 : vector<8x128xf32>
    %cst_71 = arith.constant 1.000000e+00 : f32
    %345 = vector.broadcast %cst_71 : f32 to vector<8x128xf32>
    %346 = arith.addf %345, %344 : vector<8x128xf32>
    %347 = arith.divf %345, %346 : vector<8x128xf32>
    %348 = math.tanh %342 : vector<8x128xf32>
    %349 = vector.extract_strided_slice %347 {offsets = [0, 0], sizes = [8, 32], strides = [1, 1]} : vector<8x128xf32> to vector<8x32xf32>
    %350 = vector.extract_strided_slice %347 {offsets = [0, 32], sizes = [8, 32], strides = [1, 1]} : vector<8x128xf32> to vector<8x32xf32>
    %351 = vector.extract_strided_slice %348 {offsets = [0, 64], sizes = [8, 32], strides = [1, 1]} : vector<8x128xf32> to vector<8x32xf32>
    %352 = vector.extract_strided_slice %347 {offsets = [0, 96], sizes = [8, 32], strides = [1, 1]} : vector<8x128xf32> to vector<8x32xf32>
    %353 = arith.mulf %350, %313 : vector<8x32xf32>
    %354 = arith.mulf %349, %351 : vector<8x32xf32>
    %355 = arith.addf %353, %354 : vector<8x32xf32>
    %356 = math.tanh %355 : vector<8x32xf32>
    %357 = arith.mulf %352, %356 : vector<8x32xf32>
    %cst_72 = arith.constant dense<0.000000e+00> : vector<8x128xf32>
    %358 = tpu.matmul %357, %3, %cst_72 {dimension_numbers = #tpu.dot_dimension_numbers<[1], [0], [0], [1], [0, 0, 1, 1], [], []>} : vector<8x32xf32>, vector<32x128xf32>, vector<8x128xf32> -> vector<8x128xf32>
    %cst_73 = arith.constant dense<0.000000e+00> : vector<8x128xf32>
    %359 = tpu.matmul %335, %4, %cst_73 {dimension_numbers = #tpu.dot_dimension_numbers<[1], [0], [0], [1], [0, 0, 1, 1], [], []>} : vector<8x32xf32>, vector<32x128xf32>, vector<8x128xf32> -> vector<8x128xf32>
    %360 = arith.addf %358, %359 : vector<8x128xf32>
    %361 = vector.broadcast %5 : vector<1x128xf32> to vector<8x128xf32>
    %362 = arith.addf %360, %361 : vector<8x128xf32>
    %363 = arith.negf %362 : vector<8x128xf32>
    %364 = math.exp %363 : vector<8x128xf32>
    %cst_74 = arith.constant 1.000000e+00 : f32
    %365 = vector.broadcast %cst_74 : f32 to vector<8x128xf32>
    %366 = arith.addf %365, %364 : vector<8x128xf32>
    %367 = arith.divf %365, %366 : vector<8x128xf32>
    %368 = math.tanh %362 : vector<8x128xf32>
    %369 = vector.extract_strided_slice %367 {offsets = [0, 0], sizes = [8, 32], strides = [1, 1]} : vector<8x128xf32> to vector<8x32xf32>
    %370 = vector.extract_strided_slice %367 {offsets = [0, 32], sizes = [8, 32], strides = [1, 1]} : vector<8x128xf32> to vector<8x32xf32>
    %371 = vector.extract_strided_slice %368 {offsets = [0, 64], sizes = [8, 32], strides = [1, 1]} : vector<8x128xf32> to vector<8x32xf32>
    %372 = vector.extract_strided_slice %367 {offsets = [0, 96], sizes = [8, 32], strides = [1, 1]} : vector<8x128xf32> to vector<8x32xf32>
    %373 = arith.mulf %370, %333 : vector<8x32xf32>
    %374 = arith.mulf %369, %371 : vector<8x32xf32>
    %375 = arith.addf %373, %374 : vector<8x32xf32>
    %376 = math.tanh %375 : vector<8x32xf32>
    %377 = arith.mulf %372, %376 : vector<8x32xf32>
    %c7_i32 = arith.constant 7 : i32
    %378 = vector.broadcast %c7_i32 : i32 to vector<8x1xi32>
    %379 = arith.cmpi eq, %8, %378 : vector<8x1xi32>
    %380 = vector.shape_cast %379 : vector<8x1xi1> to vector<8x1xi1>
    %381 = vector.broadcast %380 : vector<8x1xi1> to vector<8x32xi1>
    %382 = arith.select %381, %377, %340 : vector<8x32xi1>, vector<8x32xf32>
    %cst_75 = arith.constant dense<0.000000e+00> : vector<8x128xf32>
    %383 = tpu.matmul %357, %1, %cst_75 {dimension_numbers = #tpu.dot_dimension_numbers<[1], [0], [0], [1], [0, 0, 1, 1], [], []>} : vector<8x32xf32>, vector<32x128xf32>, vector<8x128xf32> -> vector<8x128xf32>
    %384 = arith.addf %87, %383 : vector<8x128xf32>
    %385 = arith.negf %384 : vector<8x128xf32>
    %386 = math.exp %385 : vector<8x128xf32>
    %cst_76 = arith.constant 1.000000e+00 : f32
    %387 = vector.broadcast %cst_76 : f32 to vector<8x128xf32>
    %388 = arith.addf %387, %386 : vector<8x128xf32>
    %389 = arith.divf %387, %388 : vector<8x128xf32>
    %390 = math.tanh %384 : vector<8x128xf32>
    %391 = vector.extract_strided_slice %389 {offsets = [0, 0], sizes = [8, 32], strides = [1, 1]} : vector<8x128xf32> to vector<8x32xf32>
    %392 = vector.extract_strided_slice %389 {offsets = [0, 32], sizes = [8, 32], strides = [1, 1]} : vector<8x128xf32> to vector<8x32xf32>
    %393 = vector.extract_strided_slice %390 {offsets = [0, 64], sizes = [8, 32], strides = [1, 1]} : vector<8x128xf32> to vector<8x32xf32>
    %394 = vector.extract_strided_slice %389 {offsets = [0, 96], sizes = [8, 32], strides = [1, 1]} : vector<8x128xf32> to vector<8x32xf32>
    %395 = arith.mulf %392, %355 : vector<8x32xf32>
    %396 = arith.mulf %391, %393 : vector<8x32xf32>
    %397 = arith.addf %395, %396 : vector<8x32xf32>
    %398 = math.tanh %397 : vector<8x32xf32>
    %399 = arith.mulf %394, %398 : vector<8x32xf32>
    %cst_77 = arith.constant dense<0.000000e+00> : vector<8x128xf32>
    %400 = tpu.matmul %399, %3, %cst_77 {dimension_numbers = #tpu.dot_dimension_numbers<[1], [0], [0], [1], [0, 0, 1, 1], [], []>} : vector<8x32xf32>, vector<32x128xf32>, vector<8x128xf32> -> vector<8x128xf32>
    %cst_78 = arith.constant dense<0.000000e+00> : vector<8x128xf32>
    %401 = tpu.matmul %377, %4, %cst_78 {dimension_numbers = #tpu.dot_dimension_numbers<[1], [0], [0], [1], [0, 0, 1, 1], [], []>} : vector<8x32xf32>, vector<32x128xf32>, vector<8x128xf32> -> vector<8x128xf32>
    %402 = arith.addf %400, %401 : vector<8x128xf32>
    %403 = vector.broadcast %5 : vector<1x128xf32> to vector<8x128xf32>
    %404 = arith.addf %402, %403 : vector<8x128xf32>
    %405 = arith.negf %404 : vector<8x128xf32>
    %406 = math.exp %405 : vector<8x128xf32>
    %cst_79 = arith.constant 1.000000e+00 : f32
    %407 = vector.broadcast %cst_79 : f32 to vector<8x128xf32>
    %408 = arith.addf %407, %406 : vector<8x128xf32>
    %409 = arith.divf %407, %408 : vector<8x128xf32>
    %410 = math.tanh %404 : vector<8x128xf32>
    %411 = vector.extract_strided_slice %409 {offsets = [0, 0], sizes = [8, 32], strides = [1, 1]} : vector<8x128xf32> to vector<8x32xf32>
    %412 = vector.extract_strided_slice %409 {offsets = [0, 32], sizes = [8, 32], strides = [1, 1]} : vector<8x128xf32> to vector<8x32xf32>
    %413 = vector.extract_strided_slice %410 {offsets = [0, 64], sizes = [8, 32], strides = [1, 1]} : vector<8x128xf32> to vector<8x32xf32>
    %414 = vector.extract_strided_slice %409 {offsets = [0, 96], sizes = [8, 32], strides = [1, 1]} : vector<8x128xf32> to vector<8x32xf32>
    %415 = arith.mulf %412, %375 : vector<8x32xf32>
    %416 = arith.mulf %411, %413 : vector<8x32xf32>
    %417 = arith.addf %415, %416 : vector<8x32xf32>
    %418 = math.tanh %417 : vector<8x32xf32>
    %419 = arith.mulf %414, %418 : vector<8x32xf32>
    %c8_i32 = arith.constant 8 : i32
    %420 = vector.broadcast %c8_i32 : i32 to vector<8x1xi32>
    %421 = arith.cmpi eq, %8, %420 : vector<8x1xi32>
    %422 = vector.shape_cast %421 : vector<8x1xi1> to vector<8x1xi1>
    %423 = vector.broadcast %422 : vector<8x1xi1> to vector<8x32xi1>
    %424 = arith.select %423, %419, %382 : vector<8x32xi1>, vector<8x32xf32>
    %cst_80 = arith.constant dense<0.000000e+00> : vector<8x128xf32>
    %425 = tpu.matmul %424, %6, %cst_80 {dimension_numbers = #tpu.dot_dimension_numbers<[1], [0], [0], [1], [0, 0, 1, 1], [], []>} : vector<8x32xf32>, vector<32x128xf32>, vector<8x128xf32> -> vector<8x128xf32>
    %426 = vector.broadcast %7 : vector<1x128xf32> to vector<8x128xf32>
    %427 = arith.addf %425, %426 : vector<8x128xf32>
    %c0_81 = arith.constant 0 : index
    %c0_82 = arith.constant 0 : index
    %428 = vector.load %arg16[%c0_81, %c0_82] : memref<8x128xf32, #tpu.memory_space<vmem>>, vector<8x128xf32>
    tpu.vector_store %arg16[%c0_81, %c0_82], %427 {strides = array<i32>} : memref<8x128xf32, #tpu.memory_space<vmem>>, vector<8x128xf32>,
    return
  }
  func.func @transform_0(%arg0: i32) -> (i32, i32) {
    %c0_i32 = arith.constant 0 : i32
    %c0_i32_0 = arith.constant 0 : i32
    return %arg0, %c0_i32 : i32, i32
  }
  func.func @transform_1(%arg0: i32) -> (i32, i32) {
    %c0_i32 = arith.constant 0 : i32
    %c0_i32_0 = arith.constant 0 : i32
    return %arg0, %c0_i32 : i32, i32
  }
  func.func @transform_2(%arg0: i32) -> (i32, i32) {
    %c0_i32 = arith.constant 0 : i32
    %c0_i32_0 = arith.constant 0 : i32
    return %arg0, %c0_i32 : i32, i32
  }
  func.func @transform_3(%arg0: i32) -> (i32, i32) {
    %c0_i32 = arith.constant 0 : i32
    %c0_i32_0 = arith.constant 0 : i32
    %c0_i32_1 = arith.constant 0 : i32
    return %c0_i32, %c0_i32_0 : i32, i32
  }
  func.func @transform_4(%arg0: i32) -> (i32, i32) {
    %c0_i32 = arith.constant 0 : i32
    %c0_i32_0 = arith.constant 0 : i32
    %c0_i32_1 = arith.constant 0 : i32
    return %c0_i32, %c0_i32_0 : i32, i32
  }
  func.func @transform_5(%arg0: i32) -> (i32, i32) {
    %c0_i32 = arith.constant 0 : i32
    %c0_i32_0 = arith.constant 0 : i32
    %c0_i32_1 = arith.constant 0 : i32
    return %c0_i32, %c0_i32_0 : i32, i32
  }
  func.func @transform_6(%arg0: i32) -> (i32, i32) {
    %c0_i32 = arith.constant 0 : i32
    %c0_i32_0 = arith.constant 0 : i32
    %c0_i32_1 = arith.constant 0 : i32
    return %c0_i32, %c0_i32_0 : i32, i32
  }
  func.func @transform_7(%arg0: i32) -> (i32, i32) {
    %c0_i32 = arith.constant 0 : i32
    %c0_i32_0 = arith.constant 0 : i32
    %c0_i32_1 = arith.constant 0 : i32
    return %c0_i32, %c0_i32_0 : i32, i32
  }
  func.func @transform_8(%arg0: i32) -> (i32, i32) {
    %c0_i32 = arith.constant 0 : i32
    %c0_i32_0 = arith.constant 0 : i32
    %c0_i32_1 = arith.constant 0 : i32
    return %c0_i32, %c0_i32_0 : i32, i32
  }
  func.func @transform_9(%arg0: i32) -> (i32, i32) {
    %c0_i32 = arith.constant 0 : i32
    %c0_i32_0 = arith.constant 0 : i32
    %c0_i32_1 = arith.constant 0 : i32
    return %c0_i32, %c0_i32_0 : i32, i32
  }
  func.func @transform_10(%arg0: i32) -> (i32, i32) {
    %c0_i32 = arith.constant 0 : i32
    %c0_i32_0 = arith.constant 0 : i32
    %c0_i32_1 = arith.constant 0 : i32
    return %c0_i32, %c0_i32_0 : i32, i32
  }
  func.func @transform_11(%arg0: i32) -> (i32, i32) {
    %c0_i32 = arith.constant 0 : i32
    %c0_i32_0 = arith.constant 0 : i32
    %c0_i32_1 = arith.constant 0 : i32
    return %c0_i32, %c0_i32_0 : i32, i32
  }
  func.func @transform_12(%arg0: i32) -> (i32, i32) {
    %c0_i32 = arith.constant 0 : i32
    %c0_i32_0 = arith.constant 0 : i32
    %c0_i32_1 = arith.constant 0 : i32
    return %c0_i32, %c0_i32_0 : i32, i32
  }
  func.func @transform_13(%arg0: i32) -> (i32, i32) {
    %c0_i32 = arith.constant 0 : i32
    %c0_i32_0 = arith.constant 0 : i32
    %c0_i32_1 = arith.constant 0 : i32
    return %c0_i32, %c0_i32_0 : i32, i32
  }
  func.func @transform_14(%arg0: i32) -> (i32, i32) {
    %c0_i32 = arith.constant 0 : i32
    %c0_i32_0 = arith.constant 0 : i32
    %c0_i32_1 = arith.constant 0 : i32
    return %c0_i32, %c0_i32_0 : i32, i32
  }
  func.func @transform_15(%arg0: i32) -> (i32, i32) {
    %c0_i32 = arith.constant 0 : i32
    %c0_i32_0 = arith.constant 0 : i32
    return %arg0, %c0_i32 : i32, i32
  }
}

</mosaic_0001>

<llo_original>
// kernel: e2e_regression.1
$region0: #{e2e_regression.1}
  #allocation0 [shape = 'u32[]', space=smem, size = 0x4, offset = 0x4, fixed_abs, tag = 'smem constant byte address 0x4 - core index']
  #allocation1 [shape = 'u32[144,128]{1,0:T(1,128)}', space=vmem, size = 0x12000, scoped, tag = 'internal scratch']
  %s0 = inlined_call_operand.vmem [shape: f32[8,24], index: 0, kind: input, shape index: {}]
  %s1 = inlined_call_operand.vmem [shape: s32[8,8], index: 1, kind: input, shape index: {}]
  %s2 = inlined_call_operand.vmem [shape: s32[8,1], index: 2, kind: input, shape index: {}]
  %s3 = inlined_call_operand.hbm [shape: f32[24,32], index: 3, kind: input, shape index: {}]
  %s4 = inlined_call_operand.vmem [shape: f32[1,32], index: 4, kind: input, shape index: {}]
  %s5 = inlined_call_operand.vmem [shape: f32[32,32], index: 5, kind: input, shape index: {}]
  %s6 = inlined_call_operand.vmem [shape: f32[1,32], index: 6, kind: input, shape index: {}]
  %s7 = inlined_call_operand.vmem [shape: f32[8,128], index: 7, kind: input, shape index: {}]
  %s8 = inlined_call_operand.vmem [shape: f32[1,128], index: 8, kind: input, shape index: {}]
  %s9 = inlined_call_operand.hbm [shape: f32[32,128], index: 9, kind: input, shape index: {}]
  %s10 = inlined_call_operand.hbm [shape: f32[32,128], index: 10, kind: input, shape index: {}]
  %s11 = inlined_call_operand.hbm [shape: f32[32,128], index: 11, kind: input, shape index: {}]
  %s12 = inlined_call_operand.vmem [shape: f32[1,128], index: 12, kind: input, shape index: {}]
  %s13 = inlined_call_operand.hbm [shape: f32[32,128], index: 13, kind: input, shape index: {}]
  %s14 = inlined_call_operand.vmem [shape: f32[1,128], index: 14, kind: input, shape index: {}]
  %s15 = inlined_call_operand.vmem [shape: f32[8,128], index: 15, kind: output, shape index: {}]
  %s16 = sld [smem:[#allocation0]]
  $region90: #{e2e_regression.1} parent=0
    _
  %s18 = ssub.s32 1, %s16
  %s19 = scalar_select 0, %s18, %s16
  $region1: #{e2e_regression.1} parent=0
    #allocation2 [shape = 'u8[12288]{0}', space=vmem, size = 0x3000, scoped, tag = 'input window, operand 3, single buffered']
    #allocation3 [shape = 's32[1]{0}', space=sflag, size = 0x4, scoped, tag = 'scoped memory for e2e_regression.1']
    #allocation4 [shape = 'u8[16384]{0}', space=vmem, size = 0x4000, scoped, tag = 'input window, operand 9, single buffered']
    #allocation5 [shape = 's32[1]{0}', space=sflag, size = 0x4, scoped, tag = 'scoped memory for e2e_regression.1']
    #allocation6 [shape = 'u8[16384]{0}', space=vmem, size = 0x4000, scoped, tag = 'input window, operand 10, single buffered']
    #allocation7 [shape = 'u8[16384]{0}', space=vmem, size = 0x4000, scoped, tag = 'input window, operand 11, single buffered']
    #allocation8 [shape = 's32[1]{0}', space=sflag, size = 0x4, scoped, tag = 'scoped memory for e2e_regression.1']
    #allocation9 [shape = 'u8[16384]{0}', space=vmem, size = 0x4000, scoped, tag = 'input window, operand 13, single buffered']
    %20 = vsyncpa [#allocation3], 0
    %21 = vsyncpa [#allocation5], 0
    %22 = vsyncpa [#allocation8], 0
    // Predicated region
    $region2: #{e2e_regression.1} parent=1 // pred_check
      _
    $region3: #{e2e_regression.1} parent=1 // pred_check_branch
      %24 = sbr.rel (0) target = $region5
    $region4: #{e2e_regression.1} parent=1 // pred_region
      _
    $region5: #{e2e_regression.1} parent=1 // pred_fallthru
      _
    // Predicated region
    $region6: #{e2e_regression.1} parent=1 // pred_check
      _
    $region7: #{e2e_regression.1} parent=1 // pred_check_branch
      %26 = sbr.rel (0) target = $region9
    $region8: #{e2e_regression.1} parent=1 // pred_region
      _
    $region9: #{e2e_regression.1} parent=1 // pred_fallthru
      _
    // Predicated region
    $region10: #{e2e_regression.1} parent=1 // pred_check
      _
    $region11: #{e2e_regression.1} parent=1 // pred_check_branch
      %28 = sbr.rel (0) target = $region13
    $region12: #{e2e_regression.1} parent=1 // pred_region
      _
    $region13: #{e2e_regression.1} parent=1 // pred_fallthru
      _
    // Predicated region
    $region14: #{e2e_regression.1} parent=1 // pred_check
      _
    $region15: #{e2e_regression.1} parent=1 // pred_check_branch
      %30 = sbr.rel (0) target = $region17
    $region16: #{e2e_regression.1} parent=1 // pred_region
      %s32 = ssub.s32 384, 384
      %33 = vsyncadd [#allocation3], %s32
      %s34 = sshll.u32 [#allocation2], 4
      %s35 = int_to_ptr.vmem [resolvable:$true] %s34
      %40 = dma.hbm_to_vmem [thread:$0]  %s3, 384, %s35, [#allocation3], 128, 128, 8
    $region17: #{e2e_regression.1} parent=1 // pred_fallthru
      _
    // Predicated region
    $region18: #{e2e_regression.1} parent=1 // pred_check
      _
    $region19: #{e2e_regression.1} parent=1 // pred_check_branch
      %42 = sbr.rel (0) target = $region21
    $region20: #{e2e_regression.1} parent=1 // pred_region
      _
    $region21: #{e2e_regression.1} parent=1 // pred_fallthru
      _
    // Predicated region
    $region22: #{e2e_regression.1} parent=1 // pred_check
      _
    $region23: #{e2e_regression.1} parent=1 // pred_check_branch
      %44 = sbr.rel (0) target = $region25
    $region24: #{e2e_regression.1} parent=1 // pred_region
      _
    $region25: #{e2e_regression.1} parent=1 // pred_fallthru
      _
    // Predicated region
    $region26: #{e2e_regression.1} parent=1 // pred_check
      _
    $region27: #{e2e_regression.1} parent=1 // pred_check_branch
      %46 = sbr.rel (0) target = $region29
    $region28: #{e2e_regression.1} parent=1 // pred_region
      _
    $region29: #{e2e_regression.1} parent=1 // pred_fallthru
      _
    // Predicated region
    $region30: #{e2e_regression.1} parent=1 // pred_check
      _
    $region31: #{e2e_regression.1} parent=1 // pred_check_branch
      %48 = sbr.rel (0) target = $region33
    $region32: #{e2e_regression.1} parent=1 // pred_region
      _
    $region33: #{e2e_regression.1} parent=1 // pred_fallthru
      _
    // Predicated region
    $region34: #{e2e_regression.1} parent=1 // pred_check
      _
    $region35: #{e2e_regression.1} parent=1 // pred_check_branch
      %50 = sbr.rel (0) target = $region37
    $region36: #{e2e_regression.1} parent=1 // pred_region
      _
    $region37: #{e2e_regression.1} parent=1 // pred_fallthru
      _
    // Predicated region
    $region38: #{e2e_regression.1} parent=1 // pred_check
      _
    $region39: #{e2e_regression.1} parent=1 // pred_check_branch
      %52 = sbr.rel (0) target = $region41
    $region40: #{e2e_regression.1} parent=1 // pred_region
      %s54 = ssub.s32 512, 512
      %55 = vsyncadd [#allocation5], %s54
      %s56 = sshll.u32 [#allocation4], 4
      %s57 = int_to_ptr.vmem [resolvable:$true] %s56
      %62 = dma.hbm_to_vmem [thread:$0]  %s9, 512, %s57, [#allocation5], 128, 128, 8
    $region41: #{e2e_regression.1} parent=1 // pred_fallthru
      _
    // Predicated region
    $region42: #{e2e_regression.1} parent=1 // pred_check
      _
    $region43: #{e2e_regression.1} parent=1 // pred_check_branch
      %64 = sbr.rel (0) target = $region45
    $region44: #{e2e_regression.1} parent=1 // pred_region
      %s66 = ssub.s32 512, 512
      %67 = vsyncadd [#allocation5], %s66
      %s68 = sshll.u32 [#allocation6], 4
      %s69 = int_to_ptr.vmem [resolvable:$true] %s68
      %74 = dma.hbm_to_vmem [thread:$0]  %s10, 512, %s69, [#allocation5], 128, 128, 8
    $region45: #{e2e_regression.1} parent=1 // pred_fallthru
      _
    // Predicated region
    $region46: #{e2e_regression.1} parent=1 // pred_check
      _
    $region47: #{e2e_regression.1} parent=1 // pred_check_branch
      %76 = sbr.rel (0) target = $region49
    $region48: #{e2e_regression.1} parent=1 // pred_region
      %s78 = ssub.s32 512, 512
      %79 = vsyncadd [#allocation8], %s78
      %s80 = sshll.u32 [#allocation7], 4
      %s81 = int_to_ptr.vmem [resolvable:$true] %s80
      %86 = dma.hbm_to_vmem [thread:$0]  %s11, 512, %s81, [#allocation8], 128, 128, 8
    $region49: #{e2e_regression.1} parent=1 // pred_fallthru
      _
    // Predicated region
    $region50: #{e2e_regression.1} parent=1 // pred_check
      _
    $region51: #{e2e_regression.1} parent=1 // pred_check_branch
      %88 = sbr.rel (0) target = $region53
    $region52: #{e2e_regression.1} parent=1 // pred_region
      _
    $region53: #{e2e_regression.1} parent=1 // pred_fallthru
      _
    // Predicated region
    $region54: #{e2e_regression.1} parent=1 // pred_check
      _
    $region55: #{e2e_regression.1} parent=1 // pred_check_branch
      %90 = sbr.rel (0) target = $region57
    $region56: #{e2e_regression.1} parent=1 // pred_region
      %s92 = ssub.s32 512, 512
      %93 = vsyncadd [#allocation8], %s92
      %s94 = sshll.u32 [#allocation9], 4
      %s95 = int_to_ptr.vmem [resolvable:$true] %s94
      %100 = dma.hbm_to_vmem [thread:$0]  %s13, 512, %s95, [#allocation8], 128, 128, 8
    $region57: #{e2e_regression.1} parent=1 // pred_fallthru
      _
    // Predicated region
    $region58: #{e2e_regression.1} parent=1 // pred_check
      _
    $region59: #{e2e_regression.1} parent=1 // pred_check_branch
      %102 = sbr.rel (0) target = $region61
    $region60: #{e2e_regression.1} parent=1 // pred_region
      _
    $region61: #{e2e_regression.1} parent=1 // pred_fallthru
      _
    // Predicated region
    $region62: #{e2e_regression.1} parent=1 // pred_check
      _
    $region63: #{e2e_regression.1} parent=1 // pred_check_branch
      %104 = sbr.rel (0) target = $region65
    $region64: #{e2e_regression.1} parent=1 // pred_region
      %105 = dma.done [#allocation3], 384
    $region65: #{e2e_regression.1} parent=1 // pred_fallthru
      _
    // Predicated region
    $region66: #{e2e_regression.1} parent=1 // pred_check
      _
    $region67: #{e2e_regression.1} parent=1 // pred_check_branch
      %107 = sbr.rel (0) target = $region69
    $region68: #{e2e_regression.1} parent=1 // pred_region
      %108 = dma.done [#allocation5], 512
    $region69: #{e2e_regression.1} parent=1 // pred_fallthru
      _
    // Predicated region
    $region70: #{e2e_regression.1} parent=1 // pred_check
      _
    $region71: #{e2e_regression.1} parent=1 // pred_check_branch
      %110 = sbr.rel (0) target = $region73
    $region72: #{e2e_regression.1} parent=1 // pred_region
      %111 = dma.done [#allocation5], 512
    $region73: #{e2e_regression.1} parent=1 // pred_fallthru
      _
    // Predicated region
    $region74: #{e2e_regression.1} parent=1 // pred_check
      _
    $region75: #{e2e_regression.1} parent=1 // pred_check_branch
      %113 = sbr.rel (0) target = $region77
    $region76: #{e2e_regression.1} parent=1 // pred_region
      %114 = dma.done [#allocation8], 512
    $region77: #{e2e_regression.1} parent=1 // pred_fallthru
      _
    // Predicated region
    $region78: #{e2e_regression.1} parent=1 // pred_check
      _
    $region79: #{e2e_regression.1} parent=1 // pred_check_branch
      %116 = sbr.rel (0) target = $region81
    $region80: #{e2e_regression.1} parent=1 // pred_region
      %117 = dma.done [#allocation8], 512
    $region81: #{e2e_regression.1} parent=1 // pred_fallthru
      _
    %v118 = vld [vmem:[%s7] sm:$0xff]
    %v119 = vld [vmem:[#allocation4] sm:$0xff]
    %v120 = vld [vmem:[#allocation4 + $0x8] sm:$0xff]
    %v121 = vld [vmem:[#allocation4 + $0x10] sm:$0xff]
    %v122 = vld [vmem:[#allocation4 + $0x18] sm:$0xff]
    %v123 = vld [vmem:[%s8] sm:$0x1]
    %v124 = vld [vmem:[#allocation6] sm:$0xff]
    %v125 = vld [vmem:[#allocation6 + $0x8] sm:$0xff]
    %v126 = vld [vmem:[#allocation6 + $0x10] sm:$0xff]
    %v127 = vld [vmem:[#allocation6 + $0x18] sm:$0xff]
    %v128 = vld [vmem:[#allocation7] sm:$0xff]
    %v129 = vld [vmem:[#allocation7 + $0x8] sm:$0xff]
    %v130 = vld [vmem:[#allocation7 + $0x10] sm:$0xff]
    %v131 = vld [vmem:[#allocation7 + $0x18] sm:$0xff]
    %v132 = vld [vmem:[%s12] sm:$0x1]
    %v133 = vld [vmem:[#allocation9] sm:$0xff]
    %v134 = vld [vmem:[#allocation9 + $0x8] sm:$0xff]
    %v135 = vld [vmem:[#allocation9 + $0x10] sm:$0xff]
    %v136 = vld [vmem:[#allocation9 + $0x18] sm:$0xff]
    %v137 = vld [vmem:[%s14] sm:$0x1]
    %v138 = vld [vmem:[%s2] sm:$0xff]
    %v139 = vld [vmem:[%s0] sm:$0xff]
    %v140 = vld [vmem:[#allocation2] sm:$0xff]
    %v141 = vld [vmem:[#allocation2 + $0x8] sm:$0xff]
    %v142 = vld [vmem:[#allocation2 + $0x10] sm:$0xff]
    %v143 = vld [vmem:[%s4] sm:$0x1]
    %v145 = vlaneseq
    %v146 = vshrl.u32 %v145, 7
    %v147 = vsub.s32 0, %v146
    %v148 = vrot.slane %v143, %v147
    %vm150 = vcmask 195584
    %v152 = vsel %vm150, %v139, 0
    %154 = vmatprep.subr.mxu0 0.0
    %155 = vmatpush1.msra.mxu0 0.0
    %156 = vmatprep.subr.mxu0 0.0
    %157 = vmatpush1.msra.mxu0 0.0
    %158 = vmatprep.subr.mxu0 0.0
    %159 = vmatpush1.msra.mxu0 0.0
    %160 = vmatprep.subr.mxu0 0.0
    %161 = vmatpush1.msra.mxu0 0.0
    %162 = vmatprep.subr.mxu0 0.0
    %163 = vmatpush1.msra.mxu0 0.0
    %164 = vmatprep.subr.mxu0 0.0
    %165 = vmatpush1.msra.mxu0 0.0
    %166 = vmatprep.subr.mxu0 0.0
    %167 = vmatpush1.msra.mxu0 0.0
    %168 = vmatprep.subr.mxu0 0.0
    %169 = vmatpush1.msra.mxu0 0.0
    %170 = vmatprep.subr.mxu0 0.0
    %171 = vmatpush1.msra.mxu0 0.0
    %172 = vmatprep.subr.mxu0 0.0
    %173 = vmatpush1.msra.mxu0 0.0
    %174 = vmatprep.subr.mxu0 0.0
    %175 = vmatpush1.msra.mxu0 0.0
    %176 = vmatprep.subr.mxu0 0.0
    %177 = vmatpush1.msra.mxu0 0.0
    %178 = vmatprep.subr.mxu0 0.0
    %179 = vmatpush1.msra.mxu0 0.0
    %180 = vmatprep.subr.mxu0 0.0
    %181 = vmatpush1.msra.mxu0 %v142
    %182 = vmatprep.subr.mxu0 0.0
    %183 = vmatpush1.msra.mxu0 %v141
    %184 = vmatprep.subr.mxu0 0.0
    %185 = vmatpush1.msra.mxu0 %v140
    %186 = vmatprep.subr.mxu0 0.0
    %187 = vmatpush2.msra.mxu0 0.0
    %188 = vmatprep.subr.mxu0 0.0
    %189 = vmatpush2.msra.mxu0 0.0
    %190 = vmatprep.subr.mxu0 0.0
    %191 = vmatpush2.msra.mxu0 0.0
    %192 = vmatprep.subr.mxu0 0.0
    %193 = vmatpush2.msra.mxu0 0.0
    %194 = vmatprep.subr.mxu0 0.0
    %195 = vmatpush2.msra.mxu0 0.0
    %196 = vmatprep.subr.mxu0 0.0
    %197 = vmatpush2.msra.mxu0 0.0
    %198 = vmatprep.subr.mxu0 0.0
    %199 = vmatpush2.msra.mxu0 0.0
    %200 = vmatprep.subr.mxu0 0.0
    %201 = vmatpush2.msra.mxu0 0.0
    %202 = vmatprep.subr.mxu0 0.0
    %203 = vmatpush2.msra.mxu0 0.0
    %204 = vmatprep.subr.mxu0 0.0
    %205 = vmatpush2.msra.mxu0 0.0
    %206 = vmatprep.subr.mxu0 0.0
    %207 = vmatpush2.msra.mxu0 0.0
    %208 = vmatprep.subr.mxu0 0.0
    %209 = vmatpush2.msra.mxu0 0.0
    %210 = vmatprep.subr.mxu0 0.0
    %211 = vmatpush2.msra.mxu0 0.0
    %212 = vmatprep.subr.mxu0 0.0
    %213 = vmatpush2.msra.mxu0 0.0
    %214 = vmatprep.subr.mxu0 0.0
    %215 = vmatpush2.msra.mxu0 0.0
    %216 = vmatprep.subr.mxu0 0.0
    %217 = vmatpush2.msra.mxu0 0.0
    %218 = vmatprep.mubr.f32.mxu0 0.0
    %219 = vmatmul.mubr.f32.gmra.mxu0 %v152
    %v220 = vpop.f32.mrf.mxu0
    %v221 = vadd.f32 %v148, %v220
    %v222 = vpop.f32.mrf.mxu0
    %223 = vdwg.mxu0
    %v224 = vmax.f32 %v221, 0.0
    %v225 = vld [vmem:[%s5] sm:$0xff]
    %v226 = vld [vmem:[%s5 + $0x8] sm:$0xff]
    %v227 = vld [vmem:[%s5 + $0x10] sm:$0xff]
    %v228 = vld [vmem:[%s5 + $0x18] sm:$0xff]
    %v229 = vld [vmem:[%s6] sm:$0x1]
    %v231 = vlaneseq
    %v232 = vshrl.u32 %v231, 7
    %v233 = vsub.s32 0, %v232
    %v234 = vrot.slane %v229, %v233
    %vm236 = vcmask 261120
    %v238 = vsel %vm236, %v224, 0
    %240 = vmatprep.subr.mxu0 0.0
    %241 = vmatpush1.msra.mxu0 0.0
    %242 = vmatprep.subr.mxu0 0.0
    %243 = vmatpush1.msra.mxu0 0.0
    %244 = vmatprep.subr.mxu0 0.0
    %245 = vmatpush1.msra.mxu0 0.0
    %246 = vmatprep.subr.mxu0 0.0
    %247 = vmatpush1.msra.mxu0 0.0
    %248 = vmatprep.subr.mxu0 0.0
    %249 = vmatpush1.msra.mxu0 0.0
    %250 = vmatprep.subr.mxu0 0.0
    %251 = vmatpush1.msra.mxu0 0.0
    %252 = vmatprep.subr.mxu0 0.0
    %253 = vmatpush1.msra.mxu0 0.0
    %254 = vmatprep.subr.mxu0 0.0
    %255 = vmatpush1.msra.mxu0 0.0
    %256 = vmatprep.subr.mxu0 0.0
    %257 = vmatpush1.msra.mxu0 0.0
    %258 = vmatprep.subr.mxu0 0.0
    %259 = vmatpush1.msra.mxu0 0.0
    %260 = vmatprep.subr.mxu0 0.0
    %261 = vmatpush1.msra.mxu0 0.0
    %262 = vmatprep.subr.mxu0 0.0
    %263 = vmatpush1.msra.mxu0 0.0
    %264 = vmatprep.subr.mxu0 0.0
    %265 = vmatpush1.msra.mxu0 %v228
    %266 = vmatprep.subr.mxu0 0.0
    %267 = vmatpush1.msra.mxu0 %v227
    %268 = vmatprep.subr.mxu0 0.0
    %269 = vmatpush1.msra.mxu0 %v226
    %270 = vmatprep.subr.mxu0 0.0
    %271 = vmatpush1.msra.mxu0 %v225
    %272 = vmatprep.subr.mxu0 0.0
    %273 = vmatpush2.msra.mxu0 0.0
    %274 = vmatprep.subr.mxu0 0.0
    %275 = vmatpush2.msra.mxu0 0.0
    %276 = vmatprep.subr.mxu0 0.0
    %277 = vmatpush2.msra.mxu0 0.0
    %278 = vmatprep.subr.mxu0 0.0
    %279 = vmatpush2.msra.mxu0 0.0
    %280 = vmatprep.subr.mxu0 0.0
    %281 = vmatpush2.msra.mxu0 0.0
    %282 = vmatprep.subr.mxu0 0.0
    %283 = vmatpush2.msra.mxu0 0.0
    %284 = vmatprep.subr.mxu0 0.0
    %285 = vmatpush2.msra.mxu0 0.0
    %286 = vmatprep.subr.mxu0 0.0
    %287 = vmatpush2.msra.mxu0 0.0
    %288 = vmatprep.subr.mxu0 0.0
    %289 = vmatpush2.msra.mxu0 0.0
    %290 = vmatprep.subr.mxu0 0.0
    %291 = vmatpush2.msra.mxu0 0.0
    %292 = vmatprep.subr.mxu0 0.0
    %293 = vmatpush2.msra.mxu0 0.0
    %294 = vmatprep.subr.mxu0 0.0
    %295 = vmatpush2.msra.mxu0 0.0
    %296 = vmatprep.subr.mxu0 0.0
    %297 = vmatpush2.msra.mxu0 0.0
    %298 = vmatprep.subr.mxu0 0.0
    %299 = vmatpush2.msra.mxu0 0.0
    %300 = vmatprep.subr.mxu0 0.0
    %301 = vmatpush2.msra.mxu0 0.0
    %302 = vmatprep.subr.mxu0 0.0
    %303 = vmatpush2.msra.mxu0 0.0
    %304 = vmatprep.mubr.f32.mxu0 0.0
    %305 = vmatmul.mubr.f32.gmra.mxu0 %v238
    %v306 = vpop.f32.mrf.mxu0
    %v307 = vadd.f32 %v234, %v306
    %v308 = vpop.f32.mrf.mxu0
    %309 = vdwg.mxu0
    %v310 = vld [vmem:[%s1] sm:$0xff]
    %v311 = vlaneseq
    %v312 = vand.u32 %v311, 127
    %313 = vset.pattern.permute.xlu0 0
    %314 = vperm.xlu0 %313, %v310
    %v315 = vpop.permute.xlu0 %314
    %vm316 = vcmp.eq.s32.totalorder %v315, %v312
    %v317 = vsel %vm316, 1, 0
    %v318 = vcvt.s32.f32 %v317
    %v320 = vlaneseq
    %v321 = vshrl.u32 %v320, 7
    %v322 = vsub.s32 0, %v321
    %v323 = vrot.slane %v123, %v322
    %vm325 = vcmask 64512
    %v327 = vsel %vm325, %v318, 0
    %329 = vmatprep.subr.mxu0 0.0
    %330 = vmatpush1.msra.mxu0 0.0
    %331 = vmatprep.subr.mxu0 0.0
    %332 = vmatpush1.msra.mxu0 0.0
    %333 = vmatprep.subr.mxu0 0.0
    %334 = vmatpush1.msra.mxu0 0.0
    %335 = vmatprep.subr.mxu0 0.0
    %336 = vmatpush1.msra.mxu0 0.0
    %337 = vmatprep.subr.mxu0 0.0
    %338 = vmatpush1.msra.mxu0 0.0
    %339 = vmatprep.subr.mxu0 0.0
    %340 = vmatpush1.msra.mxu0 0.0
    %341 = vmatprep.subr.mxu0 0.0
    %342 = vmatpush1.msra.mxu0 0.0
    %343 = vmatprep.subr.mxu0 0.0
    %344 = vmatpush1.msra.mxu0 0.0
    %345 = vmatprep.subr.mxu0 0.0
    %346 = vmatpush1.msra.mxu0 0.0
    %347 = vmatprep.subr.mxu0 0.0
    %348 = vmatpush1.msra.mxu0 0.0
    %349 = vmatprep.subr.mxu0 0.0
    %350 = vmatpush1.msra.mxu0 0.0
    %351 = vmatprep.subr.mxu0 0.0
    %352 = vmatpush1.msra.mxu0 0.0
    %353 = vmatprep.subr.mxu0 0.0
    %354 = vmatpush1.msra.mxu0 0.0
    %355 = vmatprep.subr.mxu0 0.0
    %356 = vmatpush1.msra.mxu0 0.0
    %357 = vmatprep.subr.mxu0 0.0
    %358 = vmatpush1.msra.mxu0 0.0
    %359 = vmatprep.subr.mxu0 0.0
    %360 = vmatpush1.msra.mxu0 %v118
    %361 = vmatprep.subr.mxu0 0.0
    %362 = vmatpush2.msra.mxu0 0.0
    %363 = vmatprep.subr.mxu0 0.0
    %364 = vmatpush2.msra.mxu0 0.0
    %365 = vmatprep.subr.mxu0 0.0
    %366 = vmatpush2.msra.mxu0 0.0
    %367 = vmatprep.subr.mxu0 0.0
    %368 = vmatpush2.msra.mxu0 0.0
    %369 = vmatprep.subr.mxu0 0.0
    %370 = vmatpush2.msra.mxu0 0.0
    %371 = vmatprep.subr.mxu0 0.0
    %372 = vmatpush2.msra.mxu0 0.0
    %373 = vmatprep.subr.mxu0 0.0
    %374 = vmatpush2.msra.mxu0 0.0
    %375 = vmatprep.subr.mxu0 0.0
    %376 = vmatpush2.msra.mxu0 0.0
    %377 = vmatprep.subr.mxu0 0.0
    %378 = vmatpush2.msra.mxu0 0.0
    %379 = vmatprep.subr.mxu0 0.0
    %380 = vmatpush2.msra.mxu0 0.0
    %381 = vmatprep.subr.mxu0 0.0
    %382 = vmatpush2.msra.mxu0 0.0
    %383 = vmatprep.subr.mxu0 0.0
    %384 = vmatpush2.msra.mxu0 0.0
    %385 = vmatprep.subr.mxu0 0.0
    %386 = vmatpush2.msra.mxu0 0.0
    %387 = vmatprep.subr.mxu0 0.0
    %388 = vmatpush2.msra.mxu0 0.0
    %389 = vmatprep.subr.mxu0 0.0
    %390 = vmatpush2.msra.mxu0 0.0
    %391 = vmatprep.subr.mxu0 0.0
    %392 = vmatpush2.msra.mxu0 0.0
    %393 = vmatprep.mubr.f32.mxu0 0.0
    %394 = vmatmul.mubr.f32.gmra.mxu0 %v327
    %v395 = vpop.f32.mrf.mxu0
    %v396 = vadd.f32 %v323, %v395
    %v397 = vpop.f32.mrf.mxu0
    %398 = vdwg.mxu0
    %399 = vset.pattern.permute.xlu0 1
    %400 = vperm.xlu0 %399, %v310
    %v401 = vpop.permute.xlu0 %400
    %vm402 = vcmp.eq.s32.totalorder %v401, %v312
    %v403 = vsel %vm402, 1, 0
    %v404 = vcvt.s32.f32 %v403
    %v406 = vsel %vm325, %v404, 0
    %408 = vmatprep.subr.mxu0 0.0
    %409 = vmatpush1.msra.mxu0 0.0
    %410 = vmatprep.subr.mxu0 0.0
    %411 = vmatpush1.msra.mxu0 0.0
    %412 = vmatprep.subr.mxu0 0.0
    %413 = vmatpush1.msra.mxu0 0.0
    %414 = vmatprep.subr.mxu0 0.0
    %415 = vmatpush1.msra.mxu0 0.0
    %416 = vmatprep.subr.mxu0 0.0
    %417 = vmatpush1.msra.mxu0 0.0
    %418 = vmatprep.subr.mxu0 0.0
    %419 = vmatpush1.msra.mxu0 0.0
    %420 = vmatprep.subr.mxu0 0.0
    %421 = vmatpush1.msra.mxu0 0.0
    %422 = vmatprep.subr.mxu0 0.0
    %423 = vmatpush1.msra.mxu0 0.0
    %424 = vmatprep.subr.mxu0 0.0
    %425 = vmatpush1.msra.mxu0 0.0
    %426 = vmatprep.subr.mxu0 0.0
    %427 = vmatpush1.msra.mxu0 0.0
    %428 = vmatprep.subr.mxu0 0.0
    %429 = vmatpush1.msra.mxu0 0.0
    %430 = vmatprep.subr.mxu0 0.0
    %431 = vmatpush1.msra.mxu0 0.0
    %432 = vmatprep.subr.mxu0 0.0
    %433 = vmatpush1.msra.mxu0 0.0
    %434 = vmatprep.subr.mxu0 0.0
    %435 = vmatpush1.msra.mxu0 0.0
    %436 = vmatprep.subr.mxu0 0.0
    %437 = vmatpush1.msra.mxu0 0.0
    %438 = vmatprep.subr.mxu0 0.0
    %439 = vmatpush1.msra.mxu0 %v118
    %440 = vmatprep.subr.mxu0 0.0
    %441 = vmatpush2.msra.mxu0 0.0
    %442 = vmatprep.subr.mxu0 0.0
    %443 = vmatpush2.msra.mxu0 0.0
    %444 = vmatprep.subr.mxu0 0.0
    %445 = vmatpush2.msra.mxu0 0.0
    %446 = vmatprep.subr.mxu0 0.0
    %447 = vmatpush2.msra.mxu0 0.0
    %448 = vmatprep.subr.mxu0 0.0
    %449 = vmatpush2.msra.mxu0 0.0
    %450 = vmatprep.subr.mxu0 0.0
    %451 = vmatpush2.msra.mxu0 0.0
    %452 = vmatprep.subr.mxu0 0.0
    %453 = vmatpush2.msra.mxu0 0.0
    %454 = vmatprep.subr.mxu0 0.0
    %455 = vmatpush2.msra.mxu0 0.0
    %456 = vmatprep.subr.mxu0 0.0
    %457 = vmatpush2.msra.mxu0 0.0
    %458 = vmatprep.subr.mxu0 0.0
    %459 = vmatpush2.msra.mxu0 0.0
    %460 = vmatprep.subr.mxu0 0.0
    %461 = vmatpush2.msra.mxu0 0.0
    %462 = vmatprep.subr.mxu0 0.0
    %463 = vmatpush2.msra.mxu0 0.0
    %464 = vmatprep.subr.mxu0 0.0
    %465 = vmatpush2.msra.mxu0 0.0
    %466 = vmatprep.subr.mxu0 0.0
    %467 = vmatpush2.msra.mxu0 0.0
    %468 = vmatprep.subr.mxu0 0.0
    %469 = vmatpush2.msra.mxu0 0.0
    %470 = vmatprep.subr.mxu0 0.0
    %471 = vmatpush2.msra.mxu0 0.0
    %472 = vmatprep.mubr.f32.mxu0 0.0
    %473 = vmatmul.mubr.f32.gmra.mxu0 %v406
    %v474 = vpop.f32.mrf.mxu0
    %v475 = vadd.f32 %v323, %v474
    %v476 = vpop.f32.mrf.mxu0
    %477 = vdwg.mxu0
    %478 = vset.pattern.permute.xlu0 2
    %479 = vperm.xlu0 %478, %v310
    %v480 = vpop.permute.xlu0 %479
    %vm481 = vcmp.eq.s32.totalorder %v480, %v312
    %v482 = vsel %vm481, 1, 0
    %v483 = vcvt.s32.f32 %v482
    %v485 = vsel %vm325, %v483, 0
    %487 = vmatprep.subr.mxu0 0.0
    %488 = vmatpush1.msra.mxu0 0.0
    %489 = vmatprep.subr.mxu0 0.0
    %490 = vmatpush1.msra.mxu0 0.0
    %491 = vmatprep.subr.mxu0 0.0
    %492 = vmatpush1.msra.mxu0 0.0
    %493 = vmatprep.subr.mxu0 0.0
    %494 = vmatpush1.msra.mxu0 0.0
    %495 = vmatprep.subr.mxu0 0.0
    %496 = vmatpush1.msra.mxu0 0.0
    %497 = vmatprep.subr.mxu0 0.0
    %498 = vmatpush1.msra.mxu0 0.0
    %499 = vmatprep.subr.mxu0 0.0
    %500 = vmatpush1.msra.mxu0 0.0
    %501 = vmatprep.subr.mxu0 0.0
    %502 = vmatpush1.msra.mxu0 0.0
    %503 = vmatprep.subr.mxu0 0.0
    %504 = vmatpush1.msra.mxu0 0.0
    %505 = vmatprep.subr.mxu0 0.0
    %506 = vmatpush1.msra.mxu0 0.0
    %507 = vmatprep.subr.mxu0 0.0
    %508 = vmatpush1.msra.mxu0 0.0
    %509 = vmatprep.subr.mxu0 0.0
    %510 = vmatpush1.msra.mxu0 0.0
    %511 = vmatprep.subr.mxu0 0.0
    %512 = vmatpush1.msra.mxu0 0.0
    %513 = vmatprep.subr.mxu0 0.0
    %514 = vmatpush1.msra.mxu0 0.0
    %515 = vmatprep.subr.mxu0 0.0
    %516 = vmatpush1.msra.mxu0 0.0
    %517 = vmatprep.subr.mxu0 0.0
    %518 = vmatpush1.msra.mxu0 %v118
    %519 = vmatprep.subr.mxu0 0.0
    %520 = vmatpush2.msra.mxu0 0.0
    %521 = vmatprep.subr.mxu0 0.0
    %522 = vmatpush2.msra.mxu0 0.0
    %523 = vmatprep.subr.mxu0 0.0
    %524 = vmatpush2.msra.mxu0 0.0
    %525 = vmatprep.subr.mxu0 0.0
    %526 = vmatpush2.msra.mxu0 0.0
    %527 = vmatprep.subr.mxu0 0.0
    %528 = vmatpush2.msra.mxu0 0.0
    %529 = vmatprep.subr.mxu0 0.0
    %530 = vmatpush2.msra.mxu0 0.0
    %531 = vmatprep.subr.mxu0 0.0
    %532 = vmatpush2.msra.mxu0 0.0
    %533 = vmatprep.subr.mxu0 0.0
    %534 = vmatpush2.msra.mxu0 0.0
    %535 = vmatprep.subr.mxu0 0.0
    %536 = vmatpush2.msra.mxu0 0.0
    %537 = vmatprep.subr.mxu0 0.0
    %538 = vmatpush2.msra.mxu0 0.0
    %539 = vmatprep.subr.mxu0 0.0
    %540 = vmatpush2.msra.mxu0 0.0
    %541 = vmatprep.subr.mxu0 0.0
    %542 = vmatpush2.msra.mxu0 0.0
    %543 = vmatprep.subr.mxu0 0.0
    %544 = vmatpush2.msra.mxu0 0.0
    %545 = vmatprep.subr.mxu0 0.0
    %546 = vmatpush2.msra.mxu0 0.0
    %547 = vmatprep.subr.mxu0 0.0
    %548 = vmatpush2.msra.mxu0 0.0
    %549 = vmatprep.subr.mxu0 0.0
    %550 = vmatpush2.msra.mxu0 0.0
    %551 = vmatprep.mubr.f32.mxu0 0.0
    %552 = vmatmul.mubr.f32.gmra.mxu0 %v485
    %v553 = vpop.f32.mrf.mxu0
    %v554 = vadd.f32 %v323, %v553
    %v555 = vpop.f32.mrf.mxu0
    %556 = vdwg.mxu0
    %557 = vset.pattern.permute.xlu0 3
    %558 = vperm.xlu0 %557, %v310
    %v559 = vpop.permute.xlu0 %558
    %vm560 = vcmp.eq.s32.totalorder %v559, %v312
    %v561 = vsel %vm560, 1, 0
    %v562 = vcvt.s32.f32 %v561
    %v564 = vsel %vm325, %v562, 0
    %566 = vmatprep.subr.mxu0 0.0
    %567 = vmatpush1.msra.mxu0 0.0
    %568 = vmatprep.subr.mxu0 0.0
    %569 = vmatpush1.msra.mxu0 0.0
    %570 = vmatprep.subr.mxu0 0.0
    %571 = vmatpush1.msra.mxu0 0.0
    %572 = vmatprep.subr.mxu0 0.0
    %573 = vmatpush1.msra.mxu0 0.0
    %574 = vmatprep.subr.mxu0 0.0
    %575 = vmatpush1.msra.mxu0 0.0
    %576 = vmatprep.subr.mxu0 0.0
    %577 = vmatpush1.msra.mxu0 0.0
    %578 = vmatprep.subr.mxu0 0.0
    %579 = vmatpush1.msra.mxu0 0.0
    %580 = vmatprep.subr.mxu0 0.0
    %581 = vmatpush1.msra.mxu0 0.0
    %582 = vmatprep.subr.mxu0 0.0
    %583 = vmatpush1.msra.mxu0 0.0
    %584 = vmatprep.subr.mxu0 0.0
    %585 = vmatpush1.msra.mxu0 0.0
    %586 = vmatprep.subr.mxu0 0.0
    %587 = vmatpush1.msra.mxu0 0.0
    %588 = vmatprep.subr.mxu0 0.0
    %589 = vmatpush1.msra.mxu0 0.0
    %590 = vmatprep.subr.mxu0 0.0
    %591 = vmatpush1.msra.mxu0 0.0
    %592 = vmatprep.subr.mxu0 0.0
    %593 = vmatpush1.msra.mxu0 0.0
    %594 = vmatprep.subr.mxu0 0.0
    %595 = vmatpush1.msra.mxu0 0.0
    %596 = vmatprep.subr.mxu0 0.0
    %597 = vmatpush1.msra.mxu0 %v118
    %598 = vmatprep.subr.mxu0 0.0
    %599 = vmatpush2.msra.mxu0 0.0
    %600 = vmatprep.subr.mxu0 0.0
    %601 = vmatpush2.msra.mxu0 0.0
    %602 = vmatprep.subr.mxu0 0.0
    %603 = vmatpush2.msra.mxu0 0.0
    %604 = vmatprep.subr.mxu0 0.0
    %605 = vmatpush2.msra.mxu0 0.0
    %606 = vmatprep.subr.mxu0 0.0
    %607 = vmatpush2.msra.mxu0 0.0
    %608 = vmatprep.subr.mxu0 0.0
    %609 = vmatpush2.msra.mxu0 0.0
    %610 = vmatprep.subr.mxu0 0.0
    %611 = vmatpush2.msra.mxu0 0.0
    %612 = vmatprep.subr.mxu0 0.0
    %613 = vmatpush2.msra.mxu0 0.0
    %614 = vmatprep.subr.mxu0 0.0
    %615 = vmatpush2.msra.mxu0 0.0
    %616 = vmatprep.subr.mxu0 0.0
    %617 = vmatpush2.msra.mxu0 0.0
    %618 = vmatprep.subr.mxu0 0.0
    %619 = vmatpush2.msra.mxu0 0.0
    %620 = vmatprep.subr.mxu0 0.0
    %621 = vmatpush2.msra.mxu0 0.0
    %622 = vmatprep.subr.mxu0 0.0
    %623 = vmatpush2.msra.mxu0 0.0
    %624 = vmatprep.subr.mxu0 0.0
    %625 = vmatpush2.msra.mxu0 0.0
    %626 = vmatprep.subr.mxu0 0.0
    %627 = vmatpush2.msra.mxu0 0.0
    %628 = vmatprep.subr.mxu0 0.0
    %629 = vmatpush2.msra.mxu0 0.0
    %630 = vmatprep.mubr.f32.mxu0 0.0
    %631 = vmatmul.mubr.f32.gmra.mxu0 %v564
    %v632 = vpop.f32.mrf.mxu0
    %v633 = vadd.f32 %v323, %v632
    %v634 = vpop.f32.mrf.mxu0
    %635 = vdwg.mxu0
    %636 = vset.pattern.permute.xlu0 4
    %637 = vperm.xlu0 %636, %v310
    %v638 = vpop.permute.xlu0 %637
    %vm639 = vcmp.eq.s32.totalorder %v638, %v312
    %v640 = vsel %vm639, 1, 0
    %v641 = vcvt.s32.f32 %v640
    %v643 = vsel %vm325, %v641, 0
    %645 = vmatprep.subr.mxu0 0.0
    %646 = vmatpush1.msra.mxu0 0.0
    %647 = vmatprep.subr.mxu0 0.0
    %648 = vmatpush1.msra.mxu0 0.0
    %649 = vmatprep.subr.mxu0 0.0
    %650 = vmatpush1.msra.mxu0 0.0
    %651 = vmatprep.subr.mxu0 0.0
    %652 = vmatpush1.msra.mxu0 0.0
    %653 = vmatprep.subr.mxu0 0.0
    %654 = vmatpush1.msra.mxu0 0.0
    %655 = vmatprep.subr.mxu0 0.0
    %656 = vmatpush1.msra.mxu0 0.0
    %657 = vmatprep.subr.mxu0 0.0
    %658 = vmatpush1.msra.mxu0 0.0
    %659 = vmatprep.subr.mxu0 0.0
    %660 = vmatpush1.msra.mxu0 0.0
    %661 = vmatprep.subr.mxu0 0.0
    %662 = vmatpush1.msra.mxu0 0.0
    %663 = vmatprep.subr.mxu0 0.0
    %664 = vmatpush1.msra.mxu0 0.0
    %665 = vmatprep.subr.mxu0 0.0
    %666 = vmatpush1.msra.mxu0 0.0
    %667 = vmatprep.subr.mxu0 0.0
    %668 = vmatpush1.msra.mxu0 0.0
    %669 = vmatprep.subr.mxu0 0.0
    %670 = vmatpush1.msra.mxu0 0.0
    %671 = vmatprep.subr.mxu0 0.0
    %672 = vmatpush1.msra.mxu0 0.0
    %673 = vmatprep.subr.mxu0 0.0
    %674 = vmatpush1.msra.mxu0 0.0
    %675 = vmatprep.subr.mxu0 0.0
    %676 = vmatpush1.msra.mxu0 %v118
    %677 = vmatprep.subr.mxu0 0.0
    %678 = vmatpush2.msra.mxu0 0.0
    %679 = vmatprep.subr.mxu0 0.0
    %680 = vmatpush2.msra.mxu0 0.0
    %681 = vmatprep.subr.mxu0 0.0
    %682 = vmatpush2.msra.mxu0 0.0
    %683 = vmatprep.subr.mxu0 0.0
    %684 = vmatpush2.msra.mxu0 0.0
    %685 = vmatprep.subr.mxu0 0.0
    %686 = vmatpush2.msra.mxu0 0.0
    %687 = vmatprep.subr.mxu0 0.0
    %688 = vmatpush2.msra.mxu0 0.0
    %689 = vmatprep.subr.mxu0 0.0
    %690 = vmatpush2.msra.mxu0 0.0
    %691 = vmatprep.subr.mxu0 0.0
    %692 = vmatpush2.msra.mxu0 0.0
    %693 = vmatprep.subr.mxu0 0.0
    %694 = vmatpush2.msra.mxu0 0.0
    %695 = vmatprep.subr.mxu0 0.0
    %696 = vmatpush2.msra.mxu0 0.0
    %697 = vmatprep.subr.mxu0 0.0
    %698 = vmatpush2.msra.mxu0 0.0
    %699 = vmatprep.subr.mxu0 0.0
    %700 = vmatpush2.msra.mxu0 0.0
    %701 = vmatprep.subr.mxu0 0.0
    %702 = vmatpush2.msra.mxu0 0.0
    %703 = vmatprep.subr.mxu0 0.0
    %704 = vmatpush2.msra.mxu0 0.0
    %705 = vmatprep.subr.mxu0 0.0
    %706 = vmatpush2.msra.mxu0 0.0
    %707 = vmatprep.subr.mxu0 0.0
    %708 = vmatpush2.msra.mxu0 0.0
    %709 = vmatprep.mubr.f32.mxu0 0.0
    %710 = vmatmul.mubr.f32.gmra.mxu0 %v643
    %v711 = vpop.f32.mrf.mxu0
    %v712 = vadd.f32 %v323, %v711
    %v713 = vpop.f32.mrf.mxu0
    %714 = vdwg.mxu0
    %715 = vset.pattern.permute.xlu0 5
    %716 = vperm.xlu0 %715, %v310
    %v717 = vpop.permute.xlu0 %716
    %vm718 = vcmp.eq.s32.totalorder %v717, %v312
    %v719 = vsel %vm718, 1, 0
    %v720 = vcvt.s32.f32 %v719
    %v722 = vsel %vm325, %v720, 0
    %724 = vmatprep.subr.mxu0 0.0
    %725 = vmatpush1.msra.mxu0 0.0
    %726 = vmatprep.subr.mxu0 0.0
    %727 = vmatpush1.msra.mxu0 0.0
    %728 = vmatprep.subr.mxu0 0.0
    %729 = vmatpush1.msra.mxu0 0.0
    %730 = vmatprep.subr.mxu0 0.0
    %731 = vmatpush1.msra.mxu0 0.0
    %732 = vmatprep.subr.mxu0 0.0
    %733 = vmatpush1.msra.mxu0 0.0
    %734 = vmatprep.subr.mxu0 0.0
    %735 = vmatpush1.msra.mxu0 0.0
    %736 = vmatprep.subr.mxu0 0.0
    %737 = vmatpush1.msra.mxu0 0.0
    %738 = vmatprep.subr.mxu0 0.0
    %739 = vmatpush1.msra.mxu0 0.0
    %740 = vmatprep.subr.mxu0 0.0
    %741 = vmatpush1.msra.mxu0 0.0
    %742 = vmatprep.subr.mxu0 0.0
    %743 = vmatpush1.msra.mxu0 0.0
    %744 = vmatprep.subr.mxu0 0.0
    %745 = vmatpush1.msra.mxu0 0.0
    %746 = vmatprep.subr.mxu0 0.0
    %747 = vmatpush1.msra.mxu0 0.0
    %748 = vmatprep.subr.mxu0 0.0
    %749 = vmatpush1.msra.mxu0 0.0
    %750 = vmatprep.subr.mxu0 0.0
    %751 = vmatpush1.msra.mxu0 0.0
    %752 = vmatprep.subr.mxu0 0.0
    %753 = vmatpush1.msra.mxu0 0.0
    %754 = vmatprep.subr.mxu0 0.0
    %755 = vmatpush1.msra.mxu0 %v118
    %756 = vmatprep.subr.mxu0 0.0
    %757 = vmatpush2.msra.mxu0 0.0
    %758 = vmatprep.subr.mxu0 0.0
    %759 = vmatpush2.msra.mxu0 0.0
    %760 = vmatprep.subr.mxu0 0.0
    %761 = vmatpush2.msra.mxu0 0.0
    %762 = vmatprep.subr.mxu0 0.0
    %763 = vmatpush2.msra.mxu0 0.0
    %764 = vmatprep.subr.mxu0 0.0
    %765 = vmatpush2.msra.mxu0 0.0
    %766 = vmatprep.subr.mxu0 0.0
    %767 = vmatpush2.msra.mxu0 0.0
    %768 = vmatprep.subr.mxu0 0.0
    %769 = vmatpush2.msra.mxu0 0.0
    %770 = vmatprep.subr.mxu0 0.0
    %771 = vmatpush2.msra.mxu0 0.0
    %772 = vmatprep.subr.mxu0 0.0
    %773 = vmatpush2.msra.mxu0 0.0
    %774 = vmatprep.subr.mxu0 0.0
    %775 = vmatpush2.msra.mxu0 0.0
    %776 = vmatprep.subr.mxu0 0.0
    %777 = vmatpush2.msra.mxu0 0.0
    %778 = vmatprep.subr.mxu0 0.0
    %779 = vmatpush2.msra.mxu0 0.0
    %780 = vmatprep.subr.mxu0 0.0
    %781 = vmatpush2.msra.mxu0 0.0
    %782 = vmatprep.subr.mxu0 0.0
    %783 = vmatpush2.msra.mxu0 0.0
    %784 = vmatprep.subr.mxu0 0.0
    %785 = vmatpush2.msra.mxu0 0.0
    %786 = vmatprep.subr.mxu0 0.0
    %787 = vmatpush2.msra.mxu0 0.0
    %788 = vmatprep.mubr.f32.mxu0 0.0
    %789 = vmatmul.mubr.f32.gmra.mxu0 %v722
    %v790 = vpop.f32.mrf.mxu0
    %v791 = vadd.f32 %v323, %v790
    %v792 = vpop.f32.mrf.mxu0
    %793 = vdwg.mxu0
    %794 = vset.pattern.permute.xlu0 6
    %795 = vperm.xlu0 %794, %v310
    %v796 = vpop.permute.xlu0 %795
    %vm797 = vcmp.eq.s32.totalorder %v796, %v312
    %v798 = vsel %vm797, 1, 0
    %v799 = vcvt.s32.f32 %v798
    %v801 = vsel %vm325, %v799, 0
    %803 = vmatprep.subr.mxu0 0.0
    %804 = vmatpush1.msra.mxu0 0.0
    %805 = vmatprep.subr.mxu0 0.0
    %806 = vmatpush1.msra.mxu0 0.0
    %807 = vmatprep.subr.mxu0 0.0
    %808 = vmatpush1.msra.mxu0 0.0
    %809 = vmatprep.subr.mxu0 0.0
    %810 = vmatpush1.msra.mxu0 0.0
    %811 = vmatprep.subr.mxu0 0.0
    %812 = vmatpush1.msra.mxu0 0.0
    %813 = vmatprep.subr.mxu0 0.0
    %814 = vmatpush1.msra.mxu0 0.0
    %815 = vmatprep.subr.mxu0 0.0
    %816 = vmatpush1.msra.mxu0 0.0
    %817 = vmatprep.subr.mxu0 0.0
    %818 = vmatpush1.msra.mxu0 0.0
    %819 = vmatprep.subr.mxu0 0.0
    %820 = vmatpush1.msra.mxu0 0.0
    %821 = vmatprep.subr.mxu0 0.0
    %822 = vmatpush1.msra.mxu0 0.0
    %823 = vmatprep.subr.mxu0 0.0
    %824 = vmatpush1.msra.mxu0 0.0
    %825 = vmatprep.subr.mxu0 0.0
    %826 = vmatpush1.msra.mxu0 0.0
    %827 = vmatprep.subr.mxu0 0.0
    %828 = vmatpush1.msra.mxu0 0.0
    %829 = vmatprep.subr.mxu0 0.0
    %830 = vmatpush1.msra.mxu0 0.0
    %831 = vmatprep.subr.mxu0 0.0
    %832 = vmatpush1.msra.mxu0 0.0
    %833 = vmatprep.subr.mxu0 0.0
    %834 = vmatpush1.msra.mxu0 %v118
    %835 = vmatprep.subr.mxu0 0.0
    %836 = vmatpush2.msra.mxu0 0.0
    %837 = vmatprep.subr.mxu0 0.0
    %838 = vmatpush2.msra.mxu0 0.0
    %839 = vmatprep.subr.mxu0 0.0
    %840 = vmatpush2.msra.mxu0 0.0
    %841 = vmatprep.subr.mxu0 0.0
    %842 = vmatpush2.msra.mxu0 0.0
    %843 = vmatprep.subr.mxu0 0.0
    %844 = vmatpush2.msra.mxu0 0.0
    %845 = vmatprep.subr.mxu0 0.0
    %846 = vmatpush2.msra.mxu0 0.0
    %847 = vmatprep.subr.mxu0 0.0
    %848 = vmatpush2.msra.mxu0 0.0
    %849 = vmatprep.subr.mxu0 0.0
    %850 = vmatpush2.msra.mxu0 0.0
    %851 = vmatprep.subr.mxu0 0.0
    %852 = vmatpush2.msra.mxu0 0.0
    %853 = vmatprep.subr.mxu0 0.0
    %854 = vmatpush2.msra.mxu0 0.0
    %855 = vmatprep.subr.mxu0 0.0
    %856 = vmatpush2.msra.mxu0 0.0
    %857 = vmatprep.subr.mxu0 0.0
    %858 = vmatpush2.msra.mxu0 0.0
    %859 = vmatprep.subr.mxu0 0.0
    %860 = vmatpush2.msra.mxu0 0.0
    %861 = vmatprep.subr.mxu0 0.0
    %862 = vmatpush2.msra.mxu0 0.0
    %863 = vmatprep.subr.mxu0 0.0
    %864 = vmatpush2.msra.mxu0 0.0
    %865 = vmatprep.subr.mxu0 0.0
    %866 = vmatpush2.msra.mxu0 0.0
    %867 = vmatprep.mubr.f32.mxu0 0.0
    %868 = vmatmul.mubr.f32.gmra.mxu0 %v801
    %v869 = vpop.f32.mrf.mxu0
    %v870 = vadd.f32 %v323, %v869
    %v871 = vpop.f32.mrf.mxu0
    %872 = vdwg.mxu0
    %873 = vset.pattern.permute.xlu0 7
    %874 = vperm.xlu0 %873, %v310
    %v875 = vpop.permute.xlu0 %874
    %vm876 = vcmp.eq.s32.totalorder %v875, %v312
    %v877 = vsel %vm876, 1, 0
    %v878 = vcvt.s32.f32 %v877
    %v880 = vsel %vm325, %v878, 0
    %882 = vmatprep.subr.mxu0 0.0
    %883 = vmatpush1.msra.mxu0 0.0
    %884 = vmatprep.subr.mxu0 0.0
    %885 = vmatpush1.msra.mxu0 0.0
    %886 = vmatprep.subr.mxu0 0.0
    %887 = vmatpush1.msra.mxu0 0.0
    %888 = vmatprep.subr.mxu0 0.0
    %889 = vmatpush1.msra.mxu0 0.0
    %890 = vmatprep.subr.mxu0 0.0
    %891 = vmatpush1.msra.mxu0 0.0
    %892 = vmatprep.subr.mxu0 0.0
    %893 = vmatpush1.msra.mxu0 0.0
    %894 = vmatprep.subr.mxu0 0.0
    %895 = vmatpush1.msra.mxu0 0.0
    %896 = vmatprep.subr.mxu0 0.0
    %897 = vmatpush1.msra.mxu0 0.0
    %898 = vmatprep.subr.mxu0 0.0
    %899 = vmatpush1.msra.mxu0 0.0
    %900 = vmatprep.subr.mxu0 0.0
    %901 = vmatpush1.msra.mxu0 0.0
    %902 = vmatprep.subr.mxu0 0.0
    %903 = vmatpush1.msra.mxu0 0.0
    %904 = vmatprep.subr.mxu0 0.0
    %905 = vmatpush1.msra.mxu0 0.0
    %906 = vmatprep.subr.mxu0 0.0
    %907 = vmatpush1.msra.mxu0 0.0
    %908 = vmatprep.subr.mxu0 0.0
    %909 = vmatpush1.msra.mxu0 0.0
    %910 = vmatprep.subr.mxu0 0.0
    %911 = vmatpush1.msra.mxu0 0.0
    %912 = vmatprep.subr.mxu0 0.0
    %913 = vmatpush1.msra.mxu0 %v118
    %914 = vmatprep.subr.mxu0 0.0
    %915 = vmatpush2.msra.mxu0 0.0
    %916 = vmatprep.subr.mxu0 0.0
    %917 = vmatpush2.msra.mxu0 0.0
    %918 = vmatprep.subr.mxu0 0.0
    %919 = vmatpush2.msra.mxu0 0.0
    %920 = vmatprep.subr.mxu0 0.0
    %921 = vmatpush2.msra.mxu0 0.0
    %922 = vmatprep.subr.mxu0 0.0
    %923 = vmatpush2.msra.mxu0 0.0
    %924 = vmatprep.subr.mxu0 0.0
    %925 = vmatpush2.msra.mxu0 0.0
    %926 = vmatprep.subr.mxu0 0.0
    %927 = vmatpush2.msra.mxu0 0.0
    %928 = vmatprep.subr.mxu0 0.0
    %929 = vmatpush2.msra.mxu0 0.0
    %930 = vmatprep.subr.mxu0 0.0
    %931 = vmatpush2.msra.mxu0 0.0
    %932 = vmatprep.subr.mxu0 0.0
    %933 = vmatpush2.msra.mxu0 0.0
    %934 = vmatprep.subr.mxu0 0.0
    %935 = vmatpush2.msra.mxu0 0.0
    %936 = vmatprep.subr.mxu0 0.0
    %937 = vmatpush2.msra.mxu0 0.0
    %938 = vmatprep.subr.mxu0 0.0
    %939 = vmatpush2.msra.mxu0 0.0
    %940 = vmatprep.subr.mxu0 0.0
    %941 = vmatpush2.msra.mxu0 0.0
    %942 = vmatprep.subr.mxu0 0.0
    %943 = vmatpush2.msra.mxu0 0.0
    %944 = vmatprep.subr.mxu0 0.0
    %945 = vmatpush2.msra.mxu0 0.0
    %946 = vmatprep.mubr.f32.mxu0 0.0
    %947 = vmatmul.mubr.f32.gmra.mxu0 %v880
    %v948 = vpop.f32.mrf.mxu0
    %v949 = vadd.f32 %v323, %v948
    %v950 = vpop.f32.mrf.mxu0
    %951 = vdwg.mxu0
    %v953 = vsel %vm236, %v307, 0
    %955 = vmatprep.subr.mxu0 0.0
    %956 = vmatpush1.msra.mxu0 0.0
    %957 = vmatprep.subr.mxu0 0.0
    %958 = vmatpush1.msra.mxu0 0.0
    %959 = vmatprep.subr.mxu0 0.0
    %960 = vmatpush1.msra.mxu0 0.0
    %961 = vmatprep.subr.mxu0 0.0
    %962 = vmatpush1.msra.mxu0 0.0
    %963 = vmatprep.subr.mxu0 0.0
    %964 = vmatpush1.msra.mxu0 0.0
    %965 = vmatprep.subr.mxu0 0.0
    %966 = vmatpush1.msra.mxu0 0.0
    %967 = vmatprep.subr.mxu0 0.0
    %968 = vmatpush1.msra.mxu0 0.0
    %969 = vmatprep.subr.mxu0 0.0
    %970 = vmatpush1.msra.mxu0 0.0
    %971 = vmatprep.subr.mxu0 0.0
    %972 = vmatpush1.msra.mxu0 0.0
    %973 = vmatprep.subr.mxu0 0.0
    %974 = vmatpush1.msra.mxu0 0.0
    %975 = vmatprep.subr.mxu0 0.0
    %976 = vmatpush1.msra.mxu0 0.0
    %977 = vmatprep.subr.mxu0 0.0
    %978 = vmatpush1.msra.mxu0 0.0
    %979 = vmatprep.subr.mxu0 0.0
    %980 = vmatpush1.msra.mxu0 %v122
    %981 = vmatprep.subr.mxu0 0.0
    %982 = vmatpush1.msra.mxu0 %v121
    %983 = vmatprep.subr.mxu0 0.0
    %984 = vmatpush1.msra.mxu0 %v120
    %985 = vmatprep.subr.mxu0 0.0
    %986 = vmatpush1.msra.mxu0 %v119
    %987 = vmatprep.subr.mxu0 0.0
    %988 = vmatpush2.msra.mxu0 0.0
    %989 = vmatprep.subr.mxu0 0.0
    %990 = vmatpush2.msra.mxu0 0.0
    %991 = vmatprep.subr.mxu0 0.0
    %992 = vmatpush2.msra.mxu0 0.0
    %993 = vmatprep.subr.mxu0 0.0
    %994 = vmatpush2.msra.mxu0 0.0
    %995 = vmatprep.subr.mxu0 0.0
    %996 = vmatpush2.msra.mxu0 0.0
    %997 = vmatprep.subr.mxu0 0.0
    %998 = vmatpush2.msra.mxu0 0.0
    %999 = vmatprep.subr.mxu0 0.0
    %1000 = vmatpush2.msra.mxu0 0.0
    %1001 = vmatprep.subr.mxu0 0.0
    %1002 = vmatpush2.msra.mxu0 0.0
    %1003 = vmatprep.subr.mxu0 0.0
    %1004 = vmatpush2.msra.mxu0 0.0
    %1005 = vmatprep.subr.mxu0 0.0
    %1006 = vmatpush2.msra.mxu0 0.0
    %1007 = vmatprep.subr.mxu0 0.0
    %1008 = vmatpush2.msra.mxu0 0.0
    %1009 = vmatprep.subr.mxu0 0.0
    %1010 = vmatpush2.msra.mxu0 0.0
    %1011 = vmatprep.subr.mxu0 0.0
    %1012 = vmatpush2.msra.mxu0 0.0
    %1013 = vmatprep.subr.mxu0 0.0
    %1014 = vmatpush2.msra.mxu0 0.0
    %1015 = vmatprep.subr.mxu0 0.0
    %1016 = vmatpush2.msra.mxu0 0.0
    %1017 = vmatprep.subr.mxu0 0.0
    %1018 = vmatpush2.msra.mxu0 0.0
    %1019 = vmatprep.mubr.f32.mxu0 0.0
    %1020 = vmatmul.mubr.f32.gmra.mxu0 %v953
    %v1021 = vpop.f32.mrf.mxu0
    %v1022 = vadd.f32 0.0, %v1021
    %v1023 = vpop.f32.mrf.mxu0
    %1024 = vdwg.mxu0
    %v1025 = vadd.f32 %v396, %v1022
    %v1026 = vxor.u32 %v1025, 2147483648
    %v1027 = vmul.f32 %v1026, 1.442695
    %v1028 = vpow.pop %v1027
    %v1029 = vadd.f32 %v1028, 1.0
    %v1030 = vrcp.pop %v1029
    %v1031 = vmul.f32 1.0, %v1030
    %v1032 = vtanh.pop %v1025
    %1033 = vrot.lane.b32.xlu0 %v307, 32
    %v1034 = vpop.permute.xlu0 %1033
    %v1036 = vmul.f32 %v1031, %v1034
    %1038 = vrot.lane.b32.xlu0 %v1032, 64
    %v1039 = vpop.permute.xlu0 %1038
    %v1041 = vmul.f32 %v1031, %v1039
    %1043 = vrot.lane.b32.xlu0 %v1041, 32
    %v1044 = vpop.permute.xlu0 %1043
    %v1046 = vadd.f32 %v1036, %v1044
    %v1047 = vtanh.pop %v1046
    %1049 = vrot.lane.b32.xlu0 %v1047, 64
    %v1050 = vpop.permute.xlu0 %1049
    %v1052 = vmul.f32 %v1031, %v1050
    %1053 = vmatprep.subr.mxu0 0.0
    %1054 = vmatpush1.msra.mxu0 0.0
    %1055 = vmatprep.subr.mxu0 0.0
    %1056 = vmatpush1.msra.mxu0 0.0
    %1057 = vmatprep.subr.mxu0 0.0
    %1058 = vmatpush1.msra.mxu0 0.0
    %1059 = vmatprep.subr.mxu0 0.0
    %1060 = vmatpush1.msra.mxu0 0.0
    %1061 = vmatprep.subr.mxu0 0.0
    %1062 = vmatpush1.msra.mxu0 0.0
    %1063 = vmatprep.subr.mxu0 0.0
    %1064 = vmatpush1.msra.mxu0 0.0
    %1065 = vmatprep.subr.mxu0 0.0
    %1066 = vmatpush1.msra.mxu0 0.0
    %1067 = vmatprep.subr.mxu0 0.0
    %1068 = vmatpush1.msra.mxu0 0.0
    %1069 = vmatprep.subr.mxu0 0.0
    %1070 = vmatpush1.msra.mxu0 0.0
    %1071 = vmatprep.subr.mxu0 0.0
    %1072 = vmatpush1.msra.mxu0 0.0
    %1073 = vmatprep.subr.mxu0 0.0
    %1074 = vmatpush1.msra.mxu0 0.0
    %1075 = vmatprep.subr.mxu0 0.0
    %1076 = vmatpush1.msra.mxu0 0.0
    %1077 = vmatprep.subr.mxu0 0.0
    %1078 = vmatpush1.msra.mxu0 %v131
    %1079 = vmatprep.subr.mxu0 0.0
    %1080 = vmatpush1.msra.mxu0 %v130
    %1081 = vmatprep.subr.mxu0 0.0
    %1082 = vmatpush1.msra.mxu0 %v129
    %1083 = vmatprep.subr.mxu0 0.0
    %1084 = vmatpush1.msra.mxu0 %v128
    %1085 = vmatprep.subr.mxu0 0.0
    %1086 = vmatpush2.msra.mxu0 0.0
    %1087 = vmatprep.subr.mxu0 0.0
    %1088 = vmatpush2.msra.mxu0 0.0
    %1089 = vmatprep.subr.mxu0 0.0
    %1090 = vmatpush2.msra.mxu0 0.0
    %1091 = vmatprep.subr.mxu0 0.0
    %1092 = vmatpush2.msra.mxu0 0.0
    %1093 = vmatprep.subr.mxu0 0.0
    %1094 = vmatpush2.msra.mxu0 0.0
    %1095 = vmatprep.subr.mxu0 0.0
    %1096 = vmatpush2.msra.mxu0 0.0
    %1097 = vmatprep.subr.mxu0 0.0
    %1098 = vmatpush2.msra.mxu0 0.0
    %1099 = vmatprep.subr.mxu0 0.0
    %1100 = vmatpush2.msra.mxu0 0.0
    %1101 = vmatprep.subr.mxu0 0.0
    %1102 = vmatpush2.msra.mxu0 0.0
    %1103 = vmatprep.subr.mxu0 0.0
    %1104 = vmatpush2.msra.mxu0 0.0
    %1105 = vmatprep.subr.mxu0 0.0
    %1106 = vmatpush2.msra.mxu0 0.0
    %1107 = vmatprep.subr.mxu0 0.0
    %1108 = vmatpush2.msra.mxu0 0.0
    %1109 = vmatprep.subr.mxu0 0.0
    %1110 = vmatpush2.msra.mxu0 0.0
    %1111 = vmatprep.subr.mxu0 0.0
    %1112 = vmatpush2.msra.mxu0 0.0
    %1113 = vmatprep.subr.mxu0 0.0
    %1114 = vmatpush2.msra.mxu0 0.0
    %1115 = vmatprep.subr.mxu0 0.0
    %1116 = vmatpush2.msra.mxu0 0.0
    %1117 = vmatprep.mubr.f32.mxu0 0.0
    %1118 = vmatmul.mubr.f32.gmra.mxu0 %v953
    %v1119 = vpop.f32.mrf.mxu0
    %v1120 = vadd.f32 0.0, %v1119
    %v1121 = vpop.f32.mrf.mxu0
    %1122 = vdwg.mxu0
    %1124 = vrot.lane.b32.xlu0 %v1052, 32
    %v1125 = vpop.permute.xlu0 %1124
    %v1126 = vsel %vm236, %v1125, 0
    %1128 = vmatprep.subr.mxu0 0.0
    %1129 = vmatpush1.msra.mxu0 0.0
    %1130 = vmatprep.subr.mxu0 0.0
    %1131 = vmatpush1.msra.mxu0 0.0
    %1132 = vmatprep.subr.mxu0 0.0
    %1133 = vmatpush1.msra.mxu0 0.0
    %1134 = vmatprep.subr.mxu0 0.0
    %1135 = vmatpush1.msra.mxu0 0.0
    %1136 = vmatprep.subr.mxu0 0.0
    %1137 = vmatpush1.msra.mxu0 0.0
    %1138 = vmatprep.subr.mxu0 0.0
    %1139 = vmatpush1.msra.mxu0 0.0
    %1140 = vmatprep.subr.mxu0 0.0
    %1141 = vmatpush1.msra.mxu0 0.0
    %1142 = vmatprep.subr.mxu0 0.0
    %1143 = vmatpush1.msra.mxu0 0.0
    %1144 = vmatprep.subr.mxu0 0.0
    %1145 = vmatpush1.msra.mxu0 0.0
    %1146 = vmatprep.subr.mxu0 0.0
    %1147 = vmatpush1.msra.mxu0 0.0
    %1148 = vmatprep.subr.mxu0 0.0
    %1149 = vmatpush1.msra.mxu0 0.0
    %1150 = vmatprep.subr.mxu0 0.0
    %1151 = vmatpush1.msra.mxu0 0.0
    %1152 = vmatprep.subr.mxu0 0.0
    %1153 = vmatpush1.msra.mxu0 %v127
    %1154 = vmatprep.subr.mxu0 0.0
    %1155 = vmatpush1.msra.mxu0 %v126
    %1156 = vmatprep.subr.mxu0 0.0
    %1157 = vmatpush1.msra.mxu0 %v125
    %1158 = vmatprep.subr.mxu0 0.0
    %1159 = vmatpush1.msra.mxu0 %v124
    %1160 = vmatprep.subr.mxu0 0.0
    %1161 = vmatpush2.msra.mxu0 0.0
    %1162 = vmatprep.subr.mxu0 0.0
    %1163 = vmatpush2.msra.mxu0 0.0
    %1164 = vmatprep.subr.mxu0 0.0
    %1165 = vmatpush2.msra.mxu0 0.0
    %1166 = vmatprep.subr.mxu0 0.0
    %1167 = vmatpush2.msra.mxu0 0.0
    %1168 = vmatprep.subr.mxu0 0.0
    %1169 = vmatpush2.msra.mxu0 0.0
    %1170 = vmatprep.subr.mxu0 0.0
    %1171 = vmatpush2.msra.mxu0 0.0
    %1172 = vmatprep.subr.mxu0 0.0
    %1173 = vmatpush2.msra.mxu0 0.0
    %1174 = vmatprep.subr.mxu0 0.0
    %1175 = vmatpush2.msra.mxu0 0.0
    %1176 = vmatprep.subr.mxu0 0.0
    %1177 = vmatpush2.msra.mxu0 0.0
    %1178 = vmatprep.subr.mxu0 0.0
    %1179 = vmatpush2.msra.mxu0 0.0
    %1180 = vmatprep.subr.mxu0 0.0
    %1181 = vmatpush2.msra.mxu0 0.0
    %1182 = vmatprep.subr.mxu0 0.0
    %1183 = vmatpush2.msra.mxu0 0.0
    %1184 = vmatprep.subr.mxu0 0.0
    %1185 = vmatpush2.msra.mxu0 0.0
    %1186 = vmatprep.subr.mxu0 0.0
    %1187 = vmatpush2.msra.mxu0 0.0
    %1188 = vmatprep.subr.mxu0 0.0
    %1189 = vmatpush2.msra.mxu0 0.0
    %1190 = vmatprep.subr.mxu0 0.0
    %1191 = vmatpush2.msra.mxu0 0.0
    %1192 = vmatprep.mubr.f32.mxu0 0.0
    %1193 = vmatmul.mubr.f32.gmra.mxu0 %v1126
    %v1194 = vpop.f32.mrf.mxu0
    %v1195 = vadd.f32 %v1120, %v1194
    %v1196 = vpop.f32.mrf.mxu0
    %1197 = vdwg.mxu0
    %v1199 = vlaneseq
    %v1200 = vshrl.u32 %v1199, 7
    %v1201 = vsub.s32 0, %v1200
    %v1202 = vrot.slane %v132, %v1201
    %v1204 = vadd.f32 %v1195, %v1202
    %v1205 = vxor.u32 %v1204, 2147483648
    %v1206 = vmul.f32 %v1205, 1.442695
    %v1207 = vpow.pop %v1206
    %v1208 = vadd.f32 %v1207, 1.0
    %v1209 = vrcp.pop %v1208
    %v1210 = vmul.f32 1.0, %v1209
    %v1211 = vtanh.pop %v1204
    %v1212 = vmul.f32 %v1210, %v1034
    %1214 = vrot.lane.b32.xlu0 %v1211, 64
    %v1215 = vpop.permute.xlu0 %1214
    %v1217 = vmul.f32 %v1210, %v1215
    %1219 = vrot.lane.b32.xlu0 %v1217, 32
    %v1220 = vpop.permute.xlu0 %1219
    %v1222 = vadd.f32 %v1212, %v1220
    %v1223 = vtanh.pop %v1222
    %1225 = vrot.lane.b32.xlu0 %v1223, 64
    %v1226 = vpop.permute.xlu0 %1225
    %v1228 = vmul.f32 %v1210, %v1226
    %vm1229 = vcmp.eq.s32.totalorder %v138, 1
    %v1230 = vsel %vm1229, 1, 0
    %1231 = vset.pattern.permute.xlu0 0
    %1232 = vperm.xlu0 %1231, %v1230
    %v1233 = vpop.permute.xlu0 %1232
    %vm1234 = vcmp.eq.s32.totalorder %v1233, 1
    %v1235 = vsel %vm1234, %v1228, 0.0
    %1236 = vmatprep.subr.mxu0 0.0
    %1237 = vmatpush1.msra.mxu0 0.0
    %1238 = vmatprep.subr.mxu0 0.0
    %1239 = vmatpush1.msra.mxu0 0.0
    %1240 = vmatprep.subr.mxu0 0.0
    %1241 = vmatpush1.msra.mxu0 0.0
    %1242 = vmatprep.subr.mxu0 0.0
    %1243 = vmatpush1.msra.mxu0 0.0
    %1244 = vmatprep.subr.mxu0 0.0
    %1245 = vmatpush1.msra.mxu0 0.0
    %1246 = vmatprep.subr.mxu0 0.0
    %1247 = vmatpush1.msra.mxu0 0.0
    %1248 = vmatprep.subr.mxu0 0.0
    %1249 = vmatpush1.msra.mxu0 0.0
    %1250 = vmatprep.subr.mxu0 0.0
    %1251 = vmatpush1.msra.mxu0 0.0
    %1252 = vmatprep.subr.mxu0 0.0
    %1253 = vmatpush1.msra.mxu0 0.0
    %1254 = vmatprep.subr.mxu0 0.0
    %1255 = vmatpush1.msra.mxu0 0.0
    %1256 = vmatprep.subr.mxu0 0.0
    %1257 = vmatpush1.msra.mxu0 0.0
    %1258 = vmatprep.subr.mxu0 0.0
    %1259 = vmatpush1.msra.mxu0 0.0
    %1260 = vmatprep.subr.mxu0 0.0
    %1261 = vmatpush1.msra.mxu0 %v122
    %1262 = vmatprep.subr.mxu0 0.0
    %1263 = vmatpush1.msra.mxu0 %v121
    %1264 = vmatprep.subr.mxu0 0.0
    %1265 = vmatpush1.msra.mxu0 %v120
    %1266 = vmatprep.subr.mxu0 0.0
    %1267 = vmatpush1.msra.mxu0 %v119
    %1268 = vmatprep.subr.mxu0 0.0
    %1269 = vmatpush2.msra.mxu0 0.0
    %1270 = vmatprep.subr.mxu0 0.0
    %1271 = vmatpush2.msra.mxu0 0.0
    %1272 = vmatprep.subr.mxu0 0.0
    %1273 = vmatpush2.msra.mxu0 0.0
    %1274 = vmatprep.subr.mxu0 0.0
    %1275 = vmatpush2.msra.mxu0 0.0
    %1276 = vmatprep.subr.mxu0 0.0
    %1277 = vmatpush2.msra.mxu0 0.0
    %1278 = vmatprep.subr.mxu0 0.0
    %1279 = vmatpush2.msra.mxu0 0.0
    %1280 = vmatprep.subr.mxu0 0.0
    %1281 = vmatpush2.msra.mxu0 0.0
    %1282 = vmatprep.subr.mxu0 0.0
    %1283 = vmatpush2.msra.mxu0 0.0
    %1284 = vmatprep.subr.mxu0 0.0
    %1285 = vmatpush2.msra.mxu0 0.0
    %1286 = vmatprep.subr.mxu0 0.0
    %1287 = vmatpush2.msra.mxu0 0.0
    %1288 = vmatprep.subr.mxu0 0.0
    %1289 = vmatpush2.msra.mxu0 0.0
    %1290 = vmatprep.subr.mxu0 0.0
    %1291 = vmatpush2.msra.mxu0 0.0
    %1292 = vmatprep.subr.mxu0 0.0
    %1293 = vmatpush2.msra.mxu0 0.0
    %1294 = vmatprep.subr.mxu0 0.0
    %1295 = vmatpush2.msra.mxu0 0.0
    %1296 = vmatprep.subr.mxu0 0.0
    %1297 = vmatpush2.msra.mxu0 0.0
    %1298 = vmatprep.subr.mxu0 0.0
    %1299 = vmatpush2.msra.mxu0 0.0
    %1300 = vmatprep.mubr.f32.mxu0 0.0
    %1301 = vmatmul.mubr.f32.gmra.mxu0 %v1126
    %v1302 = vpop.f32.mrf.mxu0
    %v1303 = vadd.f32 0.0, %v1302
    %v1304 = vpop.f32.mrf.mxu0
    %1305 = vdwg.mxu0
    %v1306 = vadd.f32 %v475, %v1303
    %v1307 = vxor.u32 %v1306, 2147483648
    %v1308 = vmul.f32 %v1307, 1.442695
    %v1309 = vpow.pop %v1308
    %v1310 = vadd.f32 %v1309, 1.0
    %v1311 = vrcp.pop %v1310
    %v1312 = vmul.f32 1.0, %v1311
    %v1313 = vtanh.pop %v1306
    %v1314 = vmul.f32 %v1312, %v1046
    %1316 = vrot.lane.b32.xlu0 %v1313, 64
    %v1317 = vpop.permute.xlu0 %1316
    %v1319 = vmul.f32 %v1312, %v1317
    %1321 = vrot.lane.b32.xlu0 %v1319, 32
    %v1322 = vpop.permute.xlu0 %1321
    %v1324 = vadd.f32 %v1314, %v1322
    %v1325 = vtanh.pop %v1324
    %1327 = vrot.lane.b32.xlu0 %v1325, 64
    %v1328 = vpop.permute.xlu0 %1327
    %v1330 = vmul.f32 %v1312, %v1328
    %1332 = vrot.lane.b32.xlu0 %v1228, 32
    %v1333 = vpop.permute.xlu0 %1332
    %v1334 = vsel %vm236, %v1333, 0
    %1336 = vmatprep.subr.mxu0 0.0
    %1337 = vmatpush1.msra.mxu0 0.0
    %1338 = vmatprep.subr.mxu0 0.0
    %1339 = vmatpush1.msra.mxu0 0.0
    %1340 = vmatprep.subr.mxu0 0.0
    %1341 = vmatpush1.msra.mxu0 0.0
    %1342 = vmatprep.subr.mxu0 0.0
    %1343 = vmatpush1.msra.mxu0 0.0
    %1344 = vmatprep.subr.mxu0 0.0
    %1345 = vmatpush1.msra.mxu0 0.0
    %1346 = vmatprep.subr.mxu0 0.0
    %1347 = vmatpush1.msra.mxu0 0.0
    %1348 = vmatprep.subr.mxu0 0.0
    %1349 = vmatpush1.msra.mxu0 0.0
    %1350 = vmatprep.subr.mxu0 0.0
    %1351 = vmatpush1.msra.mxu0 0.0
    %1352 = vmatprep.subr.mxu0 0.0
    %1353 = vmatpush1.msra.mxu0 0.0
    %1354 = vmatprep.subr.mxu0 0.0
    %1355 = vmatpush1.msra.mxu0 0.0
    %1356 = vmatprep.subr.mxu0 0.0
    %1357 = vmatpush1.msra.mxu0 0.0
    %1358 = vmatprep.subr.mxu0 0.0
    %1359 = vmatpush1.msra.mxu0 0.0
    %1360 = vmatprep.subr.mxu0 0.0
    %1361 = vmatpush1.msra.mxu0 %v131
    %1362 = vmatprep.subr.mxu0 0.0
    %1363 = vmatpush1.msra.mxu0 %v130
    %1364 = vmatprep.subr.mxu0 0.0
    %1365 = vmatpush1.msra.mxu0 %v129
    %1366 = vmatprep.subr.mxu0 0.0
    %1367 = vmatpush1.msra.mxu0 %v128
    %1368 = vmatprep.subr.mxu0 0.0
    %1369 = vmatpush2.msra.mxu0 0.0
    %1370 = vmatprep.subr.mxu0 0.0
    %1371 = vmatpush2.msra.mxu0 0.0
    %1372 = vmatprep.subr.mxu0 0.0
    %1373 = vmatpush2.msra.mxu0 0.0
    %1374 = vmatprep.subr.mxu0 0.0
    %1375 = vmatpush2.msra.mxu0 0.0
    %1376 = vmatprep.subr.mxu0 0.0
    %1377 = vmatpush2.msra.mxu0 0.0
    %1378 = vmatprep.subr.mxu0 0.0
    %1379 = vmatpush2.msra.mxu0 0.0
    %1380 = vmatprep.subr.mxu0 0.0
    %1381 = vmatpush2.msra.mxu0 0.0
    %1382 = vmatprep.subr.mxu0 0.0
    %1383 = vmatpush2.msra.mxu0 0.0
    %1384 = vmatprep.subr.mxu0 0.0
    %1385 = vmatpush2.msra.mxu0 0.0
    %1386 = vmatprep.subr.mxu0 0.0
    %1387 = vmatpush2.msra.mxu0 0.0
    %1388 = vmatprep.subr.mxu0 0.0
    %1389 = vmatpush2.msra.mxu0 0.0
    %1390 = vmatprep.subr.mxu0 0.0
    %1391 = vmatpush2.msra.mxu0 0.0
    %1392 = vmatprep.subr.mxu0 0.0
    %1393 = vmatpush2.msra.mxu0 0.0
    %1394 = vmatprep.subr.mxu0 0.0
    %1395 = vmatpush2.msra.mxu0 0.0
    %1396 = vmatprep.subr.mxu0 0.0
    %1397 = vmatpush2.msra.mxu0 0.0
    %1398 = vmatprep.subr.mxu0 0.0
    %1399 = vmatpush2.msra.mxu0 0.0
    %1400 = vmatprep.mubr.f32.mxu0 0.0
    %1401 = vmatmul.mubr.f32.gmra.mxu0 %v1334
    %v1402 = vpop.f32.mrf.mxu0
    %v1403 = vadd.f32 0.0, %v1402
    %v1404 = vpop.f32.mrf.mxu0
    %1405 = vdwg.mxu0
    %1407 = vrot.lane.b32.xlu0 %v1330, 32
    %v1408 = vpop.permute.xlu0 %1407
    %v1409 = vsel %vm236, %v1408, 0
    %1411 = vmatprep.subr.mxu0 0.0
    %1412 = vmatpush1.msra.mxu0 0.0
    %1413 = vmatprep.subr.mxu0 0.0
    %1414 = vmatpush1.msra.mxu0 0.0
    %1415 = vmatprep.subr.mxu0 0.0
    %1416 = vmatpush1.msra.mxu0 0.0
    %1417 = vmatprep.subr.mxu0 0.0
    %1418 = vmatpush1.msra.mxu0 0.0
    %1419 = vmatprep.subr.mxu0 0.0
    %1420 = vmatpush1.msra.mxu0 0.0
    %1421 = vmatprep.subr.mxu0 0.0
    %1422 = vmatpush1.msra.mxu0 0.0
    %1423 = vmatprep.subr.mxu0 0.0
    %1424 = vmatpush1.msra.mxu0 0.0
    %1425 = vmatprep.subr.mxu0 0.0
    %1426 = vmatpush1.msra.mxu0 0.0
    %1427 = vmatprep.subr.mxu0 0.0
    %1428 = vmatpush1.msra.mxu0 0.0
    %1429 = vmatprep.subr.mxu0 0.0
    %1430 = vmatpush1.msra.mxu0 0.0
    %1431 = vmatprep.subr.mxu0 0.0
    %1432 = vmatpush1.msra.mxu0 0.0
    %1433 = vmatprep.subr.mxu0 0.0
    %1434 = vmatpush1.msra.mxu0 0.0
    %1435 = vmatprep.subr.mxu0 0.0
    %1436 = vmatpush1.msra.mxu0 %v127
    %1437 = vmatprep.subr.mxu0 0.0
    %1438 = vmatpush1.msra.mxu0 %v126
    %1439 = vmatprep.subr.mxu0 0.0
    %1440 = vmatpush1.msra.mxu0 %v125
    %1441 = vmatprep.subr.mxu0 0.0
    %1442 = vmatpush1.msra.mxu0 %v124
    %1443 = vmatprep.subr.mxu0 0.0
    %1444 = vmatpush2.msra.mxu0 0.0
    %1445 = vmatprep.subr.mxu0 0.0
    %1446 = vmatpush2.msra.mxu0 0.0
    %1447 = vmatprep.subr.mxu0 0.0
    %1448 = vmatpush2.msra.mxu0 0.0
    %1449 = vmatprep.subr.mxu0 0.0
    %1450 = vmatpush2.msra.mxu0 0.0
    %1451 = vmatprep.subr.mxu0 0.0
    %1452 = vmatpush2.msra.mxu0 0.0
    %1453 = vmatprep.subr.mxu0 0.0
    %1454 = vmatpush2.msra.mxu0 0.0
    %1455 = vmatprep.subr.mxu0 0.0
    %1456 = vmatpush2.msra.mxu0 0.0
    %1457 = vmatprep.subr.mxu0 0.0
    %1458 = vmatpush2.msra.mxu0 0.0
    %1459 = vmatprep.subr.mxu0 0.0
    %1460 = vmatpush2.msra.mxu0 0.0
    %1461 = vmatprep.subr.mxu0 0.0
    %1462 = vmatpush2.msra.mxu0 0.0
    %1463 = vmatprep.subr.mxu0 0.0
    %1464 = vmatpush2.msra.mxu0 0.0
    %1465 = vmatprep.subr.mxu0 0.0
    %1466 = vmatpush2.msra.mxu0 0.0
    %1467 = vmatprep.subr.mxu0 0.0
    %1468 = vmatpush2.msra.mxu0 0.0
    %1469 = vmatprep.subr.mxu0 0.0
    %1470 = vmatpush2.msra.mxu0 0.0
    %1471 = vmatprep.subr.mxu0 0.0
    %1472 = vmatpush2.msra.mxu0 0.0
    %1473 = vmatprep.subr.mxu0 0.0
    %1474 = vmatpush2.msra.mxu0 0.0
    %1475 = vmatprep.mubr.f32.mxu0 0.0
    %1476 = vmatmul.mubr.f32.gmra.mxu0 %v1409
    %v1477 = vpop.f32.mrf.mxu0
    %v1478 = vadd.f32 %v1403, %v1477
    %v1479 = vpop.f32.mrf.mxu0
    %1480 = vdwg.mxu0
    %v1481 = vadd.f32 %v1478, %v1202
    %v1482 = vxor.u32 %v1481, 2147483648
    %v1483 = vmul.f32 %v1482, 1.442695
    %v1484 = vpow.pop %v1483
    %v1485 = vadd.f32 %v1484, 1.0
    %v1486 = vrcp.pop %v1485
    %v1487 = vmul.f32 1.0, %v1486
    %v1488 = vtanh.pop %v1481
    %v1489 = vmul.f32 %v1487, %v1222
    %1491 = vrot.lane.b32.xlu0 %v1488, 64
    %v1492 = vpop.permute.xlu0 %1491
    %v1494 = vmul.f32 %v1487, %v1492
    %1496 = vrot.lane.b32.xlu0 %v1494, 32
    %v1497 = vpop.permute.xlu0 %1496
    %v1499 = vadd.f32 %v1489, %v1497
    %v1500 = vtanh.pop %v1499
    %1502 = vrot.lane.b32.xlu0 %v1500, 64
    %v1503 = vpop.permute.xlu0 %1502
    %v1505 = vmul.f32 %v1487, %v1503
    %vm1506 = vcmp.eq.s32.totalorder %v138, 2
    %v1507 = vsel %vm1506, 1, 0
    %1508 = vset.pattern.permute.xlu0 0
    %1509 = vperm.xlu0 %1508, %v1507
    %v1510 = vpop.permute.xlu0 %1509
    %vm1511 = vcmp.eq.s32.totalorder %v1510, 1
    %v1512 = vsel %vm1511, %v1505, %v1235
    %1513 = vmatprep.subr.mxu0 0.0
    %1514 = vmatpush1.msra.mxu0 0.0
    %1515 = vmatprep.subr.mxu0 0.0
    %1516 = vmatpush1.msra.mxu0 0.0
    %1517 = vmatprep.subr.mxu0 0.0
    %1518 = vmatpush1.msra.mxu0 0.0
    %1519 = vmatprep.subr.mxu0 0.0
    %1520 = vmatpush1.msra.mxu0 0.0
    %1521 = vmatprep.subr.mxu0 0.0
    %1522 = vmatpush1.msra.mxu0 0.0
    %1523 = vmatprep.subr.mxu0 0.0
    %1524 = vmatpush1.msra.mxu0 0.0
    %1525 = vmatprep.subr.mxu0 0.0
    %1526 = vmatpush1.msra.mxu0 0.0
    %1527 = vmatprep.subr.mxu0 0.0
    %1528 = vmatpush1.msra.mxu0 0.0
    %1529 = vmatprep.subr.mxu0 0.0
    %1530 = vmatpush1.msra.mxu0 0.0
    %1531 = vmatprep.subr.mxu0 0.0
    %1532 = vmatpush1.msra.mxu0 0.0
    %1533 = vmatprep.subr.mxu0 0.0
    %1534 = vmatpush1.msra.mxu0 0.0
    %1535 = vmatprep.subr.mxu0 0.0
    %1536 = vmatpush1.msra.mxu0 0.0
    %1537 = vmatprep.subr.mxu0 0.0
    %1538 = vmatpush1.msra.mxu0 %v122
    %1539 = vmatprep.subr.mxu0 0.0
    %1540 = vmatpush1.msra.mxu0 %v121
    %1541 = vmatprep.subr.mxu0 0.0
    %1542 = vmatpush1.msra.mxu0 %v120
    %1543 = vmatprep.subr.mxu0 0.0
    %1544 = vmatpush1.msra.mxu0 %v119
    %1545 = vmatprep.subr.mxu0 0.0
    %1546 = vmatpush2.msra.mxu0 0.0
    %1547 = vmatprep.subr.mxu0 0.0
    %1548 = vmatpush2.msra.mxu0 0.0
    %1549 = vmatprep.subr.mxu0 0.0
    %1550 = vmatpush2.msra.mxu0 0.0
    %1551 = vmatprep.subr.mxu0 0.0
    %1552 = vmatpush2.msra.mxu0 0.0
    %1553 = vmatprep.subr.mxu0 0.0
    %1554 = vmatpush2.msra.mxu0 0.0
    %1555 = vmatprep.subr.mxu0 0.0
    %1556 = vmatpush2.msra.mxu0 0.0
    %1557 = vmatprep.subr.mxu0 0.0
    %1558 = vmatpush2.msra.mxu0 0.0
    %1559 = vmatprep.subr.mxu0 0.0
    %1560 = vmatpush2.msra.mxu0 0.0
    %1561 = vmatprep.subr.mxu0 0.0
    %1562 = vmatpush2.msra.mxu0 0.0
    %1563 = vmatprep.subr.mxu0 0.0
    %1564 = vmatpush2.msra.mxu0 0.0
    %1565 = vmatprep.subr.mxu0 0.0
    %1566 = vmatpush2.msra.mxu0 0.0
    %1567 = vmatprep.subr.mxu0 0.0
    %1568 = vmatpush2.msra.mxu0 0.0
    %1569 = vmatprep.subr.mxu0 0.0
    %1570 = vmatpush2.msra.mxu0 0.0
    %1571 = vmatprep.subr.mxu0 0.0
    %1572 = vmatpush2.msra.mxu0 0.0
    %1573 = vmatprep.subr.mxu0 0.0
    %1574 = vmatpush2.msra.mxu0 0.0
    %1575 = vmatprep.subr.mxu0 0.0
    %1576 = vmatpush2.msra.mxu0 0.0
    %1577 = vmatprep.mubr.f32.mxu0 0.0
    %1578 = vmatmul.mubr.f32.gmra.mxu0 %v1409
    %v1579 = vpop.f32.mrf.mxu0
    %v1580 = vadd.f32 0.0, %v1579
    %v1581 = vpop.f32.mrf.mxu0
    %1582 = vdwg.mxu0
    %v1583 = vadd.f32 %v554, %v1580
    %v1584 = vxor.u32 %v1583, 2147483648
    %v1585 = vmul.f32 %v1584, 1.442695
    %v1586 = vpow.pop %v1585
    %v1587 = vadd.f32 %v1586, 1.0
    %v1588 = vrcp.pop %v1587
    %v1589 = vmul.f32 1.0, %v1588
    %v1590 = vtanh.pop %v1583
    %v1591 = vmul.f32 %v1589, %v1324
    %1593 = vrot.lane.b32.xlu0 %v1590, 64
    %v1594 = vpop.permute.xlu0 %1593
    %v1596 = vmul.f32 %v1589, %v1594
    %1598 = vrot.lane.b32.xlu0 %v1596, 32
    %v1599 = vpop.permute.xlu0 %1598
    %v1601 = vadd.f32 %v1591, %v1599
    %v1602 = vtanh.pop %v1601
    %1604 = vrot.lane.b32.xlu0 %v1602, 64
    %v1605 = vpop.permute.xlu0 %1604
    %v1607 = vmul.f32 %v1589, %v1605
    %1609 = vrot.lane.b32.xlu0 %v1505, 32
    %v1610 = vpop.permute.xlu0 %1609
    %v1611 = vsel %vm236, %v1610, 0
    %1613 = vmatprep.subr.mxu0 0.0
    %1614 = vmatpush1.msra.mxu0 0.0
    %1615 = vmatprep.subr.mxu0 0.0
    %1616 = vmatpush1.msra.mxu0 0.0
    %1617 = vmatprep.subr.mxu0 0.0
    %1618 = vmatpush1.msra.mxu0 0.0
    %1619 = vmatprep.subr.mxu0 0.0
    %1620 = vmatpush1.msra.mxu0 0.0
    %1621 = vmatprep.subr.mxu0 0.0
    %1622 = vmatpush1.msra.mxu0 0.0
    %1623 = vmatprep.subr.mxu0 0.0
    %1624 = vmatpush1.msra.mxu0 0.0
    %1625 = vmatprep.subr.mxu0 0.0
    %1626 = vmatpush1.msra.mxu0 0.0
    %1627 = vmatprep.subr.mxu0 0.0
    %1628 = vmatpush1.msra.mxu0 0.0
    %1629 = vmatprep.subr.mxu0 0.0
    %1630 = vmatpush1.msra.mxu0 0.0
    %1631 = vmatprep.subr.mxu0 0.0
    %1632 = vmatpush1.msra.mxu0 0.0
    %1633 = vmatprep.subr.mxu0 0.0
    %1634 = vmatpush1.msra.mxu0 0.0
    %1635 = vmatprep.subr.mxu0 0.0
    %1636 = vmatpush1.msra.mxu0 0.0
    %1637 = vmatprep.subr.mxu0 0.0
    %1638 = vmatpush1.msra.mxu0 %v131
    %1639 = vmatprep.subr.mxu0 0.0
    %1640 = vmatpush1.msra.mxu0 %v130
    %1641 = vmatprep.subr.mxu0 0.0
    %1642 = vmatpush1.msra.mxu0 %v129
    %1643 = vmatprep.subr.mxu0 0.0
    %1644 = vmatpush1.msra.mxu0 %v128
    %1645 = vmatprep.subr.mxu0 0.0
    %1646 = vmatpush2.msra.mxu0 0.0
    %1647 = vmatprep.subr.mxu0 0.0
    %1648 = vmatpush2.msra.mxu0 0.0
    %1649 = vmatprep.subr.mxu0 0.0
    %1650 = vmatpush2.msra.mxu0 0.0
    %1651 = vmatprep.subr.mxu0 0.0
    %1652 = vmatpush2.msra.mxu0 0.0
    %1653 = vmatprep.subr.mxu0 0.0
    %1654 = vmatpush2.msra.mxu0 0.0
    %1655 = vmatprep.subr.mxu0 0.0
    %1656 = vmatpush2.msra.mxu0 0.0
    %1657 = vmatprep.subr.mxu0 0.0
    %1658 = vmatpush2.msra.mxu0 0.0
    %1659 = vmatprep.subr.mxu0 0.0
    %1660 = vmatpush2.msra.mxu0 0.0
    %1661 = vmatprep.subr.mxu0 0.0
    %1662 = vmatpush2.msra.mxu0 0.0
    %1663 = vmatprep.subr.mxu0 0.0
    %1664 = vmatpush2.msra.mxu0 0.0
    %1665 = vmatprep.subr.mxu0 0.0
    %1666 = vmatpush2.msra.mxu0 0.0
    %1667 = vmatprep.subr.mxu0 0.0
    %1668 = vmatpush2.msra.mxu0 0.0
    %1669 = vmatprep.subr.mxu0 0.0
    %1670 = vmatpush2.msra.mxu0 0.0
    %1671 = vmatprep.subr.mxu0 0.0
    %1672 = vmatpush2.msra.mxu0 0.0
    %1673 = vmatprep.subr.mxu0 0.0
    %1674 = vmatpush2.msra.mxu0 0.0
    %1675 = vmatprep.subr.mxu0 0.0
    %1676 = vmatpush2.msra.mxu0 0.0
    %1677 = vmatprep.mubr.f32.mxu0 0.0
    %1678 = vmatmul.mubr.f32.gmra.mxu0 %v1611
    %v1679 = vpop.f32.mrf.mxu0
    %v1680 = vadd.f32 0.0, %v1679
    %v1681 = vpop.f32.mrf.mxu0
    %1682 = vdwg.mxu0
    %1684 = vrot.lane.b32.xlu0 %v1607, 32
    %v1685 = vpop.permute.xlu0 %1684
    %v1686 = vsel %vm236, %v1685, 0
    %1688 = vmatprep.subr.mxu0 0.0
    %1689 = vmatpush1.msra.mxu0 0.0
    %1690 = vmatprep.subr.mxu0 0.0
    %1691 = vmatpush1.msra.mxu0 0.0
    %1692 = vmatprep.subr.mxu0 0.0
    %1693 = vmatpush1.msra.mxu0 0.0
    %1694 = vmatprep.subr.mxu0 0.0
    %1695 = vmatpush1.msra.mxu0 0.0
    %1696 = vmatprep.subr.mxu0 0.0
    %1697 = vmatpush1.msra.mxu0 0.0
    %1698 = vmatprep.subr.mxu0 0.0
    %1699 = vmatpush1.msra.mxu0 0.0
    %1700 = vmatprep.subr.mxu0 0.0
    %1701 = vmatpush1.msra.mxu0 0.0
    %1702 = vmatprep.subr.mxu0 0.0
    %1703 = vmatpush1.msra.mxu0 0.0
    %1704 = vmatprep.subr.mxu0 0.0
    %1705 = vmatpush1.msra.mxu0 0.0
    %1706 = vmatprep.subr.mxu0 0.0
    %1707 = vmatpush1.msra.mxu0 0.0
    %1708 = vmatprep.subr.mxu0 0.0
    %1709 = vmatpush1.msra.mxu0 0.0
    %1710 = vmatprep.subr.mxu0 0.0
    %1711 = vmatpush1.msra.mxu0 0.0
    %1712 = vmatprep.subr.mxu0 0.0
    %1713 = vmatpush1.msra.mxu0 %v127
    %1714 = vmatprep.subr.mxu0 0.0
    %1715 = vmatpush1.msra.mxu0 %v126
    %1716 = vmatprep.subr.mxu0 0.0
    %1717 = vmatpush1.msra.mxu0 %v125
    %1718 = vmatprep.subr.mxu0 0.0
    %1719 = vmatpush1.msra.mxu0 %v124
    %1720 = vmatprep.subr.mxu0 0.0
    %1721 = vmatpush2.msra.mxu0 0.0
    %1722 = vmatprep.subr.mxu0 0.0
    %1723 = vmatpush2.msra.mxu0 0.0
    %1724 = vmatprep.subr.mxu0 0.0
    %1725 = vmatpush2.msra.mxu0 0.0
    %1726 = vmatprep.subr.mxu0 0.0
    %1727 = vmatpush2.msra.mxu0 0.0
    %1728 = vmatprep.subr.mxu0 0.0
    %1729 = vmatpush2.msra.mxu0 0.0
    %1730 = vmatprep.subr.mxu0 0.0
    %1731 = vmatpush2.msra.mxu0 0.0
    %1732 = vmatprep.subr.mxu0 0.0
    %1733 = vmatpush2.msra.mxu0 0.0
    %1734 = vmatprep.subr.mxu0 0.0
    %1735 = vmatpush2.msra.mxu0 0.0
    %1736 = vmatprep.subr.mxu0 0.0
    %1737 = vmatpush2.msra.mxu0 0.0
    %1738 = vmatprep.subr.mxu0 0.0
    %1739 = vmatpush2.msra.mxu0 0.0
    %1740 = vmatprep.subr.mxu0 0.0
    %1741 = vmatpush2.msra.mxu0 0.0
    %1742 = vmatprep.subr.mxu0 0.0
    %1743 = vmatpush2.msra.mxu0 0.0
    %1744 = vmatprep.subr.mxu0 0.0
    %1745 = vmatpush2.msra.mxu0 0.0
    %1746 = vmatprep.subr.mxu0 0.0
    %1747 = vmatpush2.msra.mxu0 0.0
    %1748 = vmatprep.subr.mxu0 0.0
    %1749 = vmatpush2.msra.mxu0 0.0
    %1750 = vmatprep.subr.mxu0 0.0
    %1751 = vmatpush2.msra.mxu0 0.0
    %1752 = vmatprep.mubr.f32.mxu0 0.0
    %1753 = vmatmul.mubr.f32.gmra.mxu0 %v1686
    %v1754 = vpop.f32.mrf.mxu0
    %v1755 = vadd.f32 %v1680, %v1754
    %v1756 = vpop.f32.mrf.mxu0
    %1757 = vdwg.mxu0
    %v1758 = vadd.f32 %v1755, %v1202
    %v1759 = vxor.u32 %v1758, 2147483648
    %v1760 = vmul.f32 %v1759, 1.442695
    %v1761 = vpow.pop %v1760
    %v1762 = vadd.f32 %v1761, 1.0
    %v1763 = vrcp.pop %v1762
    %v1764 = vmul.f32 1.0, %v1763
    %v1765 = vtanh.pop %v1758
    %v1766 = vmul.f32 %v1764, %v1499
    %1768 = vrot.lane.b32.xlu0 %v1765, 64
    %v1769 = vpop.permute.xlu0 %1768
    %v1771 = vmul.f32 %v1764, %v1769
    %1773 = vrot.lane.b32.xlu0 %v1771, 32
    %v1774 = vpop.permute.xlu0 %1773
    %v1776 = vadd.f32 %v1766, %v1774
    %v1777 = vtanh.pop %v1776
    %1779 = vrot.lane.b32.xlu0 %v1777, 64
    %v1780 = vpop.permute.xlu0 %1779
    %v1782 = vmul.f32 %v1764, %v1780
    %vm1783 = vcmp.eq.s32.totalorder %v138, 3
    %v1784 = vsel %vm1783, 1, 0
    %1785 = vset.pattern.permute.xlu0 0
    %1786 = vperm.xlu0 %1785, %v1784
    %v1787 = vpop.permute.xlu0 %1786
    %vm1788 = vcmp.eq.s32.totalorder %v1787, 1
    %v1789 = vsel %vm1788, %v1782, %v1512
    %1790 = vmatprep.subr.mxu0 0.0
    %1791 = vmatpush1.msra.mxu0 0.0
    %1792 = vmatprep.subr.mxu0 0.0
    %1793 = vmatpush1.msra.mxu0 0.0
    %1794 = vmatprep.subr.mxu0 0.0
    %1795 = vmatpush1.msra.mxu0 0.0
    %1796 = vmatprep.subr.mxu0 0.0
    %1797 = vmatpush1.msra.mxu0 0.0
    %1798 = vmatprep.subr.mxu0 0.0
    %1799 = vmatpush1.msra.mxu0 0.0
    %1800 = vmatprep.subr.mxu0 0.0
    %1801 = vmatpush1.msra.mxu0 0.0
    %1802 = vmatprep.subr.mxu0 0.0
    %1803 = vmatpush1.msra.mxu0 0.0
    %1804 = vmatprep.subr.mxu0 0.0
    %1805 = vmatpush1.msra.mxu0 0.0
    %1806 = vmatprep.subr.mxu0 0.0
    %1807 = vmatpush1.msra.mxu0 0.0
    %1808 = vmatprep.subr.mxu0 0.0
    %1809 = vmatpush1.msra.mxu0 0.0
    %1810 = vmatprep.subr.mxu0 0.0
    %1811 = vmatpush1.msra.mxu0 0.0
    %1812 = vmatprep.subr.mxu0 0.0
    %1813 = vmatpush1.msra.mxu0 0.0
    %1814 = vmatprep.subr.mxu0 0.0
    %1815 = vmatpush1.msra.mxu0 %v122
    %1816 = vmatprep.subr.mxu0 0.0
    %1817 = vmatpush1.msra.mxu0 %v121
    %1818 = vmatprep.subr.mxu0 0.0
    %1819 = vmatpush1.msra.mxu0 %v120
    %1820 = vmatprep.subr.mxu0 0.0
    %1821 = vmatpush1.msra.mxu0 %v119
    %1822 = vmatprep.subr.mxu0 0.0
    %1823 = vmatpush2.msra.mxu0 0.0
    %1824 = vmatprep.subr.mxu0 0.0
    %1825 = vmatpush2.msra.mxu0 0.0
    %1826 = vmatprep.subr.mxu0 0.0
    %1827 = vmatpush2.msra.mxu0 0.0
    %1828 = vmatprep.subr.mxu0 0.0
    %1829 = vmatpush2.msra.mxu0 0.0
    %1830 = vmatprep.subr.mxu0 0.0
    %1831 = vmatpush2.msra.mxu0 0.0
    %1832 = vmatprep.subr.mxu0 0.0
    %1833 = vmatpush2.msra.mxu0 0.0
    %1834 = vmatprep.subr.mxu0 0.0
    %1835 = vmatpush2.msra.mxu0 0.0
    %1836 = vmatprep.subr.mxu0 0.0
    %1837 = vmatpush2.msra.mxu0 0.0
    %1838 = vmatprep.subr.mxu0 0.0
    %1839 = vmatpush2.msra.mxu0 0.0
    %1840 = vmatprep.subr.mxu0 0.0
    %1841 = vmatpush2.msra.mxu0 0.0
    %1842 = vmatprep.subr.mxu0 0.0
    %1843 = vmatpush2.msra.mxu0 0.0
    %1844 = vmatprep.subr.mxu0 0.0
    %1845 = vmatpush2.msra.mxu0 0.0
    %1846 = vmatprep.subr.mxu0 0.0
    %1847 = vmatpush2.msra.mxu0 0.0
    %1848 = vmatprep.subr.mxu0 0.0
    %1849 = vmatpush2.msra.mxu0 0.0
    %1850 = vmatprep.subr.mxu0 0.0
    %1851 = vmatpush2.msra.mxu0 0.0
    %1852 = vmatprep.subr.mxu0 0.0
    %1853 = vmatpush2.msra.mxu0 0.0
    %1854 = vmatprep.mubr.f32.mxu0 0.0
    %1855 = vmatmul.mubr.f32.gmra.mxu0 %v1686
    %v1856 = vpop.f32.mrf.mxu0
    %v1857 = vadd.f32 0.0, %v1856
    %v1858 = vpop.f32.mrf.mxu0
    %1859 = vdwg.mxu0
    %v1860 = vadd.f32 %v633, %v1857
    %v1861 = vxor.u32 %v1860, 2147483648
    %v1862 = vmul.f32 %v1861, 1.442695
    %v1863 = vpow.pop %v1862
    %v1864 = vadd.f32 %v1863, 1.0
    %v1865 = vrcp.pop %v1864
    %v1866 = vmul.f32 1.0, %v1865
    %v1867 = vtanh.pop %v1860
    %v1868 = vmul.f32 %v1866, %v1601
    %1870 = vrot.lane.b32.xlu0 %v1867, 64
    %v1871 = vpop.permute.xlu0 %1870
    %v1873 = vmul.f32 %v1866, %v1871
    %1875 = vrot.lane.b32.xlu0 %v1873, 32
    %v1876 = vpop.permute.xlu0 %1875
    %v1878 = vadd.f32 %v1868, %v1876
    %v1879 = vtanh.pop %v1878
    %1881 = vrot.lane.b32.xlu0 %v1879, 64
    %v1882 = vpop.permute.xlu0 %1881
    %v1884 = vmul.f32 %v1866, %v1882
    %1886 = vrot.lane.b32.xlu0 %v1782, 32
    %v1887 = vpop.permute.xlu0 %1886
    %v1888 = vsel %vm236, %v1887, 0
    %1890 = vmatprep.subr.mxu0 0.0
    %1891 = vmatpush1.msra.mxu0 0.0
    %1892 = vmatprep.subr.mxu0 0.0
    %1893 = vmatpush1.msra.mxu0 0.0
    %1894 = vmatprep.subr.mxu0 0.0
    %1895 = vmatpush1.msra.mxu0 0.0
    %1896 = vmatprep.subr.mxu0 0.0
    %1897 = vmatpush1.msra.mxu0 0.0
    %1898 = vmatprep.subr.mxu0 0.0
    %1899 = vmatpush1.msra.mxu0 0.0
    %1900 = vmatprep.subr.mxu0 0.0
    %1901 = vmatpush1.msra.mxu0 0.0
    %1902 = vmatprep.subr.mxu0 0.0
    %1903 = vmatpush1.msra.mxu0 0.0
    %1904 = vmatprep.subr.mxu0 0.0
    %1905 = vmatpush1.msra.mxu0 0.0
    %1906 = vmatprep.subr.mxu0 0.0
    %1907 = vmatpush1.msra.mxu0 0.0
    %1908 = vmatprep.subr.mxu0 0.0
    %1909 = vmatpush1.msra.mxu0 0.0
    %1910 = vmatprep.subr.mxu0 0.0
    %1911 = vmatpush1.msra.mxu0 0.0
    %1912 = vmatprep.subr.mxu0 0.0
    %1913 = vmatpush1.msra.mxu0 0.0
    %1914 = vmatprep.subr.mxu0 0.0
    %1915 = vmatpush1.msra.mxu0 %v131
    %1916 = vmatprep.subr.mxu0 0.0
    %1917 = vmatpush1.msra.mxu0 %v130
    %1918 = vmatprep.subr.mxu0 0.0
    %1919 = vmatpush1.msra.mxu0 %v129
    %1920 = vmatprep.subr.mxu0 0.0
    %1921 = vmatpush1.msra.mxu0 %v128
    %1922 = vmatprep.subr.mxu0 0.0
    %1923 = vmatpush2.msra.mxu0 0.0
    %1924 = vmatprep.subr.mxu0 0.0
    %1925 = vmatpush2.msra.mxu0 0.0
    %1926 = vmatprep.subr.mxu0 0.0
    %1927 = vmatpush2.msra.mxu0 0.0
    %1928 = vmatprep.subr.mxu0 0.0
    %1929 = vmatpush2.msra.mxu0 0.0
    %1930 = vmatprep.subr.mxu0 0.0
    %1931 = vmatpush2.msra.mxu0 0.0
    %1932 = vmatprep.subr.mxu0 0.0
    %1933 = vmatpush2.msra.mxu0 0.0
    %1934 = vmatprep.subr.mxu0 0.0
    %1935 = vmatpush2.msra.mxu0 0.0
    %1936 = vmatprep.subr.mxu0 0.0
    %1937 = vmatpush2.msra.mxu0 0.0
    %1938 = vmatprep.subr.mxu0 0.0
    %1939 = vmatpush2.msra.mxu0 0.0
    %1940 = vmatprep.subr.mxu0 0.0
    %1941 = vmatpush2.msra.mxu0 0.0
    %1942 = vmatprep.subr.mxu0 0.0
    %1943 = vmatpush2.msra.mxu0 0.0
    %1944 = vmatprep.subr.mxu0 0.0
    %1945 = vmatpush2.msra.mxu0 0.0
    %1946 = vmatprep.subr.mxu0 0.0
    %1947 = vmatpush2.msra.mxu0 0.0
    %1948 = vmatprep.subr.mxu0 0.0
    %1949 = vmatpush2.msra.mxu0 0.0
    %1950 = vmatprep.subr.mxu0 0.0
    %1951 = vmatpush2.msra.mxu0 0.0
    %1952 = vmatprep.subr.mxu0 0.0
    %1953 = vmatpush2.msra.mxu0 0.0
    %1954 = vmatprep.mubr.f32.mxu0 0.0
    %1955 = vmatmul.mubr.f32.gmra.mxu0 %v1888
    %v1956 = vpop.f32.mrf.mxu0
    %v1957 = vadd.f32 0.0, %v1956
    %v1958 = vpop.f32.mrf.mxu0
    %1959 = vdwg.mxu0
    %1961 = vrot.lane.b32.xlu0 %v1884, 32
    %v1962 = vpop.permute.xlu0 %1961
    %v1963 = vsel %vm236, %v1962, 0
    %1965 = vmatprep.subr.mxu0 0.0
    %1966 = vmatpush1.msra.mxu0 0.0
    %1967 = vmatprep.subr.mxu0 0.0
    %1968 = vmatpush1.msra.mxu0 0.0
    %1969 = vmatprep.subr.mxu0 0.0
    %1970 = vmatpush1.msra.mxu0 0.0
    %1971 = vmatprep.subr.mxu0 0.0
    %1972 = vmatpush1.msra.mxu0 0.0
    %1973 = vmatprep.subr.mxu0 0.0
    %1974 = vmatpush1.msra.mxu0 0.0
    %1975 = vmatprep.subr.mxu0 0.0
    %1976 = vmatpush1.msra.mxu0 0.0
    %1977 = vmatprep.subr.mxu0 0.0
    %1978 = vmatpush1.msra.mxu0 0.0
    %1979 = vmatprep.subr.mxu0 0.0
    %1980 = vmatpush1.msra.mxu0 0.0
    %1981 = vmatprep.subr.mxu0 0.0
    %1982 = vmatpush1.msra.mxu0 0.0
    %1983 = vmatprep.subr.mxu0 0.0
    %1984 = vmatpush1.msra.mxu0 0.0
    %1985 = vmatprep.subr.mxu0 0.0
    %1986 = vmatpush1.msra.mxu0 0.0
    %1987 = vmatprep.subr.mxu0 0.0
    %1988 = vmatpush1.msra.mxu0 0.0
    %1989 = vmatprep.subr.mxu0 0.0
    %1990 = vmatpush1.msra.mxu0 %v127
    %1991 = vmatprep.subr.mxu0 0.0
    %1992 = vmatpush1.msra.mxu0 %v126
    %1993 = vmatprep.subr.mxu0 0.0
    %1994 = vmatpush1.msra.mxu0 %v125
    %1995 = vmatprep.subr.mxu0 0.0
    %1996 = vmatpush1.msra.mxu0 %v124
    %1997 = vmatprep.subr.mxu0 0.0
    %1998 = vmatpush2.msra.mxu0 0.0
    %1999 = vmatprep.subr.mxu0 0.0
    %2000 = vmatpush2.msra.mxu0 0.0
    %2001 = vmatprep.subr.mxu0 0.0
    %2002 = vmatpush2.msra.mxu0 0.0
    %2003 = vmatprep.subr.mxu0 0.0
    %2004 = vmatpush2.msra.mxu0 0.0
    %2005 = vmatprep.subr.mxu0 0.0
    %2006 = vmatpush2.msra.mxu0 0.0
    %2007 = vmatprep.subr.mxu0 0.0
    %2008 = vmatpush2.msra.mxu0 0.0
    %2009 = vmatprep.subr.mxu0 0.0
    %2010 = vmatpush2.msra.mxu0 0.0
    %2011 = vmatprep.subr.mxu0 0.0
    %2012 = vmatpush2.msra.mxu0 0.0
    %2013 = vmatprep.subr.mxu0 0.0
    %2014 = vmatpush2.msra.mxu0 0.0
    %2015 = vmatprep.subr.mxu0 0.0
    %2016 = vmatpush2.msra.mxu0 0.0
    %2017 = vmatprep.subr.mxu0 0.0
    %2018 = vmatpush2.msra.mxu0 0.0
    %2019 = vmatprep.subr.mxu0 0.0
    %2020 = vmatpush2.msra.mxu0 0.0
    %2021 = vmatprep.subr.mxu0 0.0
    %2022 = vmatpush2.msra.mxu0 0.0
    %2023 = vmatprep.subr.mxu0 0.0
    %2024 = vmatpush2.msra.mxu0 0.0
    %2025 = vmatprep.subr.mxu0 0.0
    %2026 = vmatpush2.msra.mxu0 0.0
    %2027 = vmatprep.subr.mxu0 0.0
    %2028 = vmatpush2.msra.mxu0 0.0
    %2029 = vmatprep.mubr.f32.mxu0 0.0
    %2030 = vmatmul.mubr.f32.gmra.mxu0 %v1963
    %v2031 = vpop.f32.mrf.mxu0
    %v2032 = vadd.f32 %v1957, %v2031
    %v2033 = vpop.f32.mrf.mxu0
    %2034 = vdwg.mxu0
    %v2035 = vadd.f32 %v2032, %v1202
    %v2036 = vxor.u32 %v2035, 2147483648
    %v2037 = vmul.f32 %v2036, 1.442695
    %v2038 = vpow.pop %v2037
    %v2039 = vadd.f32 %v2038, 1.0
    %v2040 = vrcp.pop %v2039
    %v2041 = vmul.f32 1.0, %v2040
    %v2042 = vtanh.pop %v2035
    %v2043 = vmul.f32 %v2041, %v1776
    %2045 = vrot.lane.b32.xlu0 %v2042, 64
    %v2046 = vpop.permute.xlu0 %2045
    %v2048 = vmul.f32 %v2041, %v2046
    %2050 = vrot.lane.b32.xlu0 %v2048, 32
    %v2051 = vpop.permute.xlu0 %2050
    %v2053 = vadd.f32 %v2043, %v2051
    %v2054 = vtanh.pop %v2053
    %2056 = vrot.lane.b32.xlu0 %v2054, 64
    %v2057 = vpop.permute.xlu0 %2056
    %v2059 = vmul.f32 %v2041, %v2057
    %vm2060 = vcmp.eq.s32.totalorder %v138, 4
    %v2061 = vsel %vm2060, 1, 0
    %2062 = vset.pattern.permute.xlu0 0
    %2063 = vperm.xlu0 %2062, %v2061
    %v2064 = vpop.permute.xlu0 %2063
    %vm2065 = vcmp.eq.s32.totalorder %v2064, 1
    %v2066 = vsel %vm2065, %v2059, %v1789
    %2067 = vmatprep.subr.mxu0 0.0
    %2068 = vmatpush1.msra.mxu0 0.0
    %2069 = vmatprep.subr.mxu0 0.0
    %2070 = vmatpush1.msra.mxu0 0.0
    %2071 = vmatprep.subr.mxu0 0.0
    %2072 = vmatpush1.msra.mxu0 0.0
    %2073 = vmatprep.subr.mxu0 0.0
    %2074 = vmatpush1.msra.mxu0 0.0
    %2075 = vmatprep.subr.mxu0 0.0
    %2076 = vmatpush1.msra.mxu0 0.0
    %2077 = vmatprep.subr.mxu0 0.0
    %2078 = vmatpush1.msra.mxu0 0.0
    %2079 = vmatprep.subr.mxu0 0.0
    %2080 = vmatpush1.msra.mxu0 0.0
    %2081 = vmatprep.subr.mxu0 0.0
    %2082 = vmatpush1.msra.mxu0 0.0
    %2083 = vmatprep.subr.mxu0 0.0
    %2084 = vmatpush1.msra.mxu0 0.0
    %2085 = vmatprep.subr.mxu0 0.0
    %2086 = vmatpush1.msra.mxu0 0.0
    %2087 = vmatprep.subr.mxu0 0.0
    %2088 = vmatpush1.msra.mxu0 0.0
    %2089 = vmatprep.subr.mxu0 0.0
    %2090 = vmatpush1.msra.mxu0 0.0
    %2091 = vmatprep.subr.mxu0 0.0
    %2092 = vmatpush1.msra.mxu0 %v122
    %2093 = vmatprep.subr.mxu0 0.0
    %2094 = vmatpush1.msra.mxu0 %v121
    %2095 = vmatprep.subr.mxu0 0.0
    %2096 = vmatpush1.msra.mxu0 %v120
    %2097 = vmatprep.subr.mxu0 0.0
    %2098 = vmatpush1.msra.mxu0 %v119
    %2099 = vmatprep.subr.mxu0 0.0
    %2100 = vmatpush2.msra.mxu0 0.0
    %2101 = vmatprep.subr.mxu0 0.0
    %2102 = vmatpush2.msra.mxu0 0.0
    %2103 = vmatprep.subr.mxu0 0.0
    %2104 = vmatpush2.msra.mxu0 0.0
    %2105 = vmatprep.subr.mxu0 0.0
    %2106 = vmatpush2.msra.mxu0 0.0
    %2107 = vmatprep.subr.mxu0 0.0
    %2108 = vmatpush2.msra.mxu0 0.0
    %2109 = vmatprep.subr.mxu0 0.0
    %2110 = vmatpush2.msra.mxu0 0.0
    %2111 = vmatprep.subr.mxu0 0.0
    %2112 = vmatpush2.msra.mxu0 0.0
    %2113 = vmatprep.subr.mxu0 0.0
    %2114 = vmatpush2.msra.mxu0 0.0
    %2115 = vmatprep.subr.mxu0 0.0
    %2116 = vmatpush2.msra.mxu0 0.0
    %2117 = vmatprep.subr.mxu0 0.0
    %2118 = vmatpush2.msra.mxu0 0.0
    %2119 = vmatprep.subr.mxu0 0.0
    %2120 = vmatpush2.msra.mxu0 0.0
    %2121 = vmatprep.subr.mxu0 0.0
    %2122 = vmatpush2.msra.mxu0 0.0
    %2123 = vmatprep.subr.mxu0 0.0
    %2124 = vmatpush2.msra.mxu0 0.0
    %2125 = vmatprep.subr.mxu0 0.0
    %2126 = vmatpush2.msra.mxu0 0.0
    %2127 = vmatprep.subr.mxu0 0.0
    %2128 = vmatpush2.msra.mxu0 0.0
    %2129 = vmatprep.subr.mxu0 0.0
    %2130 = vmatpush2.msra.mxu0 0.0
    %2131 = vmatprep.mubr.f32.mxu0 0.0
    %2132 = vmatmul.mubr.f32.gmra.mxu0 %v1963
    %v2133 = vpop.f32.mrf.mxu0
    %v2134 = vadd.f32 0.0, %v2133
    %v2135 = vpop.f32.mrf.mxu0
    %2136 = vdwg.mxu0
    %v2137 = vadd.f32 %v712, %v2134
    %v2138 = vxor.u32 %v2137, 2147483648
    %v2139 = vmul.f32 %v2138, 1.442695
    %v2140 = vpow.pop %v2139
    %v2141 = vadd.f32 %v2140, 1.0
    %v2142 = vrcp.pop %v2141
    %v2143 = vmul.f32 1.0, %v2142
    %v2144 = vtanh.pop %v2137
    %v2145 = vmul.f32 %v2143, %v1878
    %2147 = vrot.lane.b32.xlu0 %v2144, 64
    %v2148 = vpop.permute.xlu0 %2147
    %v2150 = vmul.f32 %v2143, %v2148
    %2152 = vrot.lane.b32.xlu0 %v2150, 32
    %v2153 = vpop.permute.xlu0 %2152
    %v2155 = vadd.f32 %v2145, %v2153
    %v2156 = vtanh.pop %v2155
    %2158 = vrot.lane.b32.xlu0 %v2156, 64
    %v2159 = vpop.permute.xlu0 %2158
    %v2161 = vmul.f32 %v2143, %v2159
    %2163 = vrot.lane.b32.xlu0 %v2059, 32
    %v2164 = vpop.permute.xlu0 %2163
    %v2165 = vsel %vm236, %v2164, 0
    %2167 = vmatprep.subr.mxu0 0.0
    %2168 = vmatpush1.msra.mxu0 0.0
    %2169 = vmatprep.subr.mxu0 0.0
    %2170 = vmatpush1.msra.mxu0 0.0
    %2171 = vmatprep.subr.mxu0 0.0
    %2172 = vmatpush1.msra.mxu0 0.0
    %2173 = vmatprep.subr.mxu0 0.0
    %2174 = vmatpush1.msra.mxu0 0.0
    %2175 = vmatprep.subr.mxu0 0.0
    %2176 = vmatpush1.msra.mxu0 0.0
    %2177 = vmatprep.subr.mxu0 0.0
    %2178 = vmatpush1.msra.mxu0 0.0
    %2179 = vmatprep.subr.mxu0 0.0
    %2180 = vmatpush1.msra.mxu0 0.0
    %2181 = vmatprep.subr.mxu0 0.0
    %2182 = vmatpush1.msra.mxu0 0.0
    %2183 = vmatprep.subr.mxu0 0.0
    %2184 = vmatpush1.msra.mxu0 0.0
    %2185 = vmatprep.subr.mxu0 0.0
    %2186 = vmatpush1.msra.mxu0 0.0
    %2187 = vmatprep.subr.mxu0 0.0
    %2188 = vmatpush1.msra.mxu0 0.0
    %2189 = vmatprep.subr.mxu0 0.0
    %2190 = vmatpush1.msra.mxu0 0.0
    %2191 = vmatprep.subr.mxu0 0.0
    %2192 = vmatpush1.msra.mxu0 %v131
    %2193 = vmatprep.subr.mxu0 0.0
    %2194 = vmatpush1.msra.mxu0 %v130
    %2195 = vmatprep.subr.mxu0 0.0
    %2196 = vmatpush1.msra.mxu0 %v129
    %2197 = vmatprep.subr.mxu0 0.0
    %2198 = vmatpush1.msra.mxu0 %v128
    %2199 = vmatprep.subr.mxu0 0.0
    %2200 = vmatpush2.msra.mxu0 0.0
    %2201 = vmatprep.subr.mxu0 0.0
    %2202 = vmatpush2.msra.mxu0 0.0
    %2203 = vmatprep.subr.mxu0 0.0
    %2204 = vmatpush2.msra.mxu0 0.0
    %2205 = vmatprep.subr.mxu0 0.0
    %2206 = vmatpush2.msra.mxu0 0.0
    %2207 = vmatprep.subr.mxu0 0.0
    %2208 = vmatpush2.msra.mxu0 0.0
    %2209 = vmatprep.subr.mxu0 0.0
    %2210 = vmatpush2.msra.mxu0 0.0
    %2211 = vmatprep.subr.mxu0 0.0
    %2212 = vmatpush2.msra.mxu0 0.0
    %2213 = vmatprep.subr.mxu0 0.0
    %2214 = vmatpush2.msra.mxu0 0.0
    %2215 = vmatprep.subr.mxu0 0.0
    %2216 = vmatpush2.msra.mxu0 0.0
    %2217 = vmatprep.subr.mxu0 0.0
    %2218 = vmatpush2.msra.mxu0 0.0
    %2219 = vmatprep.subr.mxu0 0.0
    %2220 = vmatpush2.msra.mxu0 0.0
    %2221 = vmatprep.subr.mxu0 0.0
    %2222 = vmatpush2.msra.mxu0 0.0
    %2223 = vmatprep.subr.mxu0 0.0
    %2224 = vmatpush2.msra.mxu0 0.0
    %2225 = vmatprep.subr.mxu0 0.0
    %2226 = vmatpush2.msra.mxu0 0.0
    %2227 = vmatprep.subr.mxu0 0.0
    %2228 = vmatpush2.msra.mxu0 0.0
    %2229 = vmatprep.subr.mxu0 0.0
    %2230 = vmatpush2.msra.mxu0 0.0
    %2231 = vmatprep.mubr.f32.mxu0 0.0
    %2232 = vmatmul.mubr.f32.gmra.mxu0 %v2165
    %v2233 = vpop.f32.mrf.mxu0
    %v2234 = vadd.f32 0.0, %v2233
    %v2235 = vpop.f32.mrf.mxu0
    %2236 = vdwg.mxu0
    %2238 = vrot.lane.b32.xlu0 %v2161, 32
    %v2239 = vpop.permute.xlu0 %2238
    %v2240 = vsel %vm236, %v2239, 0
    %2242 = vmatprep.subr.mxu0 0.0
    %2243 = vmatpush1.msra.mxu0 0.0
    %2244 = vmatprep.subr.mxu0 0.0
    %2245 = vmatpush1.msra.mxu0 0.0
    %2246 = vmatprep.subr.mxu0 0.0
    %2247 = vmatpush1.msra.mxu0 0.0
    %2248 = vmatprep.subr.mxu0 0.0
    %2249 = vmatpush1.msra.mxu0 0.0
    %2250 = vmatprep.subr.mxu0 0.0
    %2251 = vmatpush1.msra.mxu0 0.0
    %2252 = vmatprep.subr.mxu0 0.0
    %2253 = vmatpush1.msra.mxu0 0.0
    %2254 = vmatprep.subr.mxu0 0.0
    %2255 = vmatpush1.msra.mxu0 0.0
    %2256 = vmatprep.subr.mxu0 0.0
    %2257 = vmatpush1.msra.mxu0 0.0
    %2258 = vmatprep.subr.mxu0 0.0
    %2259 = vmatpush1.msra.mxu0 0.0
    %2260 = vmatprep.subr.mxu0 0.0
    %2261 = vmatpush1.msra.mxu0 0.0
    %2262 = vmatprep.subr.mxu0 0.0
    %2263 = vmatpush1.msra.mxu0 0.0
    %2264 = vmatprep.subr.mxu0 0.0
    %2265 = vmatpush1.msra.mxu0 0.0
    %2266 = vmatprep.subr.mxu0 0.0
    %2267 = vmatpush1.msra.mxu0 %v127
    %2268 = vmatprep.subr.mxu0 0.0
    %2269 = vmatpush1.msra.mxu0 %v126
    %2270 = vmatprep.subr.mxu0 0.0
    %2271 = vmatpush1.msra.mxu0 %v125
    %2272 = vmatprep.subr.mxu0 0.0
    %2273 = vmatpush1.msra.mxu0 %v124
    %2274 = vmatprep.subr.mxu0 0.0
    %2275 = vmatpush2.msra.mxu0 0.0
    %2276 = vmatprep.subr.mxu0 0.0
    %2277 = vmatpush2.msra.mxu0 0.0
    %2278 = vmatprep.subr.mxu0 0.0
    %2279 = vmatpush2.msra.mxu0 0.0
    %2280 = vmatprep.subr.mxu0 0.0
    %2281 = vmatpush2.msra.mxu0 0.0
    %2282 = vmatprep.subr.mxu0 0.0
    %2283 = vmatpush2.msra.mxu0 0.0
    %2284 = vmatprep.subr.mxu0 0.0
    %2285 = vmatpush2.msra.mxu0 0.0
    %2286 = vmatprep.subr.mxu0 0.0
    %2287 = vmatpush2.msra.mxu0 0.0
    %2288 = vmatprep.subr.mxu0 0.0
    %2289 = vmatpush2.msra.mxu0 0.0
    %2290 = vmatprep.subr.mxu0 0.0
    %2291 = vmatpush2.msra.mxu0 0.0
    %2292 = vmatprep.subr.mxu0 0.0
    %2293 = vmatpush2.msra.mxu0 0.0
    %2294 = vmatprep.subr.mxu0 0.0
    %2295 = vmatpush2.msra.mxu0 0.0
    %2296 = vmatprep.subr.mxu0 0.0
    %2297 = vmatpush2.msra.mxu0 0.0
    %2298 = vmatprep.subr.mxu0 0.0
    %2299 = vmatpush2.msra.mxu0 0.0
    %2300 = vmatprep.subr.mxu0 0.0
    %2301 = vmatpush2.msra.mxu0 0.0
    %2302 = vmatprep.subr.mxu0 0.0
    %2303 = vmatpush2.msra.mxu0 0.0
    %2304 = vmatprep.subr.mxu0 0.0
    %2305 = vmatpush2.msra.mxu0 0.0
    %2306 = vmatprep.mubr.f32.mxu0 0.0
    %2307 = vmatmul.mubr.f32.gmra.mxu0 %v2240
    %v2308 = vpop.f32.mrf.mxu0
    %v2309 = vadd.f32 %v2234, %v2308
    %v2310 = vpop.f32.mrf.mxu0
    %2311 = vdwg.mxu0
    %v2312 = vadd.f32 %v2309, %v1202
    %v2313 = vxor.u32 %v2312, 2147483648
    %v2314 = vmul.f32 %v2313, 1.442695
    %v2315 = vpow.pop %v2314
    %v2316 = vadd.f32 %v2315, 1.0
    %v2317 = vrcp.pop %v2316
    %v2318 = vmul.f32 1.0, %v2317
    %v2319 = vtanh.pop %v2312
    %v2320 = vmul.f32 %v2318, %v2053
    %2322 = vrot.lane.b32.xlu0 %v2319, 64
    %v2323 = vpop.permute.xlu0 %2322
    %v2325 = vmul.f32 %v2318, %v2323
    %2327 = vrot.lane.b32.xlu0 %v2325, 32
    %v2328 = vpop.permute.xlu0 %2327
    %v2330 = vadd.f32 %v2320, %v2328
    %v2331 = vtanh.pop %v2330
    %2333 = vrot.lane.b32.xlu0 %v2331, 64
    %v2334 = vpop.permute.xlu0 %2333
    %v2336 = vmul.f32 %v2318, %v2334
    %vm2337 = vcmp.eq.s32.totalorder %v138, 5
    %v2338 = vsel %vm2337, 1, 0
    %2339 = vset.pattern.permute.xlu0 0
    %2340 = vperm.xlu0 %2339, %v2338
    %v2341 = vpop.permute.xlu0 %2340
    %vm2342 = vcmp.eq.s32.totalorder %v2341, 1
    %v2343 = vsel %vm2342, %v2336, %v2066
    %2344 = vmatprep.subr.mxu0 0.0
    %2345 = vmatpush1.msra.mxu0 0.0
    %2346 = vmatprep.subr.mxu0 0.0
    %2347 = vmatpush1.msra.mxu0 0.0
    %2348 = vmatprep.subr.mxu0 0.0
    %2349 = vmatpush1.msra.mxu0 0.0
    %2350 = vmatprep.subr.mxu0 0.0
    %2351 = vmatpush1.msra.mxu0 0.0
    %2352 = vmatprep.subr.mxu0 0.0
    %2353 = vmatpush1.msra.mxu0 0.0
    %2354 = vmatprep.subr.mxu0 0.0
    %2355 = vmatpush1.msra.mxu0 0.0
    %2356 = vmatprep.subr.mxu0 0.0
    %2357 = vmatpush1.msra.mxu0 0.0
    %2358 = vmatprep.subr.mxu0 0.0
    %2359 = vmatpush1.msra.mxu0 0.0
    %2360 = vmatprep.subr.mxu0 0.0
    %2361 = vmatpush1.msra.mxu0 0.0
    %2362 = vmatprep.subr.mxu0 0.0
    %2363 = vmatpush1.msra.mxu0 0.0
    %2364 = vmatprep.subr.mxu0 0.0
    %2365 = vmatpush1.msra.mxu0 0.0
    %2366 = vmatprep.subr.mxu0 0.0
    %2367 = vmatpush1.msra.mxu0 0.0
    %2368 = vmatprep.subr.mxu0 0.0
    %2369 = vmatpush1.msra.mxu0 %v122
    %2370 = vmatprep.subr.mxu0 0.0
    %2371 = vmatpush1.msra.mxu0 %v121
    %2372 = vmatprep.subr.mxu0 0.0
    %2373 = vmatpush1.msra.mxu0 %v120
    %2374 = vmatprep.subr.mxu0 0.0
    %2375 = vmatpush1.msra.mxu0 %v119
    %2376 = vmatprep.subr.mxu0 0.0
    %2377 = vmatpush2.msra.mxu0 0.0
    %2378 = vmatprep.subr.mxu0 0.0
    %2379 = vmatpush2.msra.mxu0 0.0
    %2380 = vmatprep.subr.mxu0 0.0
    %2381 = vmatpush2.msra.mxu0 0.0
    %2382 = vmatprep.subr.mxu0 0.0
    %2383 = vmatpush2.msra.mxu0 0.0
    %2384 = vmatprep.subr.mxu0 0.0
    %2385 = vmatpush2.msra.mxu0 0.0
    %2386 = vmatprep.subr.mxu0 0.0
    %2387 = vmatpush2.msra.mxu0 0.0
    %2388 = vmatprep.subr.mxu0 0.0
    %2389 = vmatpush2.msra.mxu0 0.0
    %2390 = vmatprep.subr.mxu0 0.0
    %2391 = vmatpush2.msra.mxu0 0.0
    %2392 = vmatprep.subr.mxu0 0.0
    %2393 = vmatpush2.msra.mxu0 0.0
    %2394 = vmatprep.subr.mxu0 0.0
    %2395 = vmatpush2.msra.mxu0 0.0
    %2396 = vmatprep.subr.mxu0 0.0
    %2397 = vmatpush2.msra.mxu0 0.0
    %2398 = vmatprep.subr.mxu0 0.0
    %2399 = vmatpush2.msra.mxu0 0.0
    %2400 = vmatprep.subr.mxu0 0.0
    %2401 = vmatpush2.msra.mxu0 0.0
    %2402 = vmatprep.subr.mxu0 0.0
    %2403 = vmatpush2.msra.mxu0 0.0
    %2404 = vmatprep.subr.mxu0 0.0
    %2405 = vmatpush2.msra.mxu0 0.0
    %2406 = vmatprep.subr.mxu0 0.0
    %2407 = vmatpush2.msra.mxu0 0.0
    %2408 = vmatprep.mubr.f32.mxu0 0.0
    %2409 = vmatmul.mubr.f32.gmra.mxu0 %v2240
    %v2410 = vpop.f32.mrf.mxu0
    %v2411 = vadd.f32 0.0, %v2410
    %v2412 = vpop.f32.mrf.mxu0
    %2413 = vdwg.mxu0
    %v2414 = vadd.f32 %v791, %v2411
    %v2415 = vxor.u32 %v2414, 2147483648
    %v2416 = vmul.f32 %v2415, 1.442695
    %v2417 = vpow.pop %v2416
    %v2418 = vadd.f32 %v2417, 1.0
    %v2419 = vrcp.pop %v2418
    %v2420 = vmul.f32 1.0, %v2419
    %v2421 = vtanh.pop %v2414
    %v2422 = vmul.f32 %v2420, %v2155
    %2424 = vrot.lane.b32.xlu0 %v2421, 64
    %v2425 = vpop.permute.xlu0 %2424
    %v2427 = vmul.f32 %v2420, %v2425
    %2429 = vrot.lane.b32.xlu0 %v2427, 32
    %v2430 = vpop.permute.xlu0 %2429
    %v2432 = vadd.f32 %v2422, %v2430
    %v2433 = vtanh.pop %v2432
    %2435 = vrot.lane.b32.xlu0 %v2433, 64
    %v2436 = vpop.permute.xlu0 %2435
    %v2438 = vmul.f32 %v2420, %v2436
    %2440 = vrot.lane.b32.xlu0 %v2336, 32
    %v2441 = vpop.permute.xlu0 %2440
    %v2442 = vsel %vm236, %v2441, 0
    %2444 = vmatprep.subr.mxu0 0.0
    %2445 = vmatpush1.msra.mxu0 0.0
    %2446 = vmatprep.subr.mxu0 0.0
    %2447 = vmatpush1.msra.mxu0 0.0
    %2448 = vmatprep.subr.mxu0 0.0
    %2449 = vmatpush1.msra.mxu0 0.0
    %2450 = vmatprep.subr.mxu0 0.0
    %2451 = vmatpush1.msra.mxu0 0.0
    %2452 = vmatprep.subr.mxu0 0.0
    %2453 = vmatpush1.msra.mxu0 0.0
    %2454 = vmatprep.subr.mxu0 0.0
    %2455 = vmatpush1.msra.mxu0 0.0
    %2456 = vmatprep.subr.mxu0 0.0
    %2457 = vmatpush1.msra.mxu0 0.0
    %2458 = vmatprep.subr.mxu0 0.0
    %2459 = vmatpush1.msra.mxu0 0.0
    %2460 = vmatprep.subr.mxu0 0.0
    %2461 = vmatpush1.msra.mxu0 0.0
    %2462 = vmatprep.subr.mxu0 0.0
    %2463 = vmatpush1.msra.mxu0 0.0
    %2464 = vmatprep.subr.mxu0 0.0
    %2465 = vmatpush1.msra.mxu0 0.0
    %2466 = vmatprep.subr.mxu0 0.0
    %2467 = vmatpush1.msra.mxu0 0.0
    %2468 = vmatprep.subr.mxu0 0.0
    %2469 = vmatpush1.msra.mxu0 %v131
    %2470 = vmatprep.subr.mxu0 0.0
    %2471 = vmatpush1.msra.mxu0 %v130
    %2472 = vmatprep.subr.mxu0 0.0
    %2473 = vmatpush1.msra.mxu0 %v129
    %2474 = vmatprep.subr.mxu0 0.0
    %2475 = vmatpush1.msra.mxu0 %v128
    %2476 = vmatprep.subr.mxu0 0.0
    %2477 = vmatpush2.msra.mxu0 0.0
    %2478 = vmatprep.subr.mxu0 0.0
    %2479 = vmatpush2.msra.mxu0 0.0
    %2480 = vmatprep.subr.mxu0 0.0
    %2481 = vmatpush2.msra.mxu0 0.0
    %2482 = vmatprep.subr.mxu0 0.0
    %2483 = vmatpush2.msra.mxu0 0.0
    %2484 = vmatprep.subr.mxu0 0.0
    %2485 = vmatpush2.msra.mxu0 0.0
    %2486 = vmatprep.subr.mxu0 0.0
    %2487 = vmatpush2.msra.mxu0 0.0
    %2488 = vmatprep.subr.mxu0 0.0
    %2489 = vmatpush2.msra.mxu0 0.0
    %2490 = vmatprep.subr.mxu0 0.0
    %2491 = vmatpush2.msra.mxu0 0.0
    %2492 = vmatprep.subr.mxu0 0.0
    %2493 = vmatpush2.msra.mxu0 0.0
    %2494 = vmatprep.subr.mxu0 0.0
    %2495 = vmatpush2.msra.mxu0 0.0
    %2496 = vmatprep.subr.mxu0 0.0
    %2497 = vmatpush2.msra.mxu0 0.0
    %2498 = vmatprep.subr.mxu0 0.0
    %2499 = vmatpush2.msra.mxu0 0.0
    %2500 = vmatprep.subr.mxu0 0.0
    %2501 = vmatpush2.msra.mxu0 0.0
    %2502 = vmatprep.subr.mxu0 0.0
    %2503 = vmatpush2.msra.mxu0 0.0
    %2504 = vmatprep.subr.mxu0 0.0
    %2505 = vmatpush2.msra.mxu0 0.0
    %2506 = vmatprep.subr.mxu0 0.0
    %2507 = vmatpush2.msra.mxu0 0.0
    %2508 = vmatprep.mubr.f32.mxu0 0.0
    %2509 = vmatmul.mubr.f32.gmra.mxu0 %v2442
    %v2510 = vpop.f32.mrf.mxu0
    %v2511 = vadd.f32 0.0, %v2510
    %v2512 = vpop.f32.mrf.mxu0
    %2513 = vdwg.mxu0
    %2515 = vrot.lane.b32.xlu0 %v2438, 32
    %v2516 = vpop.permute.xlu0 %2515
    %v2517 = vsel %vm236, %v2516, 0
    %2519 = vmatprep.subr.mxu0 0.0
    %2520 = vmatpush1.msra.mxu0 0.0
    %2521 = vmatprep.subr.mxu0 0.0
    %2522 = vmatpush1.msra.mxu0 0.0
    %2523 = vmatprep.subr.mxu0 0.0
    %2524 = vmatpush1.msra.mxu0 0.0
    %2525 = vmatprep.subr.mxu0 0.0
    %2526 = vmatpush1.msra.mxu0 0.0
    %2527 = vmatprep.subr.mxu0 0.0
    %2528 = vmatpush1.msra.mxu0 0.0
    %2529 = vmatprep.subr.mxu0 0.0
    %2530 = vmatpush1.msra.mxu0 0.0
    %2531 = vmatprep.subr.mxu0 0.0
    %2532 = vmatpush1.msra.mxu0 0.0
    %2533 = vmatprep.subr.mxu0 0.0
    %2534 = vmatpush1.msra.mxu0 0.0
    %2535 = vmatprep.subr.mxu0 0.0
    %2536 = vmatpush1.msra.mxu0 0.0
    %2537 = vmatprep.subr.mxu0 0.0
    %2538 = vmatpush1.msra.mxu0 0.0
    %2539 = vmatprep.subr.mxu0 0.0
    %2540 = vmatpush1.msra.mxu0 0.0
    %2541 = vmatprep.subr.mxu0 0.0
    %2542 = vmatpush1.msra.mxu0 0.0
    %2543 = vmatprep.subr.mxu0 0.0
    %2544 = vmatpush1.msra.mxu0 %v127
    %2545 = vmatprep.subr.mxu0 0.0
    %2546 = vmatpush1.msra.mxu0 %v126
    %2547 = vmatprep.subr.mxu0 0.0
    %2548 = vmatpush1.msra.mxu0 %v125
    %2549 = vmatprep.subr.mxu0 0.0
    %2550 = vmatpush1.msra.mxu0 %v124
    %2551 = vmatprep.subr.mxu0 0.0
    %2552 = vmatpush2.msra.mxu0 0.0
    %2553 = vmatprep.subr.mxu0 0.0
    %2554 = vmatpush2.msra.mxu0 0.0
    %2555 = vmatprep.subr.mxu0 0.0
    %2556 = vmatpush2.msra.mxu0 0.0
    %2557 = vmatprep.subr.mxu0 0.0
    %2558 = vmatpush2.msra.mxu0 0.0
    %2559 = vmatprep.subr.mxu0 0.0
    %2560 = vmatpush2.msra.mxu0 0.0
    %2561 = vmatprep.subr.mxu0 0.0
    %2562 = vmatpush2.msra.mxu0 0.0
    %2563 = vmatprep.subr.mxu0 0.0
    %2564 = vmatpush2.msra.mxu0 0.0
    %2565 = vmatprep.subr.mxu0 0.0
    %2566 = vmatpush2.msra.mxu0 0.0
    %2567 = vmatprep.subr.mxu0 0.0
    %2568 = vmatpush2.msra.mxu0 0.0
    %2569 = vmatprep.subr.mxu0 0.0
    %2570 = vmatpush2.msra.mxu0 0.0
    %2571 = vmatprep.subr.mxu0 0.0
    %2572 = vmatpush2.msra.mxu0 0.0
    %2573 = vmatprep.subr.mxu0 0.0
    %2574 = vmatpush2.msra.mxu0 0.0
    %2575 = vmatprep.subr.mxu0 0.0
    %2576 = vmatpush2.msra.mxu0 0.0
    %2577 = vmatprep.subr.mxu0 0.0
    %2578 = vmatpush2.msra.mxu0 0.0
    %2579 = vmatprep.subr.mxu0 0.0
    %2580 = vmatpush2.msra.mxu0 0.0
    %2581 = vmatprep.subr.mxu0 0.0
    %2582 = vmatpush2.msra.mxu0 0.0
    %2583 = vmatprep.mubr.f32.mxu0 0.0
    %2584 = vmatmul.mubr.f32.gmra.mxu0 %v2517
    %v2585 = vpop.f32.mrf.mxu0
    %v2586 = vadd.f32 %v2511, %v2585
    %v2587 = vpop.f32.mrf.mxu0
    %2588 = vdwg.mxu0
    %v2589 = vadd.f32 %v2586, %v1202
    %v2590 = vxor.u32 %v2589, 2147483648
    %v2591 = vmul.f32 %v2590, 1.442695
    %v2592 = vpow.pop %v2591
    %v2593 = vadd.f32 %v2592, 1.0
    %v2594 = vrcp.pop %v2593
    %v2595 = vmul.f32 1.0, %v2594
    %v2596 = vtanh.pop %v2589
    %v2597 = vmul.f32 %v2595, %v2330
    %2599 = vrot.lane.b32.xlu0 %v2596, 64
    %v2600 = vpop.permute.xlu0 %2599
    %v2602 = vmul.f32 %v2595, %v2600
    %2604 = vrot.lane.b32.xlu0 %v2602, 32
    %v2605 = vpop.permute.xlu0 %2604
    %v2607 = vadd.f32 %v2597, %v2605
    %v2608 = vtanh.pop %v2607
    %2610 = vrot.lane.b32.xlu0 %v2608, 64
    %v2611 = vpop.permute.xlu0 %2610
    %v2613 = vmul.f32 %v2595, %v2611
    %vm2614 = vcmp.eq.s32.totalorder %v138, 6
    %v2615 = vsel %vm2614, 1, 0
    %2616 = vset.pattern.permute.xlu0 0
    %2617 = vperm.xlu0 %2616, %v2615
    %v2618 = vpop.permute.xlu0 %2617
    %vm2619 = vcmp.eq.s32.totalorder %v2618, 1
    %v2620 = vsel %vm2619, %v2613, %v2343
    %2621 = vmatprep.subr.mxu0 0.0
    %2622 = vmatpush1.msra.mxu0 0.0
    %2623 = vmatprep.subr.mxu0 0.0
    %2624 = vmatpush1.msra.mxu0 0.0
    %2625 = vmatprep.subr.mxu0 0.0
    %2626 = vmatpush1.msra.mxu0 0.0
    %2627 = vmatprep.subr.mxu0 0.0
    %2628 = vmatpush1.msra.mxu0 0.0
    %2629 = vmatprep.subr.mxu0 0.0
    %2630 = vmatpush1.msra.mxu0 0.0
    %2631 = vmatprep.subr.mxu0 0.0
    %2632 = vmatpush1.msra.mxu0 0.0
    %2633 = vmatprep.subr.mxu0 0.0
    %2634 = vmatpush1.msra.mxu0 0.0
    %2635 = vmatprep.subr.mxu0 0.0
    %2636 = vmatpush1.msra.mxu0 0.0
    %2637 = vmatprep.subr.mxu0 0.0
    %2638 = vmatpush1.msra.mxu0 0.0
    %2639 = vmatprep.subr.mxu0 0.0
    %2640 = vmatpush1.msra.mxu0 0.0
    %2641 = vmatprep.subr.mxu0 0.0
    %2642 = vmatpush1.msra.mxu0 0.0
    %2643 = vmatprep.subr.mxu0 0.0
    %2644 = vmatpush1.msra.mxu0 0.0
    %2645 = vmatprep.subr.mxu0 0.0
    %2646 = vmatpush1.msra.mxu0 %v122
    %2647 = vmatprep.subr.mxu0 0.0
    %2648 = vmatpush1.msra.mxu0 %v121
    %2649 = vmatprep.subr.mxu0 0.0
    %2650 = vmatpush1.msra.mxu0 %v120
    %2651 = vmatprep.subr.mxu0 0.0
    %2652 = vmatpush1.msra.mxu0 %v119
    %2653 = vmatprep.subr.mxu0 0.0
    %2654 = vmatpush2.msra.mxu0 0.0
    %2655 = vmatprep.subr.mxu0 0.0
    %2656 = vmatpush2.msra.mxu0 0.0
    %2657 = vmatprep.subr.mxu0 0.0
    %2658 = vmatpush2.msra.mxu0 0.0
    %2659 = vmatprep.subr.mxu0 0.0
    %2660 = vmatpush2.msra.mxu0 0.0
    %2661 = vmatprep.subr.mxu0 0.0
    %2662 = vmatpush2.msra.mxu0 0.0
    %2663 = vmatprep.subr.mxu0 0.0
    %2664 = vmatpush2.msra.mxu0 0.0
    %2665 = vmatprep.subr.mxu0 0.0
    %2666 = vmatpush2.msra.mxu0 0.0
    %2667 = vmatprep.subr.mxu0 0.0
    %2668 = vmatpush2.msra.mxu0 0.0
    %2669 = vmatprep.subr.mxu0 0.0
    %2670 = vmatpush2.msra.mxu0 0.0
    %2671 = vmatprep.subr.mxu0 0.0
    %2672 = vmatpush2.msra.mxu0 0.0
    %2673 = vmatprep.subr.mxu0 0.0
    %2674 = vmatpush2.msra.mxu0 0.0
    %2675 = vmatprep.subr.mxu0 0.0
    %2676 = vmatpush2.msra.mxu0 0.0
    %2677 = vmatprep.subr.mxu0 0.0
    %2678 = vmatpush2.msra.mxu0 0.0
    %2679 = vmatprep.subr.mxu0 0.0
    %2680 = vmatpush2.msra.mxu0 0.0
    %2681 = vmatprep.subr.mxu0 0.0
    %2682 = vmatpush2.msra.mxu0 0.0
    %2683 = vmatprep.subr.mxu0 0.0
    %2684 = vmatpush2.msra.mxu0 0.0
    %2685 = vmatprep.mubr.f32.mxu0 0.0
    %2686 = vmatmul.mubr.f32.gmra.mxu0 %v2517
    %v2687 = vpop.f32.mrf.mxu0
    %v2688 = vadd.f32 0.0, %v2687
    %v2689 = vpop.f32.mrf.mxu0
    %2690 = vdwg.mxu0
    %v2691 = vadd.f32 %v870, %v2688
    %v2692 = vxor.u32 %v2691, 2147483648
    %v2693 = vmul.f32 %v2692, 1.442695
    %v2694 = vpow.pop %v2693
    %v2695 = vadd.f32 %v2694, 1.0
    %v2696 = vrcp.pop %v2695
    %v2697 = vmul.f32 1.0, %v2696
    %v2698 = vtanh.pop %v2691
    %v2699 = vmul.f32 %v2697, %v2432
    %2701 = vrot.lane.b32.xlu0 %v2698, 64
    %v2702 = vpop.permute.xlu0 %2701
    %v2704 = vmul.f32 %v2697, %v2702
    %2706 = vrot.lane.b32.xlu0 %v2704, 32
    %v2707 = vpop.permute.xlu0 %2706
    %v2709 = vadd.f32 %v2699, %v2707
    %v2710 = vtanh.pop %v2709
    %2712 = vrot.lane.b32.xlu0 %v2710, 64
    %v2713 = vpop.permute.xlu0 %2712
    %v2715 = vmul.f32 %v2697, %v2713
    %2717 = vrot.lane.b32.xlu0 %v2613, 32
    %v2718 = vpop.permute.xlu0 %2717
    %v2719 = vsel %vm236, %v2718, 0
    %2721 = vmatprep.subr.mxu0 0.0
    %2722 = vmatpush1.msra.mxu0 0.0
    %2723 = vmatprep.subr.mxu0 0.0
    %2724 = vmatpush1.msra.mxu0 0.0
    %2725 = vmatprep.subr.mxu0 0.0
    %2726 = vmatpush1.msra.mxu0 0.0
    %2727 = vmatprep.subr.mxu0 0.0
    %2728 = vmatpush1.msra.mxu0 0.0
    %2729 = vmatprep.subr.mxu0 0.0
    %2730 = vmatpush1.msra.mxu0 0.0
    %2731 = vmatprep.subr.mxu0 0.0
    %2732 = vmatpush1.msra.mxu0 0.0
    %2733 = vmatprep.subr.mxu0 0.0
    %2734 = vmatpush1.msra.mxu0 0.0
    %2735 = vmatprep.subr.mxu0 0.0
    %2736 = vmatpush1.msra.mxu0 0.0
    %2737 = vmatprep.subr.mxu0 0.0
    %2738 = vmatpush1.msra.mxu0 0.0
    %2739 = vmatprep.subr.mxu0 0.0
    %2740 = vmatpush1.msra.mxu0 0.0
    %2741 = vmatprep.subr.mxu0 0.0
    %2742 = vmatpush1.msra.mxu0 0.0
    %2743 = vmatprep.subr.mxu0 0.0
    %2744 = vmatpush1.msra.mxu0 0.0
    %2745 = vmatprep.subr.mxu0 0.0
    %2746 = vmatpush1.msra.mxu0 %v131
    %2747 = vmatprep.subr.mxu0 0.0
    %2748 = vmatpush1.msra.mxu0 %v130
    %2749 = vmatprep.subr.mxu0 0.0
    %2750 = vmatpush1.msra.mxu0 %v129
    %2751 = vmatprep.subr.mxu0 0.0
    %2752 = vmatpush1.msra.mxu0 %v128
    %2753 = vmatprep.subr.mxu0 0.0
    %2754 = vmatpush2.msra.mxu0 0.0
    %2755 = vmatprep.subr.mxu0 0.0
    %2756 = vmatpush2.msra.mxu0 0.0
    %2757 = vmatprep.subr.mxu0 0.0
    %2758 = vmatpush2.msra.mxu0 0.0
    %2759 = vmatprep.subr.mxu0 0.0
    %2760 = vmatpush2.msra.mxu0 0.0
    %2761 = vmatprep.subr.mxu0 0.0
    %2762 = vmatpush2.msra.mxu0 0.0
    %2763 = vmatprep.subr.mxu0 0.0
    %2764 = vmatpush2.msra.mxu0 0.0
    %2765 = vmatprep.subr.mxu0 0.0
    %2766 = vmatpush2.msra.mxu0 0.0
    %2767 = vmatprep.subr.mxu0 0.0
    %2768 = vmatpush2.msra.mxu0 0.0
    %2769 = vmatprep.subr.mxu0 0.0
    %2770 = vmatpush2.msra.mxu0 0.0
    %2771 = vmatprep.subr.mxu0 0.0
    %2772 = vmatpush2.msra.mxu0 0.0
    %2773 = vmatprep.subr.mxu0 0.0
    %2774 = vmatpush2.msra.mxu0 0.0
    %2775 = vmatprep.subr.mxu0 0.0
    %2776 = vmatpush2.msra.mxu0 0.0
    %2777 = vmatprep.subr.mxu0 0.0
    %2778 = vmatpush2.msra.mxu0 0.0
    %2779 = vmatprep.subr.mxu0 0.0
    %2780 = vmatpush2.msra.mxu0 0.0
    %2781 = vmatprep.subr.mxu0 0.0
    %2782 = vmatpush2.msra.mxu0 0.0
    %2783 = vmatprep.subr.mxu0 0.0
    %2784 = vmatpush2.msra.mxu0 0.0
    %2785 = vmatprep.mubr.f32.mxu0 0.0
    %2786 = vmatmul.mubr.f32.gmra.mxu0 %v2719
    %v2787 = vpop.f32.mrf.mxu0
    %v2788 = vadd.f32 0.0, %v2787
    %v2789 = vpop.f32.mrf.mxu0
    %2790 = vdwg.mxu0
    %2792 = vrot.lane.b32.xlu0 %v2715, 32
    %v2793 = vpop.permute.xlu0 %2792
    %v2794 = vsel %vm236, %v2793, 0
    %2796 = vmatprep.subr.mxu0 0.0
    %2797 = vmatpush1.msra.mxu0 0.0
    %2798 = vmatprep.subr.mxu0 0.0
    %2799 = vmatpush1.msra.mxu0 0.0
    %2800 = vmatprep.subr.mxu0 0.0
    %2801 = vmatpush1.msra.mxu0 0.0
    %2802 = vmatprep.subr.mxu0 0.0
    %2803 = vmatpush1.msra.mxu0 0.0
    %2804 = vmatprep.subr.mxu0 0.0
    %2805 = vmatpush1.msra.mxu0 0.0
    %2806 = vmatprep.subr.mxu0 0.0
    %2807 = vmatpush1.msra.mxu0 0.0
    %2808 = vmatprep.subr.mxu0 0.0
    %2809 = vmatpush1.msra.mxu0 0.0
    %2810 = vmatprep.subr.mxu0 0.0
    %2811 = vmatpush1.msra.mxu0 0.0
    %2812 = vmatprep.subr.mxu0 0.0
    %2813 = vmatpush1.msra.mxu0 0.0
    %2814 = vmatprep.subr.mxu0 0.0
    %2815 = vmatpush1.msra.mxu0 0.0
    %2816 = vmatprep.subr.mxu0 0.0
    %2817 = vmatpush1.msra.mxu0 0.0
    %2818 = vmatprep.subr.mxu0 0.0
    %2819 = vmatpush1.msra.mxu0 0.0
    %2820 = vmatprep.subr.mxu0 0.0
    %2821 = vmatpush1.msra.mxu0 %v127
    %2822 = vmatprep.subr.mxu0 0.0
    %2823 = vmatpush1.msra.mxu0 %v126
    %2824 = vmatprep.subr.mxu0 0.0
    %2825 = vmatpush1.msra.mxu0 %v125
    %2826 = vmatprep.subr.mxu0 0.0
    %2827 = vmatpush1.msra.mxu0 %v124
    %2828 = vmatprep.subr.mxu0 0.0
    %2829 = vmatpush2.msra.mxu0 0.0
    %2830 = vmatprep.subr.mxu0 0.0
    %2831 = vmatpush2.msra.mxu0 0.0
    %2832 = vmatprep.subr.mxu0 0.0
    %2833 = vmatpush2.msra.mxu0 0.0
    %2834 = vmatprep.subr.mxu0 0.0
    %2835 = vmatpush2.msra.mxu0 0.0
    %2836 = vmatprep.subr.mxu0 0.0
    %2837 = vmatpush2.msra.mxu0 0.0
    %2838 = vmatprep.subr.mxu0 0.0
    %2839 = vmatpush2.msra.mxu0 0.0
    %2840 = vmatprep.subr.mxu0 0.0
    %2841 = vmatpush2.msra.mxu0 0.0
    %2842 = vmatprep.subr.mxu0 0.0
    %2843 = vmatpush2.msra.mxu0 0.0
    %2844 = vmatprep.subr.mxu0 0.0
    %2845 = vmatpush2.msra.mxu0 0.0
    %2846 = vmatprep.subr.mxu0 0.0
    %2847 = vmatpush2.msra.mxu0 0.0
    %2848 = vmatprep.subr.mxu0 0.0
    %2849 = vmatpush2.msra.mxu0 0.0
    %2850 = vmatprep.subr.mxu0 0.0
    %2851 = vmatpush2.msra.mxu0 0.0
    %2852 = vmatprep.subr.mxu0 0.0
    %2853 = vmatpush2.msra.mxu0 0.0
    %2854 = vmatprep.subr.mxu0 0.0
    %2855 = vmatpush2.msra.mxu0 0.0
    %2856 = vmatprep.subr.mxu0 0.0
    %2857 = vmatpush2.msra.mxu0 0.0
    %2858 = vmatprep.subr.mxu0 0.0
    %2859 = vmatpush2.msra.mxu0 0.0
    %2860 = vmatprep.mubr.f32.mxu0 0.0
    %2861 = vmatmul.mubr.f32.gmra.mxu0 %v2794
    %v2862 = vpop.f32.mrf.mxu0
    %v2863 = vadd.f32 %v2788, %v2862
    %v2864 = vpop.f32.mrf.mxu0
    %2865 = vdwg.mxu0
    %v2866 = vadd.f32 %v2863, %v1202
    %v2867 = vxor.u32 %v2866, 2147483648
    %v2868 = vmul.f32 %v2867, 1.442695
    %v2869 = vpow.pop %v2868
    %v2870 = vadd.f32 %v2869, 1.0
    %v2871 = vrcp.pop %v2870
    %v2872 = vmul.f32 1.0, %v2871
    %v2873 = vtanh.pop %v2866
    %v2874 = vmul.f32 %v2872, %v2607
    %2876 = vrot.lane.b32.xlu0 %v2873, 64
    %v2877 = vpop.permute.xlu0 %2876
    %v2879 = vmul.f32 %v2872, %v2877
    %2881 = vrot.lane.b32.xlu0 %v2879, 32
    %v2882 = vpop.permute.xlu0 %2881
    %v2884 = vadd.f32 %v2874, %v2882
    %v2885 = vtanh.pop %v2884
    %2887 = vrot.lane.b32.xlu0 %v2885, 64
    %v2888 = vpop.permute.xlu0 %2887
    %v2890 = vmul.f32 %v2872, %v2888
    %vm2891 = vcmp.eq.s32.totalorder %v138, 7
    %v2892 = vsel %vm2891, 1, 0
    %2893 = vset.pattern.permute.xlu0 0
    %2894 = vperm.xlu0 %2893, %v2892
    %v2895 = vpop.permute.xlu0 %2894
    %vm2896 = vcmp.eq.s32.totalorder %v2895, 1
    %v2897 = vsel %vm2896, %v2890, %v2620
    %2898 = vmatprep.subr.mxu0 0.0
    %2899 = vmatpush1.msra.mxu0 0.0
    %2900 = vmatprep.subr.mxu0 0.0
    %2901 = vmatpush1.msra.mxu0 0.0
    %2902 = vmatprep.subr.mxu0 0.0
    %2903 = vmatpush1.msra.mxu0 0.0
    %2904 = vmatprep.subr.mxu0 0.0
    %2905 = vmatpush1.msra.mxu0 0.0
    %2906 = vmatprep.subr.mxu0 0.0
    %2907 = vmatpush1.msra.mxu0 0.0
    %2908 = vmatprep.subr.mxu0 0.0
    %2909 = vmatpush1.msra.mxu0 0.0
    %2910 = vmatprep.subr.mxu0 0.0
    %2911 = vmatpush1.msra.mxu0 0.0
    %2912 = vmatprep.subr.mxu0 0.0
    %2913 = vmatpush1.msra.mxu0 0.0
    %2914 = vmatprep.subr.mxu0 0.0
    %2915 = vmatpush1.msra.mxu0 0.0
    %2916 = vmatprep.subr.mxu0 0.0
    %2917 = vmatpush1.msra.mxu0 0.0
    %2918 = vmatprep.subr.mxu0 0.0
    %2919 = vmatpush1.msra.mxu0 0.0
    %2920 = vmatprep.subr.mxu0 0.0
    %2921 = vmatpush1.msra.mxu0 0.0
    %2922 = vmatprep.subr.mxu0 0.0
    %2923 = vmatpush1.msra.mxu0 %v122
    %2924 = vmatprep.subr.mxu0 0.0
    %2925 = vmatpush1.msra.mxu0 %v121
    %2926 = vmatprep.subr.mxu0 0.0
    %2927 = vmatpush1.msra.mxu0 %v120
    %2928 = vmatprep.subr.mxu0 0.0
    %2929 = vmatpush1.msra.mxu0 %v119
    %2930 = vmatprep.subr.mxu0 0.0
    %2931 = vmatpush2.msra.mxu0 0.0
    %2932 = vmatprep.subr.mxu0 0.0
    %2933 = vmatpush2.msra.mxu0 0.0
    %2934 = vmatprep.subr.mxu0 0.0
    %2935 = vmatpush2.msra.mxu0 0.0
    %2936 = vmatprep.subr.mxu0 0.0
    %2937 = vmatpush2.msra.mxu0 0.0
    %2938 = vmatprep.subr.mxu0 0.0
    %2939 = vmatpush2.msra.mxu0 0.0
    %2940 = vmatprep.subr.mxu0 0.0
    %2941 = vmatpush2.msra.mxu0 0.0
    %2942 = vmatprep.subr.mxu0 0.0
    %2943 = vmatpush2.msra.mxu0 0.0
    %2944 = vmatprep.subr.mxu0 0.0
    %2945 = vmatpush2.msra.mxu0 0.0
    %2946 = vmatprep.subr.mxu0 0.0
    %2947 = vmatpush2.msra.mxu0 0.0
    %2948 = vmatprep.subr.mxu0 0.0
    %2949 = vmatpush2.msra.mxu0 0.0
    %2950 = vmatprep.subr.mxu0 0.0
    %2951 = vmatpush2.msra.mxu0 0.0
    %2952 = vmatprep.subr.mxu0 0.0
    %2953 = vmatpush2.msra.mxu0 0.0
    %2954 = vmatprep.subr.mxu0 0.0
    %2955 = vmatpush2.msra.mxu0 0.0
    %2956 = vmatprep.subr.mxu0 0.0
    %2957 = vmatpush2.msra.mxu0 0.0
    %2958 = vmatprep.subr.mxu0 0.0
    %2959 = vmatpush2.msra.mxu0 0.0
    %2960 = vmatprep.subr.mxu0 0.0
    %2961 = vmatpush2.msra.mxu0 0.0
    %2962 = vmatprep.mubr.f32.mxu0 0.0
    %2963 = vmatmul.mubr.f32.gmra.mxu0 %v2794
    %v2964 = vpop.f32.mrf.mxu0
    %v2965 = vadd.f32 0.0, %v2964
    %v2966 = vpop.f32.mrf.mxu0
    %2967 = vdwg.mxu0
    %v2968 = vadd.f32 %v949, %v2965
    %v2969 = vxor.u32 %v2968, 2147483648
    %v2970 = vmul.f32 %v2969, 1.442695
    %v2971 = vpow.pop %v2970
    %v2972 = vadd.f32 %v2971, 1.0
    %v2973 = vrcp.pop %v2972
    %v2974 = vmul.f32 1.0, %v2973
    %v2975 = vtanh.pop %v2968
    %v2976 = vmul.f32 %v2974, %v2709
    %2978 = vrot.lane.b32.xlu0 %v2975, 64
    %v2979 = vpop.permute.xlu0 %2978
    %v2981 = vmul.f32 %v2974, %v2979
    %2983 = vrot.lane.b32.xlu0 %v2981, 32
    %v2984 = vpop.permute.xlu0 %2983
    %v2986 = vadd.f32 %v2976, %v2984
    %v2987 = vtanh.pop %v2986
    %2989 = vrot.lane.b32.xlu0 %v2987, 64
    %v2990 = vpop.permute.xlu0 %2989
    %v2992 = vmul.f32 %v2974, %v2990
    %2994 = vrot.lane.b32.xlu0 %v2890, 32
    %v2995 = vpop.permute.xlu0 %2994
    %v2996 = vsel %vm236, %v2995, 0
    %2998 = vmatprep.subr.mxu0 0.0
    %2999 = vmatpush1.msra.mxu0 0.0
    %3000 = vmatprep.subr.mxu0 0.0
    %3001 = vmatpush1.msra.mxu0 0.0
    %3002 = vmatprep.subr.mxu0 0.0
    %3003 = vmatpush1.msra.mxu0 0.0
    %3004 = vmatprep.subr.mxu0 0.0
    %3005 = vmatpush1.msra.mxu0 0.0
    %3006 = vmatprep.subr.mxu0 0.0
    %3007 = vmatpush1.msra.mxu0 0.0
    %3008 = vmatprep.subr.mxu0 0.0
    %3009 = vmatpush1.msra.mxu0 0.0
    %3010 = vmatprep.subr.mxu0 0.0
    %3011 = vmatpush1.msra.mxu0 0.0
    %3012 = vmatprep.subr.mxu0 0.0
    %3013 = vmatpush1.msra.mxu0 0.0
    %3014 = vmatprep.subr.mxu0 0.0
    %3015 = vmatpush1.msra.mxu0 0.0
    %3016 = vmatprep.subr.mxu0 0.0
    %3017 = vmatpush1.msra.mxu0 0.0
    %3018 = vmatprep.subr.mxu0 0.0
    %3019 = vmatpush1.msra.mxu0 0.0
    %3020 = vmatprep.subr.mxu0 0.0
    %3021 = vmatpush1.msra.mxu0 0.0
    %3022 = vmatprep.subr.mxu0 0.0
    %3023 = vmatpush1.msra.mxu0 %v131
    %3024 = vmatprep.subr.mxu0 0.0
    %3025 = vmatpush1.msra.mxu0 %v130
    %3026 = vmatprep.subr.mxu0 0.0
    %3027 = vmatpush1.msra.mxu0 %v129
    %3028 = vmatprep.subr.mxu0 0.0
    %3029 = vmatpush1.msra.mxu0 %v128
    %3030 = vmatprep.subr.mxu0 0.0
    %3031 = vmatpush2.msra.mxu0 0.0
    %3032 = vmatprep.subr.mxu0 0.0
    %3033 = vmatpush2.msra.mxu0 0.0
    %3034 = vmatprep.subr.mxu0 0.0
    %3035 = vmatpush2.msra.mxu0 0.0
    %3036 = vmatprep.subr.mxu0 0.0
    %3037 = vmatpush2.msra.mxu0 0.0
    %3038 = vmatprep.subr.mxu0 0.0
    %3039 = vmatpush2.msra.mxu0 0.0
    %3040 = vmatprep.subr.mxu0 0.0
    %3041 = vmatpush2.msra.mxu0 0.0
    %3042 = vmatprep.subr.mxu0 0.0
    %3043 = vmatpush2.msra.mxu0 0.0
    %3044 = vmatprep.subr.mxu0 0.0
    %3045 = vmatpush2.msra.mxu0 0.0
    %3046 = vmatprep.subr.mxu0 0.0
    %3047 = vmatpush2.msra.mxu0 0.0
    %3048 = vmatprep.subr.mxu0 0.0
    %3049 = vmatpush2.msra.mxu0 0.0
    %3050 = vmatprep.subr.mxu0 0.0
    %3051 = vmatpush2.msra.mxu0 0.0
    %3052 = vmatprep.subr.mxu0 0.0
    %3053 = vmatpush2.msra.mxu0 0.0
    %3054 = vmatprep.subr.mxu0 0.0
    %3055 = vmatpush2.msra.mxu0 0.0
    %3056 = vmatprep.subr.mxu0 0.0
    %3057 = vmatpush2.msra.mxu0 0.0
    %3058 = vmatprep.subr.mxu0 0.0
    %3059 = vmatpush2.msra.mxu0 0.0
    %3060 = vmatprep.subr.mxu0 0.0
    %3061 = vmatpush2.msra.mxu0 0.0
    %3062 = vmatprep.mubr.f32.mxu0 0.0
    %3063 = vmatmul.mubr.f32.gmra.mxu0 %v2996
    %v3064 = vpop.f32.mrf.mxu0
    %v3065 = vadd.f32 0.0, %v3064
    %v3066 = vpop.f32.mrf.mxu0
    %3067 = vdwg.mxu0
    %3069 = vrot.lane.b32.xlu0 %v2992, 32
    %v3070 = vpop.permute.xlu0 %3069
    %v3071 = vsel %vm236, %v3070, 0
    %3073 = vmatprep.subr.mxu0 0.0
    %3074 = vmatpush1.msra.mxu0 0.0
    %3075 = vmatprep.subr.mxu0 0.0
    %3076 = vmatpush1.msra.mxu0 0.0
    %3077 = vmatprep.subr.mxu0 0.0
    %3078 = vmatpush1.msra.mxu0 0.0
    %3079 = vmatprep.subr.mxu0 0.0
    %3080 = vmatpush1.msra.mxu0 0.0
    %3081 = vmatprep.subr.mxu0 0.0
    %3082 = vmatpush1.msra.mxu0 0.0
    %3083 = vmatprep.subr.mxu0 0.0
    %3084 = vmatpush1.msra.mxu0 0.0
    %3085 = vmatprep.subr.mxu0 0.0
    %3086 = vmatpush1.msra.mxu0 0.0
    %3087 = vmatprep.subr.mxu0 0.0
    %3088 = vmatpush1.msra.mxu0 0.0
    %3089 = vmatprep.subr.mxu0 0.0
    %3090 = vmatpush1.msra.mxu0 0.0
    %3091 = vmatprep.subr.mxu0 0.0
    %3092 = vmatpush1.msra.mxu0 0.0
    %3093 = vmatprep.subr.mxu0 0.0
    %3094 = vmatpush1.msra.mxu0 0.0
    %3095 = vmatprep.subr.mxu0 0.0
    %3096 = vmatpush1.msra.mxu0 0.0
    %3097 = vmatprep.subr.mxu0 0.0
    %3098 = vmatpush1.msra.mxu0 %v127
    %3099 = vmatprep.subr.mxu0 0.0
    %3100 = vmatpush1.msra.mxu0 %v126
    %3101 = vmatprep.subr.mxu0 0.0
    %3102 = vmatpush1.msra.mxu0 %v125
    %3103 = vmatprep.subr.mxu0 0.0
    %3104 = vmatpush1.msra.mxu0 %v124
    %3105 = vmatprep.subr.mxu0 0.0
    %3106 = vmatpush2.msra.mxu0 0.0
    %3107 = vmatprep.subr.mxu0 0.0
    %3108 = vmatpush2.msra.mxu0 0.0
    %3109 = vmatprep.subr.mxu0 0.0
    %3110 = vmatpush2.msra.mxu0 0.0
    %3111 = vmatprep.subr.mxu0 0.0
    %3112 = vmatpush2.msra.mxu0 0.0
    %3113 = vmatprep.subr.mxu0 0.0
    %3114 = vmatpush2.msra.mxu0 0.0
    %3115 = vmatprep.subr.mxu0 0.0
    %3116 = vmatpush2.msra.mxu0 0.0
    %3117 = vmatprep.subr.mxu0 0.0
    %3118 = vmatpush2.msra.mxu0 0.0
    %3119 = vmatprep.subr.mxu0 0.0
    %3120 = vmatpush2.msra.mxu0 0.0
    %3121 = vmatprep.subr.mxu0 0.0
    %3122 = vmatpush2.msra.mxu0 0.0
    %3123 = vmatprep.subr.mxu0 0.0
    %3124 = vmatpush2.msra.mxu0 0.0
    %3125 = vmatprep.subr.mxu0 0.0
    %3126 = vmatpush2.msra.mxu0 0.0
    %3127 = vmatprep.subr.mxu0 0.0
    %3128 = vmatpush2.msra.mxu0 0.0
    %3129 = vmatprep.subr.mxu0 0.0
    %3130 = vmatpush2.msra.mxu0 0.0
    %3131 = vmatprep.subr.mxu0 0.0
    %3132 = vmatpush2.msra.mxu0 0.0
    %3133 = vmatprep.subr.mxu0 0.0
    %3134 = vmatpush2.msra.mxu0 0.0
    %3135 = vmatprep.subr.mxu0 0.0
    %3136 = vmatpush2.msra.mxu0 0.0
    %3137 = vmatprep.mubr.f32.mxu0 0.0
    %3138 = vmatmul.mubr.f32.gmra.mxu0 %v3071
    %v3139 = vpop.f32.mrf.mxu0
    %v3140 = vadd.f32 %v3065, %v3139
    %v3141 = vpop.f32.mrf.mxu0
    %3142 = vdwg.mxu0
    %v3143 = vadd.f32 %v3140, %v1202
    %v3144 = vxor.u32 %v3143, 2147483648
    %v3145 = vmul.f32 %v3144, 1.442695
    %v3146 = vpow.pop %v3145
    %v3147 = vadd.f32 %v3146, 1.0
    %v3148 = vrcp.pop %v3147
    %v3149 = vmul.f32 1.0, %v3148
    %v3150 = vtanh.pop %v3143
    %v3151 = vmul.f32 %v3149, %v2884
    %3153 = vrot.lane.b32.xlu0 %v3150, 64
    %v3154 = vpop.permute.xlu0 %3153
    %v3156 = vmul.f32 %v3149, %v3154
    %3158 = vrot.lane.b32.xlu0 %v3156, 32
    %v3159 = vpop.permute.xlu0 %3158
    %v3161 = vadd.f32 %v3151, %v3159
    %v3162 = vtanh.pop %v3161
    %3164 = vrot.lane.b32.xlu0 %v3162, 64
    %v3165 = vpop.permute.xlu0 %3164
    %v3167 = vmul.f32 %v3149, %v3165
    %vm3168 = vcmp.eq.s32.totalorder %v138, 8
    %v3169 = vsel %vm3168, 1, 0
    %3170 = vset.pattern.permute.xlu0 0
    %3171 = vperm.xlu0 %3170, %v3169
    %v3172 = vpop.permute.xlu0 %3171
    %vm3173 = vcmp.eq.s32.totalorder %v3172, 1
    %v3174 = vsel %vm3173, %v3167, %v2897
    %v3176 = vlaneseq
    %v3177 = vshrl.u32 %v3176, 7
    %v3178 = vsub.s32 0, %v3177
    %v3179 = vrot.slane %v137, %v3178
    %3182 = vrot.lane.b32.xlu0 %v3174, 32
    %v3183 = vpop.permute.xlu0 %3182
    %v3184 = vsel %vm236, %v3183, 0
    %3186 = vmatprep.subr.mxu0 0.0
    %3187 = vmatpush1.msra.mxu0 0.0
    %3188 = vmatprep.subr.mxu0 0.0
    %3189 = vmatpush1.msra.mxu0 0.0
    %3190 = vmatprep.subr.mxu0 0.0
    %3191 = vmatpush1.msra.mxu0 0.0
    %3192 = vmatprep.subr.mxu0 0.0
    %3193 = vmatpush1.msra.mxu0 0.0
    %3194 = vmatprep.subr.mxu0 0.0
    %3195 = vmatpush1.msra.mxu0 0.0
    %3196 = vmatprep.subr.mxu0 0.0
    %3197 = vmatpush1.msra.mxu0 0.0
    %3198 = vmatprep.subr.mxu0 0.0
    %3199 = vmatpush1.msra.mxu0 0.0
    %3200 = vmatprep.subr.mxu0 0.0
    %3201 = vmatpush1.msra.mxu0 0.0
    %3202 = vmatprep.subr.mxu0 0.0
    %3203 = vmatpush1.msra.mxu0 0.0
    %3204 = vmatprep.subr.mxu0 0.0
    %3205 = vmatpush1.msra.mxu0 0.0
    %3206 = vmatprep.subr.mxu0 0.0
    %3207 = vmatpush1.msra.mxu0 0.0
    %3208 = vmatprep.subr.mxu0 0.0
    %3209 = vmatpush1.msra.mxu0 0.0
    %3210 = vmatprep.subr.mxu0 0.0
    %3211 = vmatpush1.msra.mxu0 %v136
    %3212 = vmatprep.subr.mxu0 0.0
    %3213 = vmatpush1.msra.mxu0 %v135
    %3214 = vmatprep.subr.mxu0 0.0
    %3215 = vmatpush1.msra.mxu0 %v134
    %3216 = vmatprep.subr.mxu0 0.0
    %3217 = vmatpush1.msra.mxu0 %v133
    %3218 = vmatprep.subr.mxu0 0.0
    %3219 = vmatpush2.msra.mxu0 0.0
    %3220 = vmatprep.subr.mxu0 0.0
    %3221 = vmatpush2.msra.mxu0 0.0
    %3222 = vmatprep.subr.mxu0 0.0
    %3223 = vmatpush2.msra.mxu0 0.0
    %3224 = vmatprep.subr.mxu0 0.0
    %3225 = vmatpush2.msra.mxu0 0.0
    %3226 = vmatprep.subr.mxu0 0.0
    %3227 = vmatpush2.msra.mxu0 0.0
    %3228 = vmatprep.subr.mxu0 0.0
    %3229 = vmatpush2.msra.mxu0 0.0
    %3230 = vmatprep.subr.mxu0 0.0
    %3231 = vmatpush2.msra.mxu0 0.0
    %3232 = vmatprep.subr.mxu0 0.0
    %3233 = vmatpush2.msra.mxu0 0.0
    %3234 = vmatprep.subr.mxu0 0.0
    %3235 = vmatpush2.msra.mxu0 0.0
    %3236 = vmatprep.subr.mxu0 0.0
    %3237 = vmatpush2.msra.mxu0 0.0
    %3238 = vmatprep.subr.mxu0 0.0
    %3239 = vmatpush2.msra.mxu0 0.0
    %3240 = vmatprep.subr.mxu0 0.0
    %3241 = vmatpush2.msra.mxu0 0.0
    %3242 = vmatprep.subr.mxu0 0.0
    %3243 = vmatpush2.msra.mxu0 0.0
    %3244 = vmatprep.subr.mxu0 0.0
    %3245 = vmatpush2.msra.mxu0 0.0
    %3246 = vmatprep.subr.mxu0 0.0
    %3247 = vmatpush2.msra.mxu0 0.0
    %3248 = vmatprep.subr.mxu0 0.0
    %3249 = vmatpush2.msra.mxu0 0.0
    %3250 = vmatprep.mubr.f32.mxu0 0.0
    %3251 = vmatmul.mubr.f32.gmra.mxu0 %v3184
    %v3252 = vpop.f32.mrf.mxu0
    %v3253 = vadd.f32 %v3179, %v3252
    %v3254 = vpop.f32.mrf.mxu0
    %3255 = vdwg.mxu0
    %3256 = vst [vmem:[%s15] sm:$0xff] %v3253
    // Predicated region
    $region82: #{e2e_regression.1} parent=1 // pred_check
      _
    $region83: #{e2e_regression.1} parent=1 // pred_check_branch
      %3258 = sbr.rel (0) target = $region85
    $region84: #{e2e_regression.1} parent=1 // pred_region
      _
    $region85: #{e2e_regression.1} parent=1 // pred_fallthru
      _
    // Predicated region
    $region86: #{e2e_regression.1} parent=1 // pred_check
      _
    $region87: #{e2e_regression.1} parent=1 // pred_check_branch
      %3260 = sbr.rel (0) target = $region89
    $region88: #{e2e_regression.1} parent=1 // pred_region
      _
    $region89: #{e2e_regression.1} parent=1 // pred_fallthru
      _
    %3261 = vsyncpa [#allocation3], 1
    %3262 = vsyncpa [#allocation5], 1
    %3263 = vsyncpa [#allocation8], 1

</llo_original>
